<compile_context>
chip_gen: v6e
topology: v6e:2x2x1
jax: 0.10.0
libtpu: 0.0.40
codegen_flags: <defaults>
</compile_context>

<pallas_src>
import functools

import jax
import jax.numpy as jnp
import numpy as np
from jax import lax
from jax.experimental import pallas as pl
from jax.experimental.pallas import tpu as pltpu


# Same constant as the PyTorch module (sobelKernel3 / 2.0) — used only by the
# pure-JAX reference; the kernel uses the separable form directly.
_SOBEL3 = (np.array([[-1.0, 0.0, 1.0],
                     [-2.0, 0.0, 2.0],
                     [-1.0, 0.0, 1.0]], dtype=np.float32) / 2.0)


# ----------------------------------------------------------------------------
# Kernel
# ----------------------------------------------------------------------------
def _cpg_kernel(pred_ref, pred_top_ref, pred_bot_ref,
                label_ref, label_top_ref, label_bot_ref,
                sse_ref, cnt_ref, *,
                num_classes, th, w, ignore_index, unroll):
    """One (batch, H-tile) grid step.

    pred_ref       : (1, C, TH, W) f32 logits for the tile rows.
    pred_top_ref   : (1, C, 8, W)  clamped 8-row block holding the row just
                     above the tile (clamping realises replicate padding).
    pred_bot_ref   : (1, C, 8, W)  clamped block holding the row just below.
    label_ref      : (1, TH, W)    int32 labels; halo blocks analogous.
    sse_ref        : (1, 1, 1, 1)  f32 partial sum of squared edge errors.
    cnt_ref        : (1, 1, 1, 1)  int32 partial edge-pixel count.
    """
    t = pl.program_id(1)
    n_t = pl.num_programs(1)
    at_top = t == 0
    at_bot = t == n_t - 1

    # ---- labels, validity and boundary masks (shared by every class) ------
    label = label_ref[0]                                   # (TH, W) i32
    valid = label != ignore_index                          # (TH, W) bool
    lab_t = jnp.where(at_top, label_top_ref[0, 0:1, :], label_top_ref[0, 7:8, :])
    lab_b = jnp.where(at_bot, label_bot_ref[0, 7:8, :], label_bot_ref[0, 0:1, :])
    valid_t = lab_t != ignore_index                        # (1, W)
    valid_b = lab_b != ignore_index                        # (1, W)

    # Hoisted boundary masks, shared by all Sobel calls (no re-broadcasting).
    row = lax.broadcasted_iota(jnp.int32, (th, 1), 0)
    col = lax.broadcasted_iota(jnp.int32, (1, w), 1)
    first_row = row == 0
    last_row = row == th - 1
    first_col = col == 0
    last_col = col == w - 1

    def pred_row(ci):
        """Halo logit rows (1, W) above / below the tile for class ci."""
        top = jnp.where(at_top, pred_top_ref[0, ci, 0:1, :],
                        pred_top_ref[0, ci, 7:8, :])
        bot = jnp.where(at_bot, pred_bot_ref[0, ci, 7:8, :],
                        pred_bot_ref[0, ci, 0:1, :])
        return top, bot

    # ---- softmax statistics over classes (streaming, per-class temps) -----
    def max_body(ci, carry):
        m, m_t, m_b = carry
        top, bot = pred_row(ci)
        return (jnp.maximum(m, pred_ref[0, ci]),
                jnp.maximum(m_t, top),
                jnp.maximum(m_b, bot))

    m, m_t, m_b = lax.fori_loop(
        0, num_classes, max_body,
        (jnp.full((th, w), -jnp.inf, jnp.float32),
         jnp.full((1, w), -jnp.inf, jnp.float32),
         jnp.full((1, w), -jnp.inf, jnp.float32)),
        unroll=unroll)

    def den_body(ci, carry):
        d, d_t, d_b = carry
        top, bot = pred_row(ci)
        return (d + jnp.exp(pred_ref[0, ci] - m),
                d_t + jnp.exp(top - m_t),
                d_b + jnp.exp(bot - m_b))

    den, den_t, den_b = lax.fori_loop(
        0, num_classes, den_body,
        (jnp.zeros((th, w), jnp.float32),
         jnp.zeros((1, w), jnp.float32),
         jnp.zeros((1, w), jnp.float32)),
        unroll=unroll)

    def recip(d):                     # EUP reciprocal + one Newton step
        r = pl.reciprocal(d, approx=True)
        return r * (2.0 - d * r)

    inv_den = recip(den)
    inv_den_t = recip(den_t)
    inv_den_b = recip(den_b)

    # ---- separable 3x3 Sobel; shifts on the XLU, replicate boundaries -----
    def left(a):        # a[x + 1], replicate at x = W-1
        return jnp.where(last_col, a, pltpu.roll(a, shift=w - 1, axis=1))

    def right(a):       # a[x - 1], replicate at x = 0
        return jnp.where(first_col, a, pltpu.roll(a, shift=1, axis=1))

    def up(a, fill_bot):    # a[y + 1]; last row <- halo row below
        return jnp.where(last_row, fill_bot, pltpu.roll(a, shift=th - 1, axis=0))

    def down(a, fill_top):  # a[y - 1]; first row <- halo row above
        return jnp.where(first_row, fill_top, pltpu.roll(a, shift=1, axis=0))

    def sobel(main, top, bot):
        """gx/gy of `main` (TH, W) with replicate padding; halos are (1, W)."""
        # gx: [1,2,1] smoothing along y, central difference along x.
        sy = down(main, top) + 2.0 * main + up(main, bot)
        gx = 0.5 * (left(sy) - right(sy))
        # gy: [1,2,1] smoothing along x, central difference along y.
        sx = right(main) + 2.0 * main + left(main)
        sx_t = right(top) + 2.0 * top + left(top)
        sx_b = right(bot) + 2.0 * bot + left(bot)
        gy = 0.5 * (up(sx, sx_b) - down(sx, sx_t))
        return gx, gy

    # ---- per-class pipeline: softmax slice, one-hot, Sobel, accumulate ----
    def class_body(ci, carry):
        sse, cnt = carry

        logit = pred_ref[0, ci]                            # (TH, W)
        top, bot = pred_row(ci)                            # (1, W) each
        sm = jnp.exp(logit - m) * inv_den
        sm_t = jnp.exp(top - m_t) * inv_den_t
        sm_b = jnp.exp(bot - m_b) * inv_den_b

        gt = jnp.logical_and(label == ci, valid).astype(jnp.float32)
        gt_t = jnp.logical_and(lab_t == ci, valid_t).astype(jnp.float32)
        gt_b = jnp.logical_and(lab_b == ci, valid_b).astype(jnp.float32)

        gt_gx, gt_gy = sobel(gt, gt_t, gt_b)
        pr_gx, pr_gy = sobel(sm, sm_t, sm_b)

        # edge_gt_valid = (gt_grad * valid) != 0  <=>  (gt_grad != 0) & valid
        mx = jnp.logical_and(gt_gx != 0.0, valid)
        my = jnp.logical_and(gt_gy != 0.0, valid)
        dx = gt_gx - pr_gx
        dy = gt_gy - pr_gy
        sq = jnp.where(mx, dx * dx, 0.0) + jnp.where(my, dy * dy, 0.0)

        sse = sse + jnp.sum(sq)
        # Per-class, per-tile counts are << 2^24 so the f32 reductions are
        # exact; the running total is kept in int32 so large tiles never
        # silently drop increments.
        c_f = jnp.sum(mx.astype(jnp.float32)) + jnp.sum(my.astype(jnp.float32))
        cnt = cnt + c_f.astype(jnp.int32)
        return sse, cnt

    sse, cnt = lax.fori_loop(0, num_classes, class_body,
                             (jnp.float32(0.0), jnp.int32(0)), unroll=unroll)

    sse_ref[...] = jnp.full(sse_ref.shape, sse, dtype=sse_ref.dtype)
    cnt_ref[...] = jnp.full(cnt_ref.shape, cnt, dtype=cnt_ref.dtype)


# ----------------------------------------------------------------------------
# Host-side wrapper
# ----------------------------------------------------------------------------
def _select_tile_and_vmem(c, h, w):
    """Pick the H-tile size from the chip's real VMEM capacity."""
    try:
        cap = int(pltpu.get_tpu_info().vmem_capacity_bytes)
    except Exception:
        cap = 64 * 1024 * 1024              # safe floor if the query fails
    # Working-set target: half the physical VMEM (double-buffer safe, leaves
    # >= 32 MiB headroom on every generation).
    budget = cap // 2
    # Per TH-row residents with the class-streamed body:
    #   pred main block (double buffered)              : 2 * C * W * 4
    #   label main block (double buffered)             : 2 * W * 4
    #   softmax stat planes (m/den/inv_den/valid/...)  : ~5 * W * 4
    #   ~14 per-class (TH, W) f32 temporaries          : 14 * W * 4
    per_row = 4 * w * (2 * c + 2 + 5 + 14)
    # TH-independent: the four 8-row halo blocks (double buffered) + slack.
    fixed = 4 * w * 8 * (4 * c + 4) + (2 << 20)
    cap_rows = max(8, (budget - fixed) // per_row)

    th = 8
    d = 8
    while d <= h:
        if h % d == 0 and d <= cap_rows:
            th = d
        d += 8

    est = fixed + per_row * th
    vmem_limit = int(min(cap, max(48 * 1024 * 1024, int(1.5 * est))))
    return th, vmem_limit


def cpg_loss_pallas(pred, label, ignore_index=-1):
    """pred: (B, C, H, W) float logits, label: (B, H, W) int -> scalar loss."""
    b, c, h, w = pred.shape
    assert label.shape == (b, h, w)
    if h % 8 != 0:
        # TODO(synk): support H % 8 != 0 (needs masked halo handling).
        raise NotImplementedError("cpg_loss_pallas requires H % 8 == 0")

    pred = pred.astype(jnp.float32)
    label = label.astype(jnp.int32)

    th, vmem_limit = _select_tile_and_vmem(c, h, w)
    n_th = h // th
    hb8 = h // 8                            # number of 8-row halo blocks
    k8 = th // 8

    kernel = functools.partial(
        _cpg_kernel, num_classes=c, th=th, w=w,
        ignore_index=ignore_index, unroll=bool(c <= 8))

    # Clamped halo index maps: interior tiles get the 8-row block containing
    # the neighbour row; at the image border they clamp (replicate padding).
    pred_main_map = lambda bi, ti: (bi, 0, ti, 0)
    pred_top_map = lambda bi, ti: (bi, 0, jnp.maximum(ti * k8 - 1, 0), 0)
    pred_bot_map = lambda bi, ti: (bi, 0, jnp.minimum((ti + 1) * k8, hb8 - 1), 0)
    lab_main_map = lambda bi, ti: (bi, ti, 0)
    lab_top_map = lambda bi, ti: (bi, jnp.maximum(ti * k8 - 1, 0), 0)
    lab_bot_map = lambda bi, ti: (bi, jnp.minimum((ti + 1) * k8, hb8 - 1), 0)
    out_map = lambda bi, ti: (bi, ti, 0, 0)

    sse, cnt = pl.pallas_call(
        kernel,
        out_shape=(jax.ShapeDtypeStruct((b, n_th, 1, 1), jnp.float32),
                   jax.ShapeDtypeStruct((b, n_th, 1, 1), jnp.int32)),
        grid_spec=pltpu.PrefetchScalarGridSpec(
            num_scalar_prefetch=0,
            grid=(b, n_th),
            in_specs=[
                pl.BlockSpec((1, c, th, w), pred_main_map),
                pl.BlockSpec((1, c, 8, w), pred_top_map),
                pl.BlockSpec((1, c, 8, w), pred_bot_map),
                pl.BlockSpec((1, th, w), lab_main_map),
                pl.BlockSpec((1, 8, w), lab_top_map),
                pl.BlockSpec((1, 8, w), lab_bot_map),
            ],
            out_specs=(
                pl.BlockSpec((1, 1, 1, 1), out_map),
                pl.BlockSpec((1, 1, 1, 1), out_map),
            ),
        ),
        compiler_params=pltpu.CompilerParams(
            dimension_semantics=("parallel", "parallel"),
            vmem_limit_bytes=vmem_limit),
    )(pred, pred, pred, label, label, label)

    sse_total = jnp.sum(sse)
    cnt_total = jnp.sum(cnt)                # exact int32 edge count
    # NaN when there are no GT edge pixels — matches torch's mean over an
    # empty selection.
    return (sse_total / cnt_total.astype(jnp.float32)).astype(jnp.float32)


# ----------------------------------------------------------------------------
# Pure-JAX reference mirroring the PyTorch forward pass
# ----------------------------------------------------------------------------
def cpg_loss_reference(pred, label, ignore_index=-1):
    b, c, h, w = pred.shape
    valid = label != ignore_index
    gt = jax.nn.one_hot(jnp.where(valid, label, 0), c, dtype=jnp.float32)
    gt = jnp.transpose(gt, (0, 3, 1, 2)) * valid[:, None, :, :].astype(jnp.float32)
    sm = jax.nn.softmax(pred.astype(jnp.float32), axis=1)

    def sobel(x):
        p = jnp.pad(x, ((0, 0), (0, 0), (1, 1), (1, 1)), mode="edge")
        gx = jnp.zeros_like(x)
        gy = jnp.zeros_like(x)
        for ky in range(3):
            for kx in range(3):
                sl = p[:, :, ky:ky + h, kx:kx + w]
                gx = gx + float(_SOBEL3[ky, kx]) * sl
                gy = gy + float(_SOBEL3[kx, ky]) * sl
        return jnp.stack([gx, gy], axis=2)  # (B, C, 2, H, W)

    gt_grad = sobel(gt)
    pr_grad = sobel(sm)
    vmask = valid[:, None, None, :, :]
    edge = (gt_grad * vmask.astype(jnp.float32)) != 0.0
    sq = (gt_grad - pr_grad) ** 2
    return jnp.sum(jnp.where(edge, sq, 0.0)) / jnp.sum(edge.astype(jnp.float32))


if __name__ == "__main__":
    key = jax.random.PRNGKey(0)
    k1, k2, k3 = jax.random.split(key, 3)

    B, C, H, W = 2, 4, 16, 16
    pred = jax.random.normal(k1, (B, C, H, W), dtype=jnp.float32)
    label = jax.random.randint(k2, (B, H, W), 0, C, dtype=jnp.int32)
    # sprinkle some ignored pixels (ignore_index = -1)
    ignore_mask = jax.random.bernoulli(k3, 0.1, (B, H, W))
    label = jnp.where(ignore_mask, -1, label)

    loss = cpg_loss_pallas(pred, label)
    jax.block_until_ready(loss)

    ref = cpg_loss_reference(pred, label)
    assert jnp.allclose(loss, ref, rtol=1e-3, atol=1e-5), (loss, ref)

    print("KERNEL_OK")
</pallas_src>

<mosaic_0001>
module attributes {stable_mosaic.version = 11 : i64} {
  func.func @_cpg_kernel(%arg0: i32, %arg1: i32, %arg2: memref<1x4x16x16xf32, #tpu.memory_space<vmem>>, %arg3: memref<1x4x8x16xf32, #tpu.memory_space<vmem>>, %arg4: memref<1x4x8x16xf32, #tpu.memory_space<vmem>>, %arg5: memref<1x16x16xi32, #tpu.memory_space<vmem>>, %arg6: memref<1x8x16xi32, #tpu.memory_space<vmem>>, %arg7: memref<1x8x16xi32, #tpu.memory_space<vmem>>, %arg8: memref<1x1x1x1xf32, #tpu.memory_space<vmem>>, %arg9: memref<1x1x1x1xi32, #tpu.memory_space<vmem>>) attributes {dimension_semantics = [#tpu.dimension_semantics<parallel>, #tpu.dimension_semantics<parallel>], iteration_bounds = array<i64: 2, 1>, scalar_prefetch = 0 : i64, scratch_operands = 0 : i64, tpu.core_type = #tpu.core_type<tc>, window_params = [{transform_indices = @transform_0, window_bounds = array<i64: 1, 4, 16, 16>}, {transform_indices = @transform_1, window_bounds = array<i64: 1, 4, 8, 16>}, {transform_indices = @transform_2, window_bounds = array<i64: 1, 4, 8, 16>}, {transform_indices = @transform_3, window_bounds = array<i64: 1, 16, 16>}, {transform_indices = @transform_4, window_bounds = array<i64: 1, 8, 16>}, {transform_indices = @transform_5, window_bounds = array<i64: 1, 8, 16>}, {transform_indices = @transform_6, window_bounds = array<i64: 1, 1, 1, 1>}, {transform_indices = @transform_7, window_bounds = array<i64: 1, 1, 1, 1>}]} {
    %c0_i32 = arith.constant 0 : i32
    %0 = arith.cmpi eq, %arg1, %c0_i32 : i32
    %c0_i32_0 = arith.constant 0 : i32
    %1 = arith.cmpi eq, %arg1, %c0_i32_0 : i32
    %c0 = arith.constant 0 : index
    %c0_1 = arith.constant 0 : index
    %c0_2 = arith.constant 0 : index
    %2 = vector.load %arg5[%c0, %c0_1, %c0_2] : memref<1x16x16xi32, #tpu.memory_space<vmem>>, vector<1x16x16xi32>
    %3 = vector.shape_cast %2 : vector<1x16x16xi32> to vector<16x16xi32>
    %c-1_i32 = arith.constant -1 : i32
    %4 = vector.broadcast %c-1_i32 : i32 to vector<16x16xi32>
    %5 = arith.cmpi ne, %3, %4 : vector<16x16xi32>
    %c0_3 = arith.constant 0 : index
    %c0_4 = arith.constant 0 : index
    %c0_5 = arith.constant 0 : index
    %6 = vector.load %arg6[%c0_3, %c0_4, %c0_5] : memref<1x8x16xi32, #tpu.memory_space<vmem>>, vector<1x1x16xi32>
    %7 = vector.shape_cast %6 : vector<1x1x16xi32> to vector<1x16xi32>
    %c0_6 = arith.constant 0 : index
    %c7 = arith.constant 7 : index
    %c0_7 = arith.constant 0 : index
    %8 = vector.load %arg6[%c0_6, %c7, %c0_7] : memref<1x8x16xi32, #tpu.memory_space<vmem>>, vector<1x1x16xi32>
    %9 = vector.shape_cast %8 : vector<1x1x16xi32> to vector<1x16xi32>
    %10 = arith.select %0, %7, %9 : vector<1x16xi32>
    %c0_8 = arith.constant 0 : index
    %c7_9 = arith.constant 7 : index
    %c0_10 = arith.constant 0 : index
    %11 = vector.load %arg7[%c0_8, %c7_9, %c0_10] : memref<1x8x16xi32, #tpu.memory_space<vmem>>, vector<1x1x16xi32>
    %12 = vector.shape_cast %11 : vector<1x1x16xi32> to vector<1x16xi32>
    %c0_11 = arith.constant 0 : index
    %c0_12 = arith.constant 0 : index
    %c0_13 = arith.constant 0 : index
    %13 = vector.load %arg7[%c0_11, %c0_12, %c0_13] : memref<1x8x16xi32, #tpu.memory_space<vmem>>, vector<1x1x16xi32>
    %14 = vector.shape_cast %13 : vector<1x1x16xi32> to vector<1x16xi32>
    %15 = arith.select %1, %12, %14 : vector<1x16xi32>
    %c-1_i32_14 = arith.constant -1 : i32
    %16 = vector.broadcast %c-1_i32_14 : i32 to vector<1x16xi32>
    %17 = arith.cmpi ne, %10, %16 : vector<1x16xi32>
    %c-1_i32_15 = arith.constant -1 : i32
    %18 = vector.broadcast %c-1_i32_15 : i32 to vector<1x16xi32>
    %19 = arith.cmpi ne, %15, %18 : vector<1x16xi32>
    %20 = tpu.iota {dimensions = array<i32: 0>} : vector<16x1xi32>
    %21 = tpu.iota {dimensions = array<i32: 1>} : vector<1x16xi32>
    %c0_i32_16 = arith.constant 0 : i32
    %22 = vector.broadcast %c0_i32_16 : i32 to vector<16x1xi32>
    %23 = arith.cmpi eq, %20, %22 : vector<16x1xi32>
    %c15_i32 = arith.constant 15 : i32
    %24 = vector.broadcast %c15_i32 : i32 to vector<16x1xi32>
    %25 = arith.cmpi eq, %20, %24 : vector<16x1xi32>
    %c0_i32_17 = arith.constant 0 : i32
    %26 = vector.broadcast %c0_i32_17 : i32 to vector<1x16xi32>
    %27 = arith.cmpi eq, %21, %26 : vector<1x16xi32>
    %c15_i32_18 = arith.constant 15 : i32
    %28 = vector.broadcast %c15_i32_18 : i32 to vector<1x16xi32>
    %29 = arith.cmpi eq, %21, %28 : vector<1x16xi32>
    %cst = arith.constant 0xFF800000 : f32
    %30 = vector.broadcast %cst : f32 to vector<16x16xf32>
    %cst_19 = arith.constant 0xFF800000 : f32
    %31 = vector.broadcast %cst_19 : f32 to vector<1x16xf32>
    %cst_20 = arith.constant 0xFF800000 : f32
    %32 = vector.broadcast %cst_20 : f32 to vector<1x16xf32>
    %c0_i32_21 = arith.constant 0 : i32
    %c0_22 = arith.constant 0 : index
    %33 = arith.index_cast %c0_i32_21 : i32 to index
    %c0_23 = arith.constant 0 : index
    %c0_24 = arith.constant 0 : index
    %34 = vector.load %arg3[%c0_22, %33, %c0_23, %c0_24] : memref<1x4x8x16xf32, #tpu.memory_space<vmem>>, vector<1x1x1x16xf32>
    %35 = vector.shape_cast %34 : vector<1x1x1x16xf32> to vector<1x16xf32>
    %c0_25 = arith.constant 0 : index
    %36 = arith.index_cast %c0_i32_21 : i32 to index
    %c7_26 = arith.constant 7 : index
    %c0_27 = arith.constant 0 : index
    %37 = vector.load %arg3[%c0_25, %36, %c7_26, %c0_27] : memref<1x4x8x16xf32, #tpu.memory_space<vmem>>, vector<1x1x1x16xf32>
    %38 = vector.shape_cast %37 : vector<1x1x1x16xf32> to vector<1x16xf32>
    %39 = arith.select %0, %35, %38 : vector<1x16xf32>
    %c0_28 = arith.constant 0 : index
    %40 = arith.index_cast %c0_i32_21 : i32 to index
    %c7_29 = arith.constant 7 : index
    %c0_30 = arith.constant 0 : index
    %41 = vector.load %arg4[%c0_28, %40, %c7_29, %c0_30] : memref<1x4x8x16xf32, #tpu.memory_space<vmem>>, vector<1x1x1x16xf32>
    %42 = vector.shape_cast %41 : vector<1x1x1x16xf32> to vector<1x16xf32>
    %c0_31 = arith.constant 0 : index
    %43 = arith.index_cast %c0_i32_21 : i32 to index
    %c0_32 = arith.constant 0 : index
    %c0_33 = arith.constant 0 : index
    %44 = vector.load %arg4[%c0_31, %43, %c0_32, %c0_33] : memref<1x4x8x16xf32, #tpu.memory_space<vmem>>, vector<1x1x1x16xf32>
    %45 = vector.shape_cast %44 : vector<1x1x1x16xf32> to vector<1x16xf32>
    %46 = arith.select %1, %42, %45 : vector<1x16xf32>
    %c0_34 = arith.constant 0 : index
    %47 = arith.index_cast %c0_i32_21 : i32 to index
    %c0_35 = arith.constant 0 : index
    %c0_36 = arith.constant 0 : index
    %48 = vector.load %arg2[%c0_34, %47, %c0_35, %c0_36] : memref<1x4x16x16xf32, #tpu.memory_space<vmem>>, vector<1x1x16x16xf32>
    %49 = vector.shape_cast %48 : vector<1x1x16x16xf32> to vector<16x16xf32>
    %50 = arith.maximumf %30, %49 : vector<16x16xf32>
    %51 = arith.maximumf %31, %39 : vector<1x16xf32>
    %52 = arith.maximumf %32, %46 : vector<1x16xf32>
    %c1_i32 = arith.constant 1 : i32
    %c0_37 = arith.constant 0 : index
    %53 = arith.index_cast %c1_i32 : i32 to index
    %c0_38 = arith.constant 0 : index
    %c0_39 = arith.constant 0 : index
    %54 = vector.load %arg3[%c0_37, %53, %c0_38, %c0_39] : memref<1x4x8x16xf32, #tpu.memory_space<vmem>>, vector<1x1x1x16xf32>
    %55 = vector.shape_cast %54 : vector<1x1x1x16xf32> to vector<1x16xf32>
    %c0_40 = arith.constant 0 : index
    %56 = arith.index_cast %c1_i32 : i32 to index
    %c7_41 = arith.constant 7 : index
    %c0_42 = arith.constant 0 : index
    %57 = vector.load %arg3[%c0_40, %56, %c7_41, %c0_42] : memref<1x4x8x16xf32, #tpu.memory_space<vmem>>, vector<1x1x1x16xf32>
    %58 = vector.shape_cast %57 : vector<1x1x1x16xf32> to vector<1x16xf32>
    %59 = arith.select %0, %55, %58 : vector<1x16xf32>
    %c0_43 = arith.constant 0 : index
    %60 = arith.index_cast %c1_i32 : i32 to index
    %c7_44 = arith.constant 7 : index
    %c0_45 = arith.constant 0 : index
    %61 = vector.load %arg4[%c0_43, %60, %c7_44, %c0_45] : memref<1x4x8x16xf32, #tpu.memory_space<vmem>>, vector<1x1x1x16xf32>
    %62 = vector.shape_cast %61 : vector<1x1x1x16xf32> to vector<1x16xf32>
    %c0_46 = arith.constant 0 : index
    %63 = arith.index_cast %c1_i32 : i32 to index
    %c0_47 = arith.constant 0 : index
    %c0_48 = arith.constant 0 : index
    %64 = vector.load %arg4[%c0_46, %63, %c0_47, %c0_48] : memref<1x4x8x16xf32, #tpu.memory_space<vmem>>, vector<1x1x1x16xf32>
    %65 = vector.shape_cast %64 : vector<1x1x1x16xf32> to vector<1x16xf32>
    %66 = arith.select %1, %62, %65 : vector<1x16xf32>
    %c0_49 = arith.constant 0 : index
    %67 = arith.index_cast %c1_i32 : i32 to index
    %c0_50 = arith.constant 0 : index
    %c0_51 = arith.constant 0 : index
    %68 = vector.load %arg2[%c0_49, %67, %c0_50, %c0_51] : memref<1x4x16x16xf32, #tpu.memory_space<vmem>>, vector<1x1x16x16xf32>
    %69 = vector.shape_cast %68 : vector<1x1x16x16xf32> to vector<16x16xf32>
    %70 = arith.maximumf %50, %69 : vector<16x16xf32>
    %71 = arith.maximumf %51, %59 : vector<1x16xf32>
    %72 = arith.maximumf %52, %66 : vector<1x16xf32>
    %c2_i32 = arith.constant 2 : i32
    %c0_52 = arith.constant 0 : index
    %73 = arith.index_cast %c2_i32 : i32 to index
    %c0_53 = arith.constant 0 : index
    %c0_54 = arith.constant 0 : index
    %74 = vector.load %arg3[%c0_52, %73, %c0_53, %c0_54] : memref<1x4x8x16xf32, #tpu.memory_space<vmem>>, vector<1x1x1x16xf32>
    %75 = vector.shape_cast %74 : vector<1x1x1x16xf32> to vector<1x16xf32>
    %c0_55 = arith.constant 0 : index
    %76 = arith.index_cast %c2_i32 : i32 to index
    %c7_56 = arith.constant 7 : index
    %c0_57 = arith.constant 0 : index
    %77 = vector.load %arg3[%c0_55, %76, %c7_56, %c0_57] : memref<1x4x8x16xf32, #tpu.memory_space<vmem>>, vector<1x1x1x16xf32>
    %78 = vector.shape_cast %77 : vector<1x1x1x16xf32> to vector<1x16xf32>
    %79 = arith.select %0, %75, %78 : vector<1x16xf32>
    %c0_58 = arith.constant 0 : index
    %80 = arith.index_cast %c2_i32 : i32 to index
    %c7_59 = arith.constant 7 : index
    %c0_60 = arith.constant 0 : index
    %81 = vector.load %arg4[%c0_58, %80, %c7_59, %c0_60] : memref<1x4x8x16xf32, #tpu.memory_space<vmem>>, vector<1x1x1x16xf32>
    %82 = vector.shape_cast %81 : vector<1x1x1x16xf32> to vector<1x16xf32>
    %c0_61 = arith.constant 0 : index
    %83 = arith.index_cast %c2_i32 : i32 to index
    %c0_62 = arith.constant 0 : index
    %c0_63 = arith.constant 0 : index
    %84 = vector.load %arg4[%c0_61, %83, %c0_62, %c0_63] : memref<1x4x8x16xf32, #tpu.memory_space<vmem>>, vector<1x1x1x16xf32>
    %85 = vector.shape_cast %84 : vector<1x1x1x16xf32> to vector<1x16xf32>
    %86 = arith.select %1, %82, %85 : vector<1x16xf32>
    %c0_64 = arith.constant 0 : index
    %87 = arith.index_cast %c2_i32 : i32 to index
    %c0_65 = arith.constant 0 : index
    %c0_66 = arith.constant 0 : index
    %88 = vector.load %arg2[%c0_64, %87, %c0_65, %c0_66] : memref<1x4x16x16xf32, #tpu.memory_space<vmem>>, vector<1x1x16x16xf32>
    %89 = vector.shape_cast %88 : vector<1x1x16x16xf32> to vector<16x16xf32>
    %90 = arith.maximumf %70, %89 : vector<16x16xf32>
    %91 = arith.maximumf %71, %79 : vector<1x16xf32>
    %92 = arith.maximumf %72, %86 : vector<1x16xf32>
    %c3_i32 = arith.constant 3 : i32
    %c0_67 = arith.constant 0 : index
    %93 = arith.index_cast %c3_i32 : i32 to index
    %c0_68 = arith.constant 0 : index
    %c0_69 = arith.constant 0 : index
    %94 = vector.load %arg3[%c0_67, %93, %c0_68, %c0_69] : memref<1x4x8x16xf32, #tpu.memory_space<vmem>>, vector<1x1x1x16xf32>
    %95 = vector.shape_cast %94 : vector<1x1x1x16xf32> to vector<1x16xf32>
    %c0_70 = arith.constant 0 : index
    %96 = arith.index_cast %c3_i32 : i32 to index
    %c7_71 = arith.constant 7 : index
    %c0_72 = arith.constant 0 : index
    %97 = vector.load %arg3[%c0_70, %96, %c7_71, %c0_72] : memref<1x4x8x16xf32, #tpu.memory_space<vmem>>, vector<1x1x1x16xf32>
    %98 = vector.shape_cast %97 : vector<1x1x1x16xf32> to vector<1x16xf32>
    %99 = arith.select %0, %95, %98 : vector<1x16xf32>
    %c0_73 = arith.constant 0 : index
    %100 = arith.index_cast %c3_i32 : i32 to index
    %c7_74 = arith.constant 7 : index
    %c0_75 = arith.constant 0 : index
    %101 = vector.load %arg4[%c0_73, %100, %c7_74, %c0_75] : memref<1x4x8x16xf32, #tpu.memory_space<vmem>>, vector<1x1x1x16xf32>
    %102 = vector.shape_cast %101 : vector<1x1x1x16xf32> to vector<1x16xf32>
    %c0_76 = arith.constant 0 : index
    %103 = arith.index_cast %c3_i32 : i32 to index
    %c0_77 = arith.constant 0 : index
    %c0_78 = arith.constant 0 : index
    %104 = vector.load %arg4[%c0_76, %103, %c0_77, %c0_78] : memref<1x4x8x16xf32, #tpu.memory_space<vmem>>, vector<1x1x1x16xf32>
    %105 = vector.shape_cast %104 : vector<1x1x1x16xf32> to vector<1x16xf32>
    %106 = arith.select %1, %102, %105 : vector<1x16xf32>
    %c0_79 = arith.constant 0 : index
    %107 = arith.index_cast %c3_i32 : i32 to index
    %c0_80 = arith.constant 0 : index
    %c0_81 = arith.constant 0 : index
    %108 = vector.load %arg2[%c0_79, %107, %c0_80, %c0_81] : memref<1x4x16x16xf32, #tpu.memory_space<vmem>>, vector<1x1x16x16xf32>
    %109 = vector.shape_cast %108 : vector<1x1x16x16xf32> to vector<16x16xf32>
    %110 = arith.maximumf %90, %109 : vector<16x16xf32>
    %111 = arith.maximumf %91, %99 : vector<1x16xf32>
    %112 = arith.maximumf %92, %106 : vector<1x16xf32>
    %c4_i32 = arith.constant 4 : i32
    %cst_82 = arith.constant 0.000000e+00 : f32
    %113 = vector.broadcast %cst_82 : f32 to vector<16x16xf32>
    %cst_83 = arith.constant 0.000000e+00 : f32
    %114 = vector.broadcast %cst_83 : f32 to vector<1x16xf32>
    %cst_84 = arith.constant 0.000000e+00 : f32
    %115 = vector.broadcast %cst_84 : f32 to vector<1x16xf32>
    %c0_i32_85 = arith.constant 0 : i32
    %c0_86 = arith.constant 0 : index
    %116 = arith.index_cast %c0_i32_85 : i32 to index
    %c0_87 = arith.constant 0 : index
    %c0_88 = arith.constant 0 : index
    %117 = vector.load %arg3[%c0_86, %116, %c0_87, %c0_88] : memref<1x4x8x16xf32, #tpu.memory_space<vmem>>, vector<1x1x1x16xf32>
    %118 = vector.shape_cast %117 : vector<1x1x1x16xf32> to vector<1x16xf32>
    %c0_89 = arith.constant 0 : index
    %119 = arith.index_cast %c0_i32_85 : i32 to index
    %c7_90 = arith.constant 7 : index
    %c0_91 = arith.constant 0 : index
    %120 = vector.load %arg3[%c0_89, %119, %c7_90, %c0_91] : memref<1x4x8x16xf32, #tpu.memory_space<vmem>>, vector<1x1x1x16xf32>
    %121 = vector.shape_cast %120 : vector<1x1x1x16xf32> to vector<1x16xf32>
    %122 = arith.select %0, %118, %121 : vector<1x16xf32>
    %c0_92 = arith.constant 0 : index
    %123 = arith.index_cast %c0_i32_85 : i32 to index
    %c7_93 = arith.constant 7 : index
    %c0_94 = arith.constant 0 : index
    %124 = vector.load %arg4[%c0_92, %123, %c7_93, %c0_94] : memref<1x4x8x16xf32, #tpu.memory_space<vmem>>, vector<1x1x1x16xf32>
    %125 = vector.shape_cast %124 : vector<1x1x1x16xf32> to vector<1x16xf32>
    %c0_95 = arith.constant 0 : index
    %126 = arith.index_cast %c0_i32_85 : i32 to index
    %c0_96 = arith.constant 0 : index
    %c0_97 = arith.constant 0 : index
    %127 = vector.load %arg4[%c0_95, %126, %c0_96, %c0_97] : memref<1x4x8x16xf32, #tpu.memory_space<vmem>>, vector<1x1x1x16xf32>
    %128 = vector.shape_cast %127 : vector<1x1x1x16xf32> to vector<1x16xf32>
    %129 = arith.select %1, %125, %128 : vector<1x16xf32>
    %c0_98 = arith.constant 0 : index
    %130 = arith.index_cast %c0_i32_85 : i32 to index
    %c0_99 = arith.constant 0 : index
    %c0_100 = arith.constant 0 : index
    %131 = vector.load %arg2[%c0_98, %130, %c0_99, %c0_100] : memref<1x4x16x16xf32, #tpu.memory_space<vmem>>, vector<1x1x16x16xf32>
    %132 = vector.shape_cast %131 : vector<1x1x16x16xf32> to vector<16x16xf32>
    %133 = arith.subf %132, %110 : vector<16x16xf32>
    %134 = math.exp %133 : vector<16x16xf32>
    %135 = arith.addf %113, %134 : vector<16x16xf32>
    %136 = arith.subf %122, %111 : vector<1x16xf32>
    %137 = math.exp %136 : vector<1x16xf32>
    %138 = arith.addf %114, %137 : vector<1x16xf32>
    %139 = arith.subf %129, %112 : vector<1x16xf32>
    %140 = math.exp %139 : vector<1x16xf32>
    %141 = arith.addf %115, %140 : vector<1x16xf32>
    %c1_i32_101 = arith.constant 1 : i32
    %c0_102 = arith.constant 0 : index
    %142 = arith.index_cast %c1_i32_101 : i32 to index
    %c0_103 = arith.constant 0 : index
    %c0_104 = arith.constant 0 : index
    %143 = vector.load %arg3[%c0_102, %142, %c0_103, %c0_104] : memref<1x4x8x16xf32, #tpu.memory_space<vmem>>, vector<1x1x1x16xf32>
    %144 = vector.shape_cast %143 : vector<1x1x1x16xf32> to vector<1x16xf32>
    %c0_105 = arith.constant 0 : index
    %145 = arith.index_cast %c1_i32_101 : i32 to index
    %c7_106 = arith.constant 7 : index
    %c0_107 = arith.constant 0 : index
    %146 = vector.load %arg3[%c0_105, %145, %c7_106, %c0_107] : memref<1x4x8x16xf32, #tpu.memory_space<vmem>>, vector<1x1x1x16xf32>
    %147 = vector.shape_cast %146 : vector<1x1x1x16xf32> to vector<1x16xf32>
    %148 = arith.select %0, %144, %147 : vector<1x16xf32>
    %c0_108 = arith.constant 0 : index
    %149 = arith.index_cast %c1_i32_101 : i32 to index
    %c7_109 = arith.constant 7 : index
    %c0_110 = arith.constant 0 : index
    %150 = vector.load %arg4[%c0_108, %149, %c7_109, %c0_110] : memref<1x4x8x16xf32, #tpu.memory_space<vmem>>, vector<1x1x1x16xf32>
    %151 = vector.shape_cast %150 : vector<1x1x1x16xf32> to vector<1x16xf32>
    %c0_111 = arith.constant 0 : index
    %152 = arith.index_cast %c1_i32_101 : i32 to index
    %c0_112 = arith.constant 0 : index
    %c0_113 = arith.constant 0 : index
    %153 = vector.load %arg4[%c0_111, %152, %c0_112, %c0_113] : memref<1x4x8x16xf32, #tpu.memory_space<vmem>>, vector<1x1x1x16xf32>
    %154 = vector.shape_cast %153 : vector<1x1x1x16xf32> to vector<1x16xf32>
    %155 = arith.select %1, %151, %154 : vector<1x16xf32>
    %c0_114 = arith.constant 0 : index
    %156 = arith.index_cast %c1_i32_101 : i32 to index
    %c0_115 = arith.constant 0 : index
    %c0_116 = arith.constant 0 : index
    %157 = vector.load %arg2[%c0_114, %156, %c0_115, %c0_116] : memref<1x4x16x16xf32, #tpu.memory_space<vmem>>, vector<1x1x16x16xf32>
    %158 = vector.shape_cast %157 : vector<1x1x16x16xf32> to vector<16x16xf32>
    %159 = arith.subf %158, %110 : vector<16x16xf32>
    %160 = math.exp %159 : vector<16x16xf32>
    %161 = arith.addf %135, %160 : vector<16x16xf32>
    %162 = arith.subf %148, %111 : vector<1x16xf32>
    %163 = math.exp %162 : vector<1x16xf32>
    %164 = arith.addf %138, %163 : vector<1x16xf32>
    %165 = arith.subf %155, %112 : vector<1x16xf32>
    %166 = math.exp %165 : vector<1x16xf32>
    %167 = arith.addf %141, %166 : vector<1x16xf32>
    %c2_i32_117 = arith.constant 2 : i32
    %c0_118 = arith.constant 0 : index
    %168 = arith.index_cast %c2_i32_117 : i32 to index
    %c0_119 = arith.constant 0 : index
    %c0_120 = arith.constant 0 : index
    %169 = vector.load %arg3[%c0_118, %168, %c0_119, %c0_120] : memref<1x4x8x16xf32, #tpu.memory_space<vmem>>, vector<1x1x1x16xf32>
    %170 = vector.shape_cast %169 : vector<1x1x1x16xf32> to vector<1x16xf32>
    %c0_121 = arith.constant 0 : index
    %171 = arith.index_cast %c2_i32_117 : i32 to index
    %c7_122 = arith.constant 7 : index
    %c0_123 = arith.constant 0 : index
    %172 = vector.load %arg3[%c0_121, %171, %c7_122, %c0_123] : memref<1x4x8x16xf32, #tpu.memory_space<vmem>>, vector<1x1x1x16xf32>
    %173 = vector.shape_cast %172 : vector<1x1x1x16xf32> to vector<1x16xf32>
    %174 = arith.select %0, %170, %173 : vector<1x16xf32>
    %c0_124 = arith.constant 0 : index
    %175 = arith.index_cast %c2_i32_117 : i32 to index
    %c7_125 = arith.constant 7 : index
    %c0_126 = arith.constant 0 : index
    %176 = vector.load %arg4[%c0_124, %175, %c7_125, %c0_126] : memref<1x4x8x16xf32, #tpu.memory_space<vmem>>, vector<1x1x1x16xf32>
    %177 = vector.shape_cast %176 : vector<1x1x1x16xf32> to vector<1x16xf32>
    %c0_127 = arith.constant 0 : index
    %178 = arith.index_cast %c2_i32_117 : i32 to index
    %c0_128 = arith.constant 0 : index
    %c0_129 = arith.constant 0 : index
    %179 = vector.load %arg4[%c0_127, %178, %c0_128, %c0_129] : memref<1x4x8x16xf32, #tpu.memory_space<vmem>>, vector<1x1x1x16xf32>
    %180 = vector.shape_cast %179 : vector<1x1x1x16xf32> to vector<1x16xf32>
    %181 = arith.select %1, %177, %180 : vector<1x16xf32>
    %c0_130 = arith.constant 0 : index
    %182 = arith.index_cast %c2_i32_117 : i32 to index
    %c0_131 = arith.constant 0 : index
    %c0_132 = arith.constant 0 : index
    %183 = vector.load %arg2[%c0_130, %182, %c0_131, %c0_132] : memref<1x4x16x16xf32, #tpu.memory_space<vmem>>, vector<1x1x16x16xf32>
    %184 = vector.shape_cast %183 : vector<1x1x16x16xf32> to vector<16x16xf32>
    %185 = arith.subf %184, %110 : vector<16x16xf32>
    %186 = math.exp %185 : vector<16x16xf32>
    %187 = arith.addf %161, %186 : vector<16x16xf32>
    %188 = arith.subf %174, %111 : vector<1x16xf32>
    %189 = math.exp %188 : vector<1x16xf32>
    %190 = arith.addf %164, %189 : vector<1x16xf32>
    %191 = arith.subf %181, %112 : vector<1x16xf32>
    %192 = math.exp %191 : vector<1x16xf32>
    %193 = arith.addf %167, %192 : vector<1x16xf32>
    %c3_i32_133 = arith.constant 3 : i32
    %c0_134 = arith.constant 0 : index
    %194 = arith.index_cast %c3_i32_133 : i32 to index
    %c0_135 = arith.constant 0 : index
    %c0_136 = arith.constant 0 : index
    %195 = vector.load %arg3[%c0_134, %194, %c0_135, %c0_136] : memref<1x4x8x16xf32, #tpu.memory_space<vmem>>, vector<1x1x1x16xf32>
    %196 = vector.shape_cast %195 : vector<1x1x1x16xf32> to vector<1x16xf32>
    %c0_137 = arith.constant 0 : index
    %197 = arith.index_cast %c3_i32_133 : i32 to index
    %c7_138 = arith.constant 7 : index
    %c0_139 = arith.constant 0 : index
    %198 = vector.load %arg3[%c0_137, %197, %c7_138, %c0_139] : memref<1x4x8x16xf32, #tpu.memory_space<vmem>>, vector<1x1x1x16xf32>
    %199 = vector.shape_cast %198 : vector<1x1x1x16xf32> to vector<1x16xf32>
    %200 = arith.select %0, %196, %199 : vector<1x16xf32>
    %c0_140 = arith.constant 0 : index
    %201 = arith.index_cast %c3_i32_133 : i32 to index
    %c7_141 = arith.constant 7 : index
    %c0_142 = arith.constant 0 : index
    %202 = vector.load %arg4[%c0_140, %201, %c7_141, %c0_142] : memref<1x4x8x16xf32, #tpu.memory_space<vmem>>, vector<1x1x1x16xf32>
    %203 = vector.shape_cast %202 : vector<1x1x1x16xf32> to vector<1x16xf32>
    %c0_143 = arith.constant 0 : index
    %204 = arith.index_cast %c3_i32_133 : i32 to index
    %c0_144 = arith.constant 0 : index
    %c0_145 = arith.constant 0 : index
    %205 = vector.load %arg4[%c0_143, %204, %c0_144, %c0_145] : memref<1x4x8x16xf32, #tpu.memory_space<vmem>>, vector<1x1x1x16xf32>
    %206 = vector.shape_cast %205 : vector<1x1x1x16xf32> to vector<1x16xf32>
    %207 = arith.select %1, %203, %206 : vector<1x16xf32>
    %c0_146 = arith.constant 0 : index
    %208 = arith.index_cast %c3_i32_133 : i32 to index
    %c0_147 = arith.constant 0 : index
    %c0_148 = arith.constant 0 : index
    %209 = vector.load %arg2[%c0_146, %208, %c0_147, %c0_148] : memref<1x4x16x16xf32, #tpu.memory_space<vmem>>, vector<1x1x16x16xf32>
    %210 = vector.shape_cast %209 : vector<1x1x16x16xf32> to vector<16x16xf32>
    %211 = arith.subf %210, %110 : vector<16x16xf32>
    %212 = math.exp %211 : vector<16x16xf32>
    %213 = arith.addf %187, %212 : vector<16x16xf32>
    %214 = arith.subf %200, %111 : vector<1x16xf32>
    %215 = math.exp %214 : vector<1x16xf32>
    %216 = arith.addf %190, %215 : vector<1x16xf32>
    %217 = arith.subf %207, %112 : vector<1x16xf32>
    %218 = math.exp %217 : vector<1x16xf32>
    %219 = arith.addf %193, %218 : vector<1x16xf32>
    %c4_i32_149 = arith.constant 4 : i32
    %220 = tpu.reciprocal %213 {approx = true} : vector<16x16xf32> -> vector<16x16xf32>
    %221 = arith.mulf %213, %220 : vector<16x16xf32>
    %cst_150 = arith.constant 2.000000e+00 : f32
    %222 = vector.broadcast %cst_150 : f32 to vector<16x16xf32>
    %223 = arith.subf %222, %221 : vector<16x16xf32>
    %224 = arith.mulf %220, %223 : vector<16x16xf32>
    %225 = tpu.reciprocal %216 {approx = true} : vector<1x16xf32> -> vector<1x16xf32>
    %226 = arith.mulf %216, %225 : vector<1x16xf32>
    %cst_151 = arith.constant 2.000000e+00 : f32
    %227 = vector.broadcast %cst_151 : f32 to vector<1x16xf32>
    %228 = arith.subf %227, %226 : vector<1x16xf32>
    %229 = arith.mulf %225, %228 : vector<1x16xf32>
    %230 = tpu.reciprocal %219 {approx = true} : vector<1x16xf32> -> vector<1x16xf32>
    %231 = arith.mulf %219, %230 : vector<1x16xf32>
    %cst_152 = arith.constant 2.000000e+00 : f32
    %232 = vector.broadcast %cst_152 : f32 to vector<1x16xf32>
    %233 = arith.subf %232, %231 : vector<1x16xf32>
    %234 = arith.mulf %230, %233 : vector<1x16xf32>
    %cst_153 = arith.constant 0.000000e+00 : f32
    %c0_i32_154 = arith.constant 0 : i32
    %c0_i32_155 = arith.constant 0 : i32
    %c0_156 = arith.constant 0 : index
    %235 = arith.index_cast %c0_i32_155 : i32 to index
    %c0_157 = arith.constant 0 : index
    %c0_158 = arith.constant 0 : index
    %236 = vector.load %arg2[%c0_156, %235, %c0_157, %c0_158] : memref<1x4x16x16xf32, #tpu.memory_space<vmem>>, vector<1x1x16x16xf32>
    %237 = vector.shape_cast %236 : vector<1x1x16x16xf32> to vector<16x16xf32>
    %c0_159 = arith.constant 0 : index
    %238 = arith.index_cast %c0_i32_155 : i32 to index
    %c0_160 = arith.constant 0 : index
    %c0_161 = arith.constant 0 : index
    %239 = vector.load %arg3[%c0_159, %238, %c0_160, %c0_161] : memref<1x4x8x16xf32, #tpu.memory_space<vmem>>, vector<1x1x1x16xf32>
    %240 = vector.shape_cast %239 : vector<1x1x1x16xf32> to vector<1x16xf32>
    %c0_162 = arith.constant 0 : index
    %241 = arith.index_cast %c0_i32_155 : i32 to index
    %c7_163 = arith.constant 7 : index
    %c0_164 = arith.constant 0 : index
    %242 = vector.load %arg3[%c0_162, %241, %c7_163, %c0_164] : memref<1x4x8x16xf32, #tpu.memory_space<vmem>>, vector<1x1x1x16xf32>
    %243 = vector.shape_cast %242 : vector<1x1x1x16xf32> to vector<1x16xf32>
    %244 = arith.select %0, %240, %243 : vector<1x16xf32>
    %c0_165 = arith.constant 0 : index
    %245 = arith.index_cast %c0_i32_155 : i32 to index
    %c7_166 = arith.constant 7 : index
    %c0_167 = arith.constant 0 : index
    %246 = vector.load %arg4[%c0_165, %245, %c7_166, %c0_167] : memref<1x4x8x16xf32, #tpu.memory_space<vmem>>, vector<1x1x1x16xf32>
    %247 = vector.shape_cast %246 : vector<1x1x1x16xf32> to vector<1x16xf32>
    %c0_168 = arith.constant 0 : index
    %248 = arith.index_cast %c0_i32_155 : i32 to index
    %c0_169 = arith.constant 0 : index
    %c0_170 = arith.constant 0 : index
    %249 = vector.load %arg4[%c0_168, %248, %c0_169, %c0_170] : memref<1x4x8x16xf32, #tpu.memory_space<vmem>>, vector<1x1x1x16xf32>
    %250 = vector.shape_cast %249 : vector<1x1x1x16xf32> to vector<1x16xf32>
    %251 = arith.select %1, %247, %250 : vector<1x16xf32>
    %252 = arith.subf %237, %110 : vector<16x16xf32>
    %253 = math.exp %252 : vector<16x16xf32>
    %254 = arith.mulf %253, %224 : vector<16x16xf32>
    %255 = arith.subf %244, %111 : vector<1x16xf32>
    %256 = math.exp %255 : vector<1x16xf32>
    %257 = arith.mulf %256, %229 : vector<1x16xf32>
    %258 = arith.subf %251, %112 : vector<1x16xf32>
    %259 = math.exp %258 : vector<1x16xf32>
    %260 = arith.mulf %259, %234 : vector<1x16xf32>
    %261 = vector.broadcast %c0_i32_155 : i32 to vector<16x16xi32>
    %262 = arith.cmpi eq, %3, %261 : vector<16x16xi32>
    %263 = arith.andi %262, %5 : vector<16x16xi1>
    %264 = arith.extui %263 : vector<16x16xi1> to vector<16x16xi32>
    %265 = arith.sitofp %264 : vector<16x16xi32> to vector<16x16xf32>
    %266 = vector.broadcast %c0_i32_155 : i32 to vector<1x16xi32>
    %267 = arith.cmpi eq, %10, %266 : vector<1x16xi32>
    %268 = arith.andi %267, %17 : vector<1x16xi1>
    %269 = arith.extui %268 : vector<1x16xi1> to vector<1x16xi32>
    %270 = arith.sitofp %269 : vector<1x16xi32> to vector<1x16xf32>
    %271 = vector.broadcast %c0_i32_155 : i32 to vector<1x16xi32>
    %272 = arith.cmpi eq, %15, %271 : vector<1x16xi32>
    %273 = arith.andi %272, %19 : vector<1x16xi1>
    %274 = arith.extui %273 : vector<1x16xi1> to vector<1x16xi32>
    %275 = arith.sitofp %274 : vector<1x16xi32> to vector<1x16xf32>
    %c1_i32_171 = arith.constant 1 : i32
    %276 = tpu.dynamic_rotate %265 by %c1_i32_171 dim 0 : vector<16x16xf32>, i32 -> vector<16x16xf32>
    %277 = vector.shape_cast %23 : vector<16x1xi1> to vector<16x1xi1>
    %278 = vector.broadcast %277 : vector<16x1xi1> to vector<16x16xi1>
    %279 = vector.shape_cast %270 : vector<1x16xf32> to vector<1x16xf32>
    %280 = vector.broadcast %279 : vector<1x16xf32> to vector<16x16xf32>
    %281 = arith.select %278, %280, %276 : vector<16x16xi1>, vector<16x16xf32>
    %cst_172 = arith.constant 2.000000e+00 : f32
    %282 = vector.broadcast %cst_172 : f32 to vector<16x16xf32>
    %283 = arith.mulf %282, %265 : vector<16x16xf32>
    %284 = arith.addf %281, %283 : vector<16x16xf32>
    %c15_i32_173 = arith.constant 15 : i32
    %285 = tpu.dynamic_rotate %265 by %c15_i32_173 dim 0 : vector<16x16xf32>, i32 -> vector<16x16xf32>
    %286 = vector.shape_cast %25 : vector<16x1xi1> to vector<16x1xi1>
    %287 = vector.broadcast %286 : vector<16x1xi1> to vector<16x16xi1>
    %288 = vector.shape_cast %275 : vector<1x16xf32> to vector<1x16xf32>
    %289 = vector.broadcast %288 : vector<1x16xf32> to vector<16x16xf32>
    %290 = arith.select %287, %289, %285 : vector<16x16xi1>, vector<16x16xf32>
    %291 = arith.addf %284, %290 : vector<16x16xf32>
    %c15_i32_174 = arith.constant 15 : i32
    %292 = tpu.dynamic_rotate %291 by %c15_i32_174 dim 1 : vector<16x16xf32>, i32 -> vector<16x16xf32>
    %293 = vector.shape_cast %29 : vector<1x16xi1> to vector<1x16xi1>
    %294 = vector.broadcast %293 : vector<1x16xi1> to vector<16x16xi1>
    %295 = arith.select %294, %291, %292 : vector<16x16xi1>, vector<16x16xf32>
    %c1_i32_175 = arith.constant 1 : i32
    %296 = tpu.dynamic_rotate %291 by %c1_i32_175 dim 1 : vector<16x16xf32>, i32 -> vector<16x16xf32>
    %297 = vector.shape_cast %27 : vector<1x16xi1> to vector<1x16xi1>
    %298 = vector.broadcast %297 : vector<1x16xi1> to vector<16x16xi1>
    %299 = arith.select %298, %291, %296 : vector<16x16xi1>, vector<16x16xf32>
    %300 = arith.subf %295, %299 : vector<16x16xf32>
    %cst_176 = arith.constant 5.000000e-01 : f32
    %301 = vector.broadcast %cst_176 : f32 to vector<16x16xf32>
    %302 = arith.mulf %301, %300 : vector<16x16xf32>
    %c1_i32_177 = arith.constant 1 : i32
    %303 = tpu.dynamic_rotate %265 by %c1_i32_177 dim 1 : vector<16x16xf32>, i32 -> vector<16x16xf32>
    %304 = vector.shape_cast %27 : vector<1x16xi1> to vector<1x16xi1>
    %305 = vector.broadcast %304 : vector<1x16xi1> to vector<16x16xi1>
    %306 = arith.select %305, %265, %303 : vector<16x16xi1>, vector<16x16xf32>
    %cst_178 = arith.constant 2.000000e+00 : f32
    %307 = vector.broadcast %cst_178 : f32 to vector<16x16xf32>
    %308 = arith.mulf %307, %265 : vector<16x16xf32>
    %309 = arith.addf %306, %308 : vector<16x16xf32>
    %c15_i32_179 = arith.constant 15 : i32
    %310 = tpu.dynamic_rotate %265 by %c15_i32_179 dim 1 : vector<16x16xf32>, i32 -> vector<16x16xf32>
    %311 = vector.shape_cast %29 : vector<1x16xi1> to vector<1x16xi1>
    %312 = vector.broadcast %311 : vector<1x16xi1> to vector<16x16xi1>
    %313 = arith.select %312, %265, %310 : vector<16x16xi1>, vector<16x16xf32>
    %314 = arith.addf %309, %313 : vector<16x16xf32>
    %c1_i32_180 = arith.constant 1 : i32
    %315 = tpu.dynamic_rotate %270 by %c1_i32_180 dim 1 : vector<1x16xf32>, i32 -> vector<1x16xf32>
    %316 = arith.select %27, %270, %315 : vector<1x16xi1>, vector<1x16xf32>
    %cst_181 = arith.constant 2.000000e+00 : f32
    %317 = vector.broadcast %cst_181 : f32 to vector<1x16xf32>
    %318 = arith.mulf %317, %270 : vector<1x16xf32>
    %319 = arith.addf %316, %318 : vector<1x16xf32>
    %c15_i32_182 = arith.constant 15 : i32
    %320 = tpu.dynamic_rotate %270 by %c15_i32_182 dim 1 : vector<1x16xf32>, i32 -> vector<1x16xf32>
    %321 = arith.select %29, %270, %320 : vector<1x16xi1>, vector<1x16xf32>
    %322 = arith.addf %319, %321 : vector<1x16xf32>
    %c1_i32_183 = arith.constant 1 : i32
    %323 = tpu.dynamic_rotate %275 by %c1_i32_183 dim 1 : vector<1x16xf32>, i32 -> vector<1x16xf32>
    %324 = arith.select %27, %275, %323 : vector<1x16xi1>, vector<1x16xf32>
    %cst_184 = arith.constant 2.000000e+00 : f32
    %325 = vector.broadcast %cst_184 : f32 to vector<1x16xf32>
    %326 = arith.mulf %325, %275 : vector<1x16xf32>
    %327 = arith.addf %324, %326 : vector<1x16xf32>
    %c15_i32_185 = arith.constant 15 : i32
    %328 = tpu.dynamic_rotate %275 by %c15_i32_185 dim 1 : vector<1x16xf32>, i32 -> vector<1x16xf32>
    %329 = arith.select %29, %275, %328 : vector<1x16xi1>, vector<1x16xf32>
    %330 = arith.addf %327, %329 : vector<1x16xf32>
    %c15_i32_186 = arith.constant 15 : i32
    %331 = tpu.dynamic_rotate %314 by %c15_i32_186 dim 0 : vector<16x16xf32>, i32 -> vector<16x16xf32>
    %332 = vector.shape_cast %25 : vector<16x1xi1> to vector<16x1xi1>
    %333 = vector.broadcast %332 : vector<16x1xi1> to vector<16x16xi1>
    %334 = vector.shape_cast %330 : vector<1x16xf32> to vector<1x16xf32>
    %335 = vector.broadcast %334 : vector<1x16xf32> to vector<16x16xf32>
    %336 = arith.select %333, %335, %331 : vector<16x16xi1>, vector<16x16xf32>
    %c1_i32_187 = arith.constant 1 : i32
    %337 = tpu.dynamic_rotate %314 by %c1_i32_187 dim 0 : vector<16x16xf32>, i32 -> vector<16x16xf32>
    %338 = vector.shape_cast %23 : vector<16x1xi1> to vector<16x1xi1>
    %339 = vector.broadcast %338 : vector<16x1xi1> to vector<16x16xi1>
    %340 = vector.shape_cast %322 : vector<1x16xf32> to vector<1x16xf32>
    %341 = vector.broadcast %340 : vector<1x16xf32> to vector<16x16xf32>
    %342 = arith.select %339, %341, %337 : vector<16x16xi1>, vector<16x16xf32>
    %343 = arith.subf %336, %342 : vector<16x16xf32>
    %cst_188 = arith.constant 5.000000e-01 : f32
    %344 = vector.broadcast %cst_188 : f32 to vector<16x16xf32>
    %345 = arith.mulf %344, %343 : vector<16x16xf32>
    %c1_i32_189 = arith.constant 1 : i32
    %346 = tpu.dynamic_rotate %254 by %c1_i32_189 dim 0 : vector<16x16xf32>, i32 -> vector<16x16xf32>
    %347 = vector.shape_cast %23 : vector<16x1xi1> to vector<16x1xi1>
    %348 = vector.broadcast %347 : vector<16x1xi1> to vector<16x16xi1>
    %349 = vector.shape_cast %257 : vector<1x16xf32> to vector<1x16xf32>
    %350 = vector.broadcast %349 : vector<1x16xf32> to vector<16x16xf32>
    %351 = arith.select %348, %350, %346 : vector<16x16xi1>, vector<16x16xf32>
    %cst_190 = arith.constant 2.000000e+00 : f32
    %352 = vector.broadcast %cst_190 : f32 to vector<16x16xf32>
    %353 = arith.mulf %352, %254 : vector<16x16xf32>
    %354 = arith.addf %351, %353 : vector<16x16xf32>
    %c15_i32_191 = arith.constant 15 : i32
    %355 = tpu.dynamic_rotate %254 by %c15_i32_191 dim 0 : vector<16x16xf32>, i32 -> vector<16x16xf32>
    %356 = vector.shape_cast %25 : vector<16x1xi1> to vector<16x1xi1>
    %357 = vector.broadcast %356 : vector<16x1xi1> to vector<16x16xi1>
    %358 = vector.shape_cast %260 : vector<1x16xf32> to vector<1x16xf32>
    %359 = vector.broadcast %358 : vector<1x16xf32> to vector<16x16xf32>
    %360 = arith.select %357, %359, %355 : vector<16x16xi1>, vector<16x16xf32>
    %361 = arith.addf %354, %360 : vector<16x16xf32>
    %c15_i32_192 = arith.constant 15 : i32
    %362 = tpu.dynamic_rotate %361 by %c15_i32_192 dim 1 : vector<16x16xf32>, i32 -> vector<16x16xf32>
    %363 = vector.shape_cast %29 : vector<1x16xi1> to vector<1x16xi1>
    %364 = vector.broadcast %363 : vector<1x16xi1> to vector<16x16xi1>
    %365 = arith.select %364, %361, %362 : vector<16x16xi1>, vector<16x16xf32>
    %c1_i32_193 = arith.constant 1 : i32
    %366 = tpu.dynamic_rotate %361 by %c1_i32_193 dim 1 : vector<16x16xf32>, i32 -> vector<16x16xf32>
    %367 = vector.shape_cast %27 : vector<1x16xi1> to vector<1x16xi1>
    %368 = vector.broadcast %367 : vector<1x16xi1> to vector<16x16xi1>
    %369 = arith.select %368, %361, %366 : vector<16x16xi1>, vector<16x16xf32>
    %370 = arith.subf %365, %369 : vector<16x16xf32>
    %cst_194 = arith.constant 5.000000e-01 : f32
    %371 = vector.broadcast %cst_194 : f32 to vector<16x16xf32>
    %372 = arith.mulf %371, %370 : vector<16x16xf32>
    %c1_i32_195 = arith.constant 1 : i32
    %373 = tpu.dynamic_rotate %254 by %c1_i32_195 dim 1 : vector<16x16xf32>, i32 -> vector<16x16xf32>
    %374 = vector.shape_cast %27 : vector<1x16xi1> to vector<1x16xi1>
    %375 = vector.broadcast %374 : vector<1x16xi1> to vector<16x16xi1>
    %376 = arith.select %375, %254, %373 : vector<16x16xi1>, vector<16x16xf32>
    %cst_196 = arith.constant 2.000000e+00 : f32
    %377 = vector.broadcast %cst_196 : f32 to vector<16x16xf32>
    %378 = arith.mulf %377, %254 : vector<16x16xf32>
    %379 = arith.addf %376, %378 : vector<16x16xf32>
    %c15_i32_197 = arith.constant 15 : i32
    %380 = tpu.dynamic_rotate %254 by %c15_i32_197 dim 1 : vector<16x16xf32>, i32 -> vector<16x16xf32>
    %381 = vector.shape_cast %29 : vector<1x16xi1> to vector<1x16xi1>
    %382 = vector.broadcast %381 : vector<1x16xi1> to vector<16x16xi1>
    %383 = arith.select %382, %254, %380 : vector<16x16xi1>, vector<16x16xf32>
    %384 = arith.addf %379, %383 : vector<16x16xf32>
    %c1_i32_198 = arith.constant 1 : i32
    %385 = tpu.dynamic_rotate %257 by %c1_i32_198 dim 1 : vector<1x16xf32>, i32 -> vector<1x16xf32>
    %386 = arith.select %27, %257, %385 : vector<1x16xi1>, vector<1x16xf32>
    %cst_199 = arith.constant 2.000000e+00 : f32
    %387 = vector.broadcast %cst_199 : f32 to vector<1x16xf32>
    %388 = arith.mulf %387, %257 : vector<1x16xf32>
    %389 = arith.addf %386, %388 : vector<1x16xf32>
    %c15_i32_200 = arith.constant 15 : i32
    %390 = tpu.dynamic_rotate %257 by %c15_i32_200 dim 1 : vector<1x16xf32>, i32 -> vector<1x16xf32>
    %391 = arith.select %29, %257, %390 : vector<1x16xi1>, vector<1x16xf32>
    %392 = arith.addf %389, %391 : vector<1x16xf32>
    %c1_i32_201 = arith.constant 1 : i32
    %393 = tpu.dynamic_rotate %260 by %c1_i32_201 dim 1 : vector<1x16xf32>, i32 -> vector<1x16xf32>
    %394 = arith.select %27, %260, %393 : vector<1x16xi1>, vector<1x16xf32>
    %cst_202 = arith.constant 2.000000e+00 : f32
    %395 = vector.broadcast %cst_202 : f32 to vector<1x16xf32>
    %396 = arith.mulf %395, %260 : vector<1x16xf32>
    %397 = arith.addf %394, %396 : vector<1x16xf32>
    %c15_i32_203 = arith.constant 15 : i32
    %398 = tpu.dynamic_rotate %260 by %c15_i32_203 dim 1 : vector<1x16xf32>, i32 -> vector<1x16xf32>
    %399 = arith.select %29, %260, %398 : vector<1x16xi1>, vector<1x16xf32>
    %400 = arith.addf %397, %399 : vector<1x16xf32>
    %c15_i32_204 = arith.constant 15 : i32
    %401 = tpu.dynamic_rotate %384 by %c15_i32_204 dim 0 : vector<16x16xf32>, i32 -> vector<16x16xf32>
    %402 = vector.shape_cast %25 : vector<16x1xi1> to vector<16x1xi1>
    %403 = vector.broadcast %402 : vector<16x1xi1> to vector<16x16xi1>
    %404 = vector.shape_cast %400 : vector<1x16xf32> to vector<1x16xf32>
    %405 = vector.broadcast %404 : vector<1x16xf32> to vector<16x16xf32>
    %406 = arith.select %403, %405, %401 : vector<16x16xi1>, vector<16x16xf32>
    %c1_i32_205 = arith.constant 1 : i32
    %407 = tpu.dynamic_rotate %384 by %c1_i32_205 dim 0 : vector<16x16xf32>, i32 -> vector<16x16xf32>
    %408 = vector.shape_cast %23 : vector<16x1xi1> to vector<16x1xi1>
    %409 = vector.broadcast %408 : vector<16x1xi1> to vector<16x16xi1>
    %410 = vector.shape_cast %392 : vector<1x16xf32> to vector<1x16xf32>
    %411 = vector.broadcast %410 : vector<1x16xf32> to vector<16x16xf32>
    %412 = arith.select %409, %411, %407 : vector<16x16xi1>, vector<16x16xf32>
    %413 = arith.subf %406, %412 : vector<16x16xf32>
    %cst_206 = arith.constant 5.000000e-01 : f32
    %414 = vector.broadcast %cst_206 : f32 to vector<16x16xf32>
    %415 = arith.mulf %414, %413 : vector<16x16xf32>
    %cst_207 = arith.constant 0.000000e+00 : f32
    %416 = vector.broadcast %cst_207 : f32 to vector<16x16xf32>
    %417 = arith.cmpf one, %302, %416 : vector<16x16xf32>
    %418 = arith.andi %417, %5 : vector<16x16xi1>
    %cst_208 = arith.constant 0.000000e+00 : f32
    %419 = vector.broadcast %cst_208 : f32 to vector<16x16xf32>
    %420 = arith.cmpf one, %345, %419 : vector<16x16xf32>
    %421 = arith.andi %420, %5 : vector<16x16xi1>
    %422 = arith.subf %302, %372 : vector<16x16xf32>
    %423 = arith.subf %345, %415 : vector<16x16xf32>
    %424 = arith.mulf %422, %422 : vector<16x16xf32>
    %cst_209 = arith.constant 0.000000e+00 : f32
    %425 = vector.broadcast %cst_209 : f32 to vector<16x16xf32>
    %426 = arith.select %418, %424, %425 : vector<16x16xi1>, vector<16x16xf32>
    %427 = arith.mulf %423, %423 : vector<16x16xf32>
    %cst_210 = arith.constant 0.000000e+00 : f32
    %428 = vector.broadcast %cst_210 : f32 to vector<16x16xf32>
    %429 = arith.select %421, %427, %428 : vector<16x16xi1>, vector<16x16xf32>
    %430 = arith.addf %426, %429 : vector<16x16xf32>
    %431 = vector.shape_cast %430 : vector<16x16xf32> to vector<1x16x16xf32>
    %cst_211 = arith.constant dense<0.000000e+00> : vector<1xf32>
    %432 = vector.multi_reduction <add>, %431, %cst_211 [1, 2] : vector<1x16x16xf32> to vector<1xf32>
    %433 = vector.shape_cast %432 : vector<1xf32> to vector<1x1x1xf32>
    %434 = vector.extract %433[0, 0, 0] : f32 from vector<1x1x1xf32>
    %435 = arith.addf %cst_153, %434 : f32
    %436 = arith.extui %418 : vector<16x16xi1> to vector<16x16xi32>
    %437 = arith.sitofp %436 : vector<16x16xi32> to vector<16x16xf32>
    %438 = vector.shape_cast %437 : vector<16x16xf32> to vector<1x16x16xf32>
    %cst_212 = arith.constant dense<0.000000e+00> : vector<1xf32>
    %439 = vector.multi_reduction <add>, %438, %cst_212 [1, 2] : vector<1x16x16xf32> to vector<1xf32>
    %440 = vector.shape_cast %439 : vector<1xf32> to vector<1x1x1xf32>
    %441 = vector.extract %440[0, 0, 0] : f32 from vector<1x1x1xf32>
    %442 = arith.extui %421 : vector<16x16xi1> to vector<16x16xi32>
    %443 = arith.sitofp %442 : vector<16x16xi32> to vector<16x16xf32>
    %444 = vector.shape_cast %443 : vector<16x16xf32> to vector<1x16x16xf32>
    %cst_213 = arith.constant dense<0.000000e+00> : vector<1xf32>
    %445 = vector.multi_reduction <add>, %444, %cst_213 [1, 2] : vector<1x16x16xf32> to vector<1xf32>
    %446 = vector.shape_cast %445 : vector<1xf32> to vector<1x1x1xf32>
    %447 = vector.extract %446[0, 0, 0] : f32 from vector<1x1x1xf32>
    %448 = arith.addf %441, %447 : f32
    %449 = arith.fptosi %448 : f32 to i32
    %450 = arith.addi %c0_i32_154, %449 : i32
    %c1_i32_214 = arith.constant 1 : i32
    %c0_215 = arith.constant 0 : index
    %451 = arith.index_cast %c1_i32_214 : i32 to index
    %c0_216 = arith.constant 0 : index
    %c0_217 = arith.constant 0 : index
    %452 = vector.load %arg2[%c0_215, %451, %c0_216, %c0_217] : memref<1x4x16x16xf32, #tpu.memory_space<vmem>>, vector<1x1x16x16xf32>
    %453 = vector.shape_cast %452 : vector<1x1x16x16xf32> to vector<16x16xf32>
    %c0_218 = arith.constant 0 : index
    %454 = arith.index_cast %c1_i32_214 : i32 to index
    %c0_219 = arith.constant 0 : index
    %c0_220 = arith.constant 0 : index
    %455 = vector.load %arg3[%c0_218, %454, %c0_219, %c0_220] : memref<1x4x8x16xf32, #tpu.memory_space<vmem>>, vector<1x1x1x16xf32>
    %456 = vector.shape_cast %455 : vector<1x1x1x16xf32> to vector<1x16xf32>
    %c0_221 = arith.constant 0 : index
    %457 = arith.index_cast %c1_i32_214 : i32 to index
    %c7_222 = arith.constant 7 : index
    %c0_223 = arith.constant 0 : index
    %458 = vector.load %arg3[%c0_221, %457, %c7_222, %c0_223] : memref<1x4x8x16xf32, #tpu.memory_space<vmem>>, vector<1x1x1x16xf32>
    %459 = vector.shape_cast %458 : vector<1x1x1x16xf32> to vector<1x16xf32>
    %460 = arith.select %0, %456, %459 : vector<1x16xf32>
    %c0_224 = arith.constant 0 : index
    %461 = arith.index_cast %c1_i32_214 : i32 to index
    %c7_225 = arith.constant 7 : index
    %c0_226 = arith.constant 0 : index
    %462 = vector.load %arg4[%c0_224, %461, %c7_225, %c0_226] : memref<1x4x8x16xf32, #tpu.memory_space<vmem>>, vector<1x1x1x16xf32>
    %463 = vector.shape_cast %462 : vector<1x1x1x16xf32> to vector<1x16xf32>
    %c0_227 = arith.constant 0 : index
    %464 = arith.index_cast %c1_i32_214 : i32 to index
    %c0_228 = arith.constant 0 : index
    %c0_229 = arith.constant 0 : index
    %465 = vector.load %arg4[%c0_227, %464, %c0_228, %c0_229] : memref<1x4x8x16xf32, #tpu.memory_space<vmem>>, vector<1x1x1x16xf32>
    %466 = vector.shape_cast %465 : vector<1x1x1x16xf32> to vector<1x16xf32>
    %467 = arith.select %1, %463, %466 : vector<1x16xf32>
    %468 = arith.subf %453, %110 : vector<16x16xf32>
    %469 = math.exp %468 : vector<16x16xf32>
    %470 = arith.mulf %469, %224 : vector<16x16xf32>
    %471 = arith.subf %460, %111 : vector<1x16xf32>
    %472 = math.exp %471 : vector<1x16xf32>
    %473 = arith.mulf %472, %229 : vector<1x16xf32>
    %474 = arith.subf %467, %112 : vector<1x16xf32>
    %475 = math.exp %474 : vector<1x16xf32>
    %476 = arith.mulf %475, %234 : vector<1x16xf32>
    %477 = vector.broadcast %c1_i32_214 : i32 to vector<16x16xi32>
    %478 = arith.cmpi eq, %3, %477 : vector<16x16xi32>
    %479 = arith.andi %478, %5 : vector<16x16xi1>
    %480 = arith.extui %479 : vector<16x16xi1> to vector<16x16xi32>
    %481 = arith.sitofp %480 : vector<16x16xi32> to vector<16x16xf32>
    %482 = vector.broadcast %c1_i32_214 : i32 to vector<1x16xi32>
    %483 = arith.cmpi eq, %10, %482 : vector<1x16xi32>
    %484 = arith.andi %483, %17 : vector<1x16xi1>
    %485 = arith.extui %484 : vector<1x16xi1> to vector<1x16xi32>
    %486 = arith.sitofp %485 : vector<1x16xi32> to vector<1x16xf32>
    %487 = vector.broadcast %c1_i32_214 : i32 to vector<1x16xi32>
    %488 = arith.cmpi eq, %15, %487 : vector<1x16xi32>
    %489 = arith.andi %488, %19 : vector<1x16xi1>
    %490 = arith.extui %489 : vector<1x16xi1> to vector<1x16xi32>
    %491 = arith.sitofp %490 : vector<1x16xi32> to vector<1x16xf32>
    %c1_i32_230 = arith.constant 1 : i32
    %492 = tpu.dynamic_rotate %481 by %c1_i32_230 dim 0 : vector<16x16xf32>, i32 -> vector<16x16xf32>
    %493 = vector.shape_cast %23 : vector<16x1xi1> to vector<16x1xi1>
    %494 = vector.broadcast %493 : vector<16x1xi1> to vector<16x16xi1>
    %495 = vector.shape_cast %486 : vector<1x16xf32> to vector<1x16xf32>
    %496 = vector.broadcast %495 : vector<1x16xf32> to vector<16x16xf32>
    %497 = arith.select %494, %496, %492 : vector<16x16xi1>, vector<16x16xf32>
    %cst_231 = arith.constant 2.000000e+00 : f32
    %498 = vector.broadcast %cst_231 : f32 to vector<16x16xf32>
    %499 = arith.mulf %498, %481 : vector<16x16xf32>
    %500 = arith.addf %497, %499 : vector<16x16xf32>
    %c15_i32_232 = arith.constant 15 : i32
    %501 = tpu.dynamic_rotate %481 by %c15_i32_232 dim 0 : vector<16x16xf32>, i32 -> vector<16x16xf32>
    %502 = vector.shape_cast %25 : vector<16x1xi1> to vector<16x1xi1>
    %503 = vector.broadcast %502 : vector<16x1xi1> to vector<16x16xi1>
    %504 = vector.shape_cast %491 : vector<1x16xf32> to vector<1x16xf32>
    %505 = vector.broadcast %504 : vector<1x16xf32> to vector<16x16xf32>
    %506 = arith.select %503, %505, %501 : vector<16x16xi1>, vector<16x16xf32>
    %507 = arith.addf %500, %506 : vector<16x16xf32>
    %c15_i32_233 = arith.constant 15 : i32
    %508 = tpu.dynamic_rotate %507 by %c15_i32_233 dim 1 : vector<16x16xf32>, i32 -> vector<16x16xf32>
    %509 = vector.shape_cast %29 : vector<1x16xi1> to vector<1x16xi1>
    %510 = vector.broadcast %509 : vector<1x16xi1> to vector<16x16xi1>
    %511 = arith.select %510, %507, %508 : vector<16x16xi1>, vector<16x16xf32>
    %c1_i32_234 = arith.constant 1 : i32
    %512 = tpu.dynamic_rotate %507 by %c1_i32_234 dim 1 : vector<16x16xf32>, i32 -> vector<16x16xf32>
    %513 = vector.shape_cast %27 : vector<1x16xi1> to vector<1x16xi1>
    %514 = vector.broadcast %513 : vector<1x16xi1> to vector<16x16xi1>
    %515 = arith.select %514, %507, %512 : vector<16x16xi1>, vector<16x16xf32>
    %516 = arith.subf %511, %515 : vector<16x16xf32>
    %cst_235 = arith.constant 5.000000e-01 : f32
    %517 = vector.broadcast %cst_235 : f32 to vector<16x16xf32>
    %518 = arith.mulf %517, %516 : vector<16x16xf32>
    %c1_i32_236 = arith.constant 1 : i32
    %519 = tpu.dynamic_rotate %481 by %c1_i32_236 dim 1 : vector<16x16xf32>, i32 -> vector<16x16xf32>
    %520 = vector.shape_cast %27 : vector<1x16xi1> to vector<1x16xi1>
    %521 = vector.broadcast %520 : vector<1x16xi1> to vector<16x16xi1>
    %522 = arith.select %521, %481, %519 : vector<16x16xi1>, vector<16x16xf32>
    %cst_237 = arith.constant 2.000000e+00 : f32
    %523 = vector.broadcast %cst_237 : f32 to vector<16x16xf32>
    %524 = arith.mulf %523, %481 : vector<16x16xf32>
    %525 = arith.addf %522, %524 : vector<16x16xf32>
    %c15_i32_238 = arith.constant 15 : i32
    %526 = tpu.dynamic_rotate %481 by %c15_i32_238 dim 1 : vector<16x16xf32>, i32 -> vector<16x16xf32>
    %527 = vector.shape_cast %29 : vector<1x16xi1> to vector<1x16xi1>
    %528 = vector.broadcast %527 : vector<1x16xi1> to vector<16x16xi1>
    %529 = arith.select %528, %481, %526 : vector<16x16xi1>, vector<16x16xf32>
    %530 = arith.addf %525, %529 : vector<16x16xf32>
    %c1_i32_239 = arith.constant 1 : i32
    %531 = tpu.dynamic_rotate %486 by %c1_i32_239 dim 1 : vector<1x16xf32>, i32 -> vector<1x16xf32>
    %532 = arith.select %27, %486, %531 : vector<1x16xi1>, vector<1x16xf32>
    %cst_240 = arith.constant 2.000000e+00 : f32
    %533 = vector.broadcast %cst_240 : f32 to vector<1x16xf32>
    %534 = arith.mulf %533, %486 : vector<1x16xf32>
    %535 = arith.addf %532, %534 : vector<1x16xf32>
    %c15_i32_241 = arith.constant 15 : i32
    %536 = tpu.dynamic_rotate %486 by %c15_i32_241 dim 1 : vector<1x16xf32>, i32 -> vector<1x16xf32>
    %537 = arith.select %29, %486, %536 : vector<1x16xi1>, vector<1x16xf32>
    %538 = arith.addf %535, %537 : vector<1x16xf32>
    %c1_i32_242 = arith.constant 1 : i32
    %539 = tpu.dynamic_rotate %491 by %c1_i32_242 dim 1 : vector<1x16xf32>, i32 -> vector<1x16xf32>
    %540 = arith.select %27, %491, %539 : vector<1x16xi1>, vector<1x16xf32>
    %cst_243 = arith.constant 2.000000e+00 : f32
    %541 = vector.broadcast %cst_243 : f32 to vector<1x16xf32>
    %542 = arith.mulf %541, %491 : vector<1x16xf32>
    %543 = arith.addf %540, %542 : vector<1x16xf32>
    %c15_i32_244 = arith.constant 15 : i32
    %544 = tpu.dynamic_rotate %491 by %c15_i32_244 dim 1 : vector<1x16xf32>, i32 -> vector<1x16xf32>
    %545 = arith.select %29, %491, %544 : vector<1x16xi1>, vector<1x16xf32>
    %546 = arith.addf %543, %545 : vector<1x16xf32>
    %c15_i32_245 = arith.constant 15 : i32
    %547 = tpu.dynamic_rotate %530 by %c15_i32_245 dim 0 : vector<16x16xf32>, i32 -> vector<16x16xf32>
    %548 = vector.shape_cast %25 : vector<16x1xi1> to vector<16x1xi1>
    %549 = vector.broadcast %548 : vector<16x1xi1> to vector<16x16xi1>
    %550 = vector.shape_cast %546 : vector<1x16xf32> to vector<1x16xf32>
    %551 = vector.broadcast %550 : vector<1x16xf32> to vector<16x16xf32>
    %552 = arith.select %549, %551, %547 : vector<16x16xi1>, vector<16x16xf32>
    %c1_i32_246 = arith.constant 1 : i32
    %553 = tpu.dynamic_rotate %530 by %c1_i32_246 dim 0 : vector<16x16xf32>, i32 -> vector<16x16xf32>
    %554 = vector.shape_cast %23 : vector<16x1xi1> to vector<16x1xi1>
    %555 = vector.broadcast %554 : vector<16x1xi1> to vector<16x16xi1>
    %556 = vector.shape_cast %538 : vector<1x16xf32> to vector<1x16xf32>
    %557 = vector.broadcast %556 : vector<1x16xf32> to vector<16x16xf32>
    %558 = arith.select %555, %557, %553 : vector<16x16xi1>, vector<16x16xf32>
    %559 = arith.subf %552, %558 : vector<16x16xf32>
    %cst_247 = arith.constant 5.000000e-01 : f32
    %560 = vector.broadcast %cst_247 : f32 to vector<16x16xf32>
    %561 = arith.mulf %560, %559 : vector<16x16xf32>
    %c1_i32_248 = arith.constant 1 : i32
    %562 = tpu.dynamic_rotate %470 by %c1_i32_248 dim 0 : vector<16x16xf32>, i32 -> vector<16x16xf32>
    %563 = vector.shape_cast %23 : vector<16x1xi1> to vector<16x1xi1>
    %564 = vector.broadcast %563 : vector<16x1xi1> to vector<16x16xi1>
    %565 = vector.shape_cast %473 : vector<1x16xf32> to vector<1x16xf32>
    %566 = vector.broadcast %565 : vector<1x16xf32> to vector<16x16xf32>
    %567 = arith.select %564, %566, %562 : vector<16x16xi1>, vector<16x16xf32>
    %cst_249 = arith.constant 2.000000e+00 : f32
    %568 = vector.broadcast %cst_249 : f32 to vector<16x16xf32>
    %569 = arith.mulf %568, %470 : vector<16x16xf32>
    %570 = arith.addf %567, %569 : vector<16x16xf32>
    %c15_i32_250 = arith.constant 15 : i32
    %571 = tpu.dynamic_rotate %470 by %c15_i32_250 dim 0 : vector<16x16xf32>, i32 -> vector<16x16xf32>
    %572 = vector.shape_cast %25 : vector<16x1xi1> to vector<16x1xi1>
    %573 = vector.broadcast %572 : vector<16x1xi1> to vector<16x16xi1>
    %574 = vector.shape_cast %476 : vector<1x16xf32> to vector<1x16xf32>
    %575 = vector.broadcast %574 : vector<1x16xf32> to vector<16x16xf32>
    %576 = arith.select %573, %575, %571 : vector<16x16xi1>, vector<16x16xf32>
    %577 = arith.addf %570, %576 : vector<16x16xf32>
    %c15_i32_251 = arith.constant 15 : i32
    %578 = tpu.dynamic_rotate %577 by %c15_i32_251 dim 1 : vector<16x16xf32>, i32 -> vector<16x16xf32>
    %579 = vector.shape_cast %29 : vector<1x16xi1> to vector<1x16xi1>
    %580 = vector.broadcast %579 : vector<1x16xi1> to vector<16x16xi1>
    %581 = arith.select %580, %577, %578 : vector<16x16xi1>, vector<16x16xf32>
    %c1_i32_252 = arith.constant 1 : i32
    %582 = tpu.dynamic_rotate %577 by %c1_i32_252 dim 1 : vector<16x16xf32>, i32 -> vector<16x16xf32>
    %583 = vector.shape_cast %27 : vector<1x16xi1> to vector<1x16xi1>
    %584 = vector.broadcast %583 : vector<1x16xi1> to vector<16x16xi1>
    %585 = arith.select %584, %577, %582 : vector<16x16xi1>, vector<16x16xf32>
    %586 = arith.subf %581, %585 : vector<16x16xf32>
    %cst_253 = arith.constant 5.000000e-01 : f32
    %587 = vector.broadcast %cst_253 : f32 to vector<16x16xf32>
    %588 = arith.mulf %587, %586 : vector<16x16xf32>
    %c1_i32_254 = arith.constant 1 : i32
    %589 = tpu.dynamic_rotate %470 by %c1_i32_254 dim 1 : vector<16x16xf32>, i32 -> vector<16x16xf32>
    %590 = vector.shape_cast %27 : vector<1x16xi1> to vector<1x16xi1>
    %591 = vector.broadcast %590 : vector<1x16xi1> to vector<16x16xi1>
    %592 = arith.select %591, %470, %589 : vector<16x16xi1>, vector<16x16xf32>
    %cst_255 = arith.constant 2.000000e+00 : f32
    %593 = vector.broadcast %cst_255 : f32 to vector<16x16xf32>
    %594 = arith.mulf %593, %470 : vector<16x16xf32>
    %595 = arith.addf %592, %594 : vector<16x16xf32>
    %c15_i32_256 = arith.constant 15 : i32
    %596 = tpu.dynamic_rotate %470 by %c15_i32_256 dim 1 : vector<16x16xf32>, i32 -> vector<16x16xf32>
    %597 = vector.shape_cast %29 : vector<1x16xi1> to vector<1x16xi1>
    %598 = vector.broadcast %597 : vector<1x16xi1> to vector<16x16xi1>
    %599 = arith.select %598, %470, %596 : vector<16x16xi1>, vector<16x16xf32>
    %600 = arith.addf %595, %599 : vector<16x16xf32>
    %c1_i32_257 = arith.constant 1 : i32
    %601 = tpu.dynamic_rotate %473 by %c1_i32_257 dim 1 : vector<1x16xf32>, i32 -> vector<1x16xf32>
    %602 = arith.select %27, %473, %601 : vector<1x16xi1>, vector<1x16xf32>
    %cst_258 = arith.constant 2.000000e+00 : f32
    %603 = vector.broadcast %cst_258 : f32 to vector<1x16xf32>
    %604 = arith.mulf %603, %473 : vector<1x16xf32>
    %605 = arith.addf %602, %604 : vector<1x16xf32>
    %c15_i32_259 = arith.constant 15 : i32
    %606 = tpu.dynamic_rotate %473 by %c15_i32_259 dim 1 : vector<1x16xf32>, i32 -> vector<1x16xf32>
    %607 = arith.select %29, %473, %606 : vector<1x16xi1>, vector<1x16xf32>
    %608 = arith.addf %605, %607 : vector<1x16xf32>
    %c1_i32_260 = arith.constant 1 : i32
    %609 = tpu.dynamic_rotate %476 by %c1_i32_260 dim 1 : vector<1x16xf32>, i32 -> vector<1x16xf32>
    %610 = arith.select %27, %476, %609 : vector<1x16xi1>, vector<1x16xf32>
    %cst_261 = arith.constant 2.000000e+00 : f32
    %611 = vector.broadcast %cst_261 : f32 to vector<1x16xf32>
    %612 = arith.mulf %611, %476 : vector<1x16xf32>
    %613 = arith.addf %610, %612 : vector<1x16xf32>
    %c15_i32_262 = arith.constant 15 : i32
    %614 = tpu.dynamic_rotate %476 by %c15_i32_262 dim 1 : vector<1x16xf32>, i32 -> vector<1x16xf32>
    %615 = arith.select %29, %476, %614 : vector<1x16xi1>, vector<1x16xf32>
    %616 = arith.addf %613, %615 : vector<1x16xf32>
    %c15_i32_263 = arith.constant 15 : i32
    %617 = tpu.dynamic_rotate %600 by %c15_i32_263 dim 0 : vector<16x16xf32>, i32 -> vector<16x16xf32>
    %618 = vector.shape_cast %25 : vector<16x1xi1> to vector<16x1xi1>
    %619 = vector.broadcast %618 : vector<16x1xi1> to vector<16x16xi1>
    %620 = vector.shape_cast %616 : vector<1x16xf32> to vector<1x16xf32>
    %621 = vector.broadcast %620 : vector<1x16xf32> to vector<16x16xf32>
    %622 = arith.select %619, %621, %617 : vector<16x16xi1>, vector<16x16xf32>
    %c1_i32_264 = arith.constant 1 : i32
    %623 = tpu.dynamic_rotate %600 by %c1_i32_264 dim 0 : vector<16x16xf32>, i32 -> vector<16x16xf32>
    %624 = vector.shape_cast %23 : vector<16x1xi1> to vector<16x1xi1>
    %625 = vector.broadcast %624 : vector<16x1xi1> to vector<16x16xi1>
    %626 = vector.shape_cast %608 : vector<1x16xf32> to vector<1x16xf32>
    %627 = vector.broadcast %626 : vector<1x16xf32> to vector<16x16xf32>
    %628 = arith.select %625, %627, %623 : vector<16x16xi1>, vector<16x16xf32>
    %629 = arith.subf %622, %628 : vector<16x16xf32>
    %cst_265 = arith.constant 5.000000e-01 : f32
    %630 = vector.broadcast %cst_265 : f32 to vector<16x16xf32>
    %631 = arith.mulf %630, %629 : vector<16x16xf32>
    %cst_266 = arith.constant 0.000000e+00 : f32
    %632 = vector.broadcast %cst_266 : f32 to vector<16x16xf32>
    %633 = arith.cmpf one, %518, %632 : vector<16x16xf32>
    %634 = arith.andi %633, %5 : vector<16x16xi1>
    %cst_267 = arith.constant 0.000000e+00 : f32
    %635 = vector.broadcast %cst_267 : f32 to vector<16x16xf32>
    %636 = arith.cmpf one, %561, %635 : vector<16x16xf32>
    %637 = arith.andi %636, %5 : vector<16x16xi1>
    %638 = arith.subf %518, %588 : vector<16x16xf32>
    %639 = arith.subf %561, %631 : vector<16x16xf32>
    %640 = arith.mulf %638, %638 : vector<16x16xf32>
    %cst_268 = arith.constant 0.000000e+00 : f32
    %641 = vector.broadcast %cst_268 : f32 to vector<16x16xf32>
    %642 = arith.select %634, %640, %641 : vector<16x16xi1>, vector<16x16xf32>
    %643 = arith.mulf %639, %639 : vector<16x16xf32>
    %cst_269 = arith.constant 0.000000e+00 : f32
    %644 = vector.broadcast %cst_269 : f32 to vector<16x16xf32>
    %645 = arith.select %637, %643, %644 : vector<16x16xi1>, vector<16x16xf32>
    %646 = arith.addf %642, %645 : vector<16x16xf32>
    %647 = vector.shape_cast %646 : vector<16x16xf32> to vector<1x16x16xf32>
    %cst_270 = arith.constant dense<0.000000e+00> : vector<1xf32>
    %648 = vector.multi_reduction <add>, %647, %cst_270 [1, 2] : vector<1x16x16xf32> to vector<1xf32>
    %649 = vector.shape_cast %648 : vector<1xf32> to vector<1x1x1xf32>
    %650 = vector.extract %649[0, 0, 0] : f32 from vector<1x1x1xf32>
    %651 = arith.addf %435, %650 : f32
    %652 = arith.extui %634 : vector<16x16xi1> to vector<16x16xi32>
    %653 = arith.sitofp %652 : vector<16x16xi32> to vector<16x16xf32>
    %654 = vector.shape_cast %653 : vector<16x16xf32> to vector<1x16x16xf32>
    %cst_271 = arith.constant dense<0.000000e+00> : vector<1xf32>
    %655 = vector.multi_reduction <add>, %654, %cst_271 [1, 2] : vector<1x16x16xf32> to vector<1xf32>
    %656 = vector.shape_cast %655 : vector<1xf32> to vector<1x1x1xf32>
    %657 = vector.extract %656[0, 0, 0] : f32 from vector<1x1x1xf32>
    %658 = arith.extui %637 : vector<16x16xi1> to vector<16x16xi32>
    %659 = arith.sitofp %658 : vector<16x16xi32> to vector<16x16xf32>
    %660 = vector.shape_cast %659 : vector<16x16xf32> to vector<1x16x16xf32>
    %cst_272 = arith.constant dense<0.000000e+00> : vector<1xf32>
    %661 = vector.multi_reduction <add>, %660, %cst_272 [1, 2] : vector<1x16x16xf32> to vector<1xf32>
    %662 = vector.shape_cast %661 : vector<1xf32> to vector<1x1x1xf32>
    %663 = vector.extract %662[0, 0, 0] : f32 from vector<1x1x1xf32>
    %664 = arith.addf %657, %663 : f32
    %665 = arith.fptosi %664 : f32 to i32
    %666 = arith.addi %450, %665 : i32
    %c2_i32_273 = arith.constant 2 : i32
    %c0_274 = arith.constant 0 : index
    %667 = arith.index_cast %c2_i32_273 : i32 to index
    %c0_275 = arith.constant 0 : index
    %c0_276 = arith.constant 0 : index
    %668 = vector.load %arg2[%c0_274, %667, %c0_275, %c0_276] : memref<1x4x16x16xf32, #tpu.memory_space<vmem>>, vector<1x1x16x16xf32>
    %669 = vector.shape_cast %668 : vector<1x1x16x16xf32> to vector<16x16xf32>
    %c0_277 = arith.constant 0 : index
    %670 = arith.index_cast %c2_i32_273 : i32 to index
    %c0_278 = arith.constant 0 : index
    %c0_279 = arith.constant 0 : index
    %671 = vector.load %arg3[%c0_277, %670, %c0_278, %c0_279] : memref<1x4x8x16xf32, #tpu.memory_space<vmem>>, vector<1x1x1x16xf32>
    %672 = vector.shape_cast %671 : vector<1x1x1x16xf32> to vector<1x16xf32>
    %c0_280 = arith.constant 0 : index
    %673 = arith.index_cast %c2_i32_273 : i32 to index
    %c7_281 = arith.constant 7 : index
    %c0_282 = arith.constant 0 : index
    %674 = vector.load %arg3[%c0_280, %673, %c7_281, %c0_282] : memref<1x4x8x16xf32, #tpu.memory_space<vmem>>, vector<1x1x1x16xf32>
    %675 = vector.shape_cast %674 : vector<1x1x1x16xf32> to vector<1x16xf32>
    %676 = arith.select %0, %672, %675 : vector<1x16xf32>
    %c0_283 = arith.constant 0 : index
    %677 = arith.index_cast %c2_i32_273 : i32 to index
    %c7_284 = arith.constant 7 : index
    %c0_285 = arith.constant 0 : index
    %678 = vector.load %arg4[%c0_283, %677, %c7_284, %c0_285] : memref<1x4x8x16xf32, #tpu.memory_space<vmem>>, vector<1x1x1x16xf32>
    %679 = vector.shape_cast %678 : vector<1x1x1x16xf32> to vector<1x16xf32>
    %c0_286 = arith.constant 0 : index
    %680 = arith.index_cast %c2_i32_273 : i32 to index
    %c0_287 = arith.constant 0 : index
    %c0_288 = arith.constant 0 : index
    %681 = vector.load %arg4[%c0_286, %680, %c0_287, %c0_288] : memref<1x4x8x16xf32, #tpu.memory_space<vmem>>, vector<1x1x1x16xf32>
    %682 = vector.shape_cast %681 : vector<1x1x1x16xf32> to vector<1x16xf32>
    %683 = arith.select %1, %679, %682 : vector<1x16xf32>
    %684 = arith.subf %669, %110 : vector<16x16xf32>
    %685 = math.exp %684 : vector<16x16xf32>
    %686 = arith.mulf %685, %224 : vector<16x16xf32>
    %687 = arith.subf %676, %111 : vector<1x16xf32>
    %688 = math.exp %687 : vector<1x16xf32>
    %689 = arith.mulf %688, %229 : vector<1x16xf32>
    %690 = arith.subf %683, %112 : vector<1x16xf32>
    %691 = math.exp %690 : vector<1x16xf32>
    %692 = arith.mulf %691, %234 : vector<1x16xf32>
    %693 = vector.broadcast %c2_i32_273 : i32 to vector<16x16xi32>
    %694 = arith.cmpi eq, %3, %693 : vector<16x16xi32>
    %695 = arith.andi %694, %5 : vector<16x16xi1>
    %696 = arith.extui %695 : vector<16x16xi1> to vector<16x16xi32>
    %697 = arith.sitofp %696 : vector<16x16xi32> to vector<16x16xf32>
    %698 = vector.broadcast %c2_i32_273 : i32 to vector<1x16xi32>
    %699 = arith.cmpi eq, %10, %698 : vector<1x16xi32>
    %700 = arith.andi %699, %17 : vector<1x16xi1>
    %701 = arith.extui %700 : vector<1x16xi1> to vector<1x16xi32>
    %702 = arith.sitofp %701 : vector<1x16xi32> to vector<1x16xf32>
    %703 = vector.broadcast %c2_i32_273 : i32 to vector<1x16xi32>
    %704 = arith.cmpi eq, %15, %703 : vector<1x16xi32>
    %705 = arith.andi %704, %19 : vector<1x16xi1>
    %706 = arith.extui %705 : vector<1x16xi1> to vector<1x16xi32>
    %707 = arith.sitofp %706 : vector<1x16xi32> to vector<1x16xf32>
    %c1_i32_289 = arith.constant 1 : i32
    %708 = tpu.dynamic_rotate %697 by %c1_i32_289 dim 0 : vector<16x16xf32>, i32 -> vector<16x16xf32>
    %709 = vector.shape_cast %23 : vector<16x1xi1> to vector<16x1xi1>
    %710 = vector.broadcast %709 : vector<16x1xi1> to vector<16x16xi1>
    %711 = vector.shape_cast %702 : vector<1x16xf32> to vector<1x16xf32>
    %712 = vector.broadcast %711 : vector<1x16xf32> to vector<16x16xf32>
    %713 = arith.select %710, %712, %708 : vector<16x16xi1>, vector<16x16xf32>
    %cst_290 = arith.constant 2.000000e+00 : f32
    %714 = vector.broadcast %cst_290 : f32 to vector<16x16xf32>
    %715 = arith.mulf %714, %697 : vector<16x16xf32>
    %716 = arith.addf %713, %715 : vector<16x16xf32>
    %c15_i32_291 = arith.constant 15 : i32
    %717 = tpu.dynamic_rotate %697 by %c15_i32_291 dim 0 : vector<16x16xf32>, i32 -> vector<16x16xf32>
    %718 = vector.shape_cast %25 : vector<16x1xi1> to vector<16x1xi1>
    %719 = vector.broadcast %718 : vector<16x1xi1> to vector<16x16xi1>
    %720 = vector.shape_cast %707 : vector<1x16xf32> to vector<1x16xf32>
    %721 = vector.broadcast %720 : vector<1x16xf32> to vector<16x16xf32>
    %722 = arith.select %719, %721, %717 : vector<16x16xi1>, vector<16x16xf32>
    %723 = arith.addf %716, %722 : vector<16x16xf32>
    %c15_i32_292 = arith.constant 15 : i32
    %724 = tpu.dynamic_rotate %723 by %c15_i32_292 dim 1 : vector<16x16xf32>, i32 -> vector<16x16xf32>
    %725 = vector.shape_cast %29 : vector<1x16xi1> to vector<1x16xi1>
    %726 = vector.broadcast %725 : vector<1x16xi1> to vector<16x16xi1>
    %727 = arith.select %726, %723, %724 : vector<16x16xi1>, vector<16x16xf32>
    %c1_i32_293 = arith.constant 1 : i32
    %728 = tpu.dynamic_rotate %723 by %c1_i32_293 dim 1 : vector<16x16xf32>, i32 -> vector<16x16xf32>
    %729 = vector.shape_cast %27 : vector<1x16xi1> to vector<1x16xi1>
    %730 = vector.broadcast %729 : vector<1x16xi1> to vector<16x16xi1>
    %731 = arith.select %730, %723, %728 : vector<16x16xi1>, vector<16x16xf32>
    %732 = arith.subf %727, %731 : vector<16x16xf32>
    %cst_294 = arith.constant 5.000000e-01 : f32
    %733 = vector.broadcast %cst_294 : f32 to vector<16x16xf32>
    %734 = arith.mulf %733, %732 : vector<16x16xf32>
    %c1_i32_295 = arith.constant 1 : i32
    %735 = tpu.dynamic_rotate %697 by %c1_i32_295 dim 1 : vector<16x16xf32>, i32 -> vector<16x16xf32>
    %736 = vector.shape_cast %27 : vector<1x16xi1> to vector<1x16xi1>
    %737 = vector.broadcast %736 : vector<1x16xi1> to vector<16x16xi1>
    %738 = arith.select %737, %697, %735 : vector<16x16xi1>, vector<16x16xf32>
    %cst_296 = arith.constant 2.000000e+00 : f32
    %739 = vector.broadcast %cst_296 : f32 to vector<16x16xf32>
    %740 = arith.mulf %739, %697 : vector<16x16xf32>
    %741 = arith.addf %738, %740 : vector<16x16xf32>
    %c15_i32_297 = arith.constant 15 : i32
    %742 = tpu.dynamic_rotate %697 by %c15_i32_297 dim 1 : vector<16x16xf32>, i32 -> vector<16x16xf32>
    %743 = vector.shape_cast %29 : vector<1x16xi1> to vector<1x16xi1>
    %744 = vector.broadcast %743 : vector<1x16xi1> to vector<16x16xi1>
    %745 = arith.select %744, %697, %742 : vector<16x16xi1>, vector<16x16xf32>
    %746 = arith.addf %741, %745 : vector<16x16xf32>
    %c1_i32_298 = arith.constant 1 : i32
    %747 = tpu.dynamic_rotate %702 by %c1_i32_298 dim 1 : vector<1x16xf32>, i32 -> vector<1x16xf32>
    %748 = arith.select %27, %702, %747 : vector<1x16xi1>, vector<1x16xf32>
    %cst_299 = arith.constant 2.000000e+00 : f32
    %749 = vector.broadcast %cst_299 : f32 to vector<1x16xf32>
    %750 = arith.mulf %749, %702 : vector<1x16xf32>
    %751 = arith.addf %748, %750 : vector<1x16xf32>
    %c15_i32_300 = arith.constant 15 : i32
    %752 = tpu.dynamic_rotate %702 by %c15_i32_300 dim 1 : vector<1x16xf32>, i32 -> vector<1x16xf32>
    %753 = arith.select %29, %702, %752 : vector<1x16xi1>, vector<1x16xf32>
    %754 = arith.addf %751, %753 : vector<1x16xf32>
    %c1_i32_301 = arith.constant 1 : i32
    %755 = tpu.dynamic_rotate %707 by %c1_i32_301 dim 1 : vector<1x16xf32>, i32 -> vector<1x16xf32>
    %756 = arith.select %27, %707, %755 : vector<1x16xi1>, vector<1x16xf32>
    %cst_302 = arith.constant 2.000000e+00 : f32
    %757 = vector.broadcast %cst_302 : f32 to vector<1x16xf32>
    %758 = arith.mulf %757, %707 : vector<1x16xf32>
    %759 = arith.addf %756, %758 : vector<1x16xf32>
    %c15_i32_303 = arith.constant 15 : i32
    %760 = tpu.dynamic_rotate %707 by %c15_i32_303 dim 1 : vector<1x16xf32>, i32 -> vector<1x16xf32>
    %761 = arith.select %29, %707, %760 : vector<1x16xi1>, vector<1x16xf32>
    %762 = arith.addf %759, %761 : vector<1x16xf32>
    %c15_i32_304 = arith.constant 15 : i32
    %763 = tpu.dynamic_rotate %746 by %c15_i32_304 dim 0 : vector<16x16xf32>, i32 -> vector<16x16xf32>
    %764 = vector.shape_cast %25 : vector<16x1xi1> to vector<16x1xi1>
    %765 = vector.broadcast %764 : vector<16x1xi1> to vector<16x16xi1>
    %766 = vector.shape_cast %762 : vector<1x16xf32> to vector<1x16xf32>
    %767 = vector.broadcast %766 : vector<1x16xf32> to vector<16x16xf32>
    %768 = arith.select %765, %767, %763 : vector<16x16xi1>, vector<16x16xf32>
    %c1_i32_305 = arith.constant 1 : i32
    %769 = tpu.dynamic_rotate %746 by %c1_i32_305 dim 0 : vector<16x16xf32>, i32 -> vector<16x16xf32>
    %770 = vector.shape_cast %23 : vector<16x1xi1> to vector<16x1xi1>
    %771 = vector.broadcast %770 : vector<16x1xi1> to vector<16x16xi1>
    %772 = vector.shape_cast %754 : vector<1x16xf32> to vector<1x16xf32>
    %773 = vector.broadcast %772 : vector<1x16xf32> to vector<16x16xf32>
    %774 = arith.select %771, %773, %769 : vector<16x16xi1>, vector<16x16xf32>
    %775 = arith.subf %768, %774 : vector<16x16xf32>
    %cst_306 = arith.constant 5.000000e-01 : f32
    %776 = vector.broadcast %cst_306 : f32 to vector<16x16xf32>
    %777 = arith.mulf %776, %775 : vector<16x16xf32>
    %c1_i32_307 = arith.constant 1 : i32
    %778 = tpu.dynamic_rotate %686 by %c1_i32_307 dim 0 : vector<16x16xf32>, i32 -> vector<16x16xf32>
    %779 = vector.shape_cast %23 : vector<16x1xi1> to vector<16x1xi1>
    %780 = vector.broadcast %779 : vector<16x1xi1> to vector<16x16xi1>
    %781 = vector.shape_cast %689 : vector<1x16xf32> to vector<1x16xf32>
    %782 = vector.broadcast %781 : vector<1x16xf32> to vector<16x16xf32>
    %783 = arith.select %780, %782, %778 : vector<16x16xi1>, vector<16x16xf32>
    %cst_308 = arith.constant 2.000000e+00 : f32
    %784 = vector.broadcast %cst_308 : f32 to vector<16x16xf32>
    %785 = arith.mulf %784, %686 : vector<16x16xf32>
    %786 = arith.addf %783, %785 : vector<16x16xf32>
    %c15_i32_309 = arith.constant 15 : i32
    %787 = tpu.dynamic_rotate %686 by %c15_i32_309 dim 0 : vector<16x16xf32>, i32 -> vector<16x16xf32>
    %788 = vector.shape_cast %25 : vector<16x1xi1> to vector<16x1xi1>
    %789 = vector.broadcast %788 : vector<16x1xi1> to vector<16x16xi1>
    %790 = vector.shape_cast %692 : vector<1x16xf32> to vector<1x16xf32>
    %791 = vector.broadcast %790 : vector<1x16xf32> to vector<16x16xf32>
    %792 = arith.select %789, %791, %787 : vector<16x16xi1>, vector<16x16xf32>
    %793 = arith.addf %786, %792 : vector<16x16xf32>
    %c15_i32_310 = arith.constant 15 : i32
    %794 = tpu.dynamic_rotate %793 by %c15_i32_310 dim 1 : vector<16x16xf32>, i32 -> vector<16x16xf32>
    %795 = vector.shape_cast %29 : vector<1x16xi1> to vector<1x16xi1>
    %796 = vector.broadcast %795 : vector<1x16xi1> to vector<16x16xi1>
    %797 = arith.select %796, %793, %794 : vector<16x16xi1>, vector<16x16xf32>
    %c1_i32_311 = arith.constant 1 : i32
    %798 = tpu.dynamic_rotate %793 by %c1_i32_311 dim 1 : vector<16x16xf32>, i32 -> vector<16x16xf32>
    %799 = vector.shape_cast %27 : vector<1x16xi1> to vector<1x16xi1>
    %800 = vector.broadcast %799 : vector<1x16xi1> to vector<16x16xi1>
    %801 = arith.select %800, %793, %798 : vector<16x16xi1>, vector<16x16xf32>
    %802 = arith.subf %797, %801 : vector<16x16xf32>
    %cst_312 = arith.constant 5.000000e-01 : f32
    %803 = vector.broadcast %cst_312 : f32 to vector<16x16xf32>
    %804 = arith.mulf %803, %802 : vector<16x16xf32>
    %c1_i32_313 = arith.constant 1 : i32
    %805 = tpu.dynamic_rotate %686 by %c1_i32_313 dim 1 : vector<16x16xf32>, i32 -> vector<16x16xf32>
    %806 = vector.shape_cast %27 : vector<1x16xi1> to vector<1x16xi1>
    %807 = vector.broadcast %806 : vector<1x16xi1> to vector<16x16xi1>
    %808 = arith.select %807, %686, %805 : vector<16x16xi1>, vector<16x16xf32>
    %cst_314 = arith.constant 2.000000e+00 : f32
    %809 = vector.broadcast %cst_314 : f32 to vector<16x16xf32>
    %810 = arith.mulf %809, %686 : vector<16x16xf32>
    %811 = arith.addf %808, %810 : vector<16x16xf32>
    %c15_i32_315 = arith.constant 15 : i32
    %812 = tpu.dynamic_rotate %686 by %c15_i32_315 dim 1 : vector<16x16xf32>, i32 -> vector<16x16xf32>
    %813 = vector.shape_cast %29 : vector<1x16xi1> to vector<1x16xi1>
    %814 = vector.broadcast %813 : vector<1x16xi1> to vector<16x16xi1>
    %815 = arith.select %814, %686, %812 : vector<16x16xi1>, vector<16x16xf32>
    %816 = arith.addf %811, %815 : vector<16x16xf32>
    %c1_i32_316 = arith.constant 1 : i32
    %817 = tpu.dynamic_rotate %689 by %c1_i32_316 dim 1 : vector<1x16xf32>, i32 -> vector<1x16xf32>
    %818 = arith.select %27, %689, %817 : vector<1x16xi1>, vector<1x16xf32>
    %cst_317 = arith.constant 2.000000e+00 : f32
    %819 = vector.broadcast %cst_317 : f32 to vector<1x16xf32>
    %820 = arith.mulf %819, %689 : vector<1x16xf32>
    %821 = arith.addf %818, %820 : vector<1x16xf32>
    %c15_i32_318 = arith.constant 15 : i32
    %822 = tpu.dynamic_rotate %689 by %c15_i32_318 dim 1 : vector<1x16xf32>, i32 -> vector<1x16xf32>
    %823 = arith.select %29, %689, %822 : vector<1x16xi1>, vector<1x16xf32>
    %824 = arith.addf %821, %823 : vector<1x16xf32>
    %c1_i32_319 = arith.constant 1 : i32
    %825 = tpu.dynamic_rotate %692 by %c1_i32_319 dim 1 : vector<1x16xf32>, i32 -> vector<1x16xf32>
    %826 = arith.select %27, %692, %825 : vector<1x16xi1>, vector<1x16xf32>
    %cst_320 = arith.constant 2.000000e+00 : f32
    %827 = vector.broadcast %cst_320 : f32 to vector<1x16xf32>
    %828 = arith.mulf %827, %692 : vector<1x16xf32>
    %829 = arith.addf %826, %828 : vector<1x16xf32>
    %c15_i32_321 = arith.constant 15 : i32
    %830 = tpu.dynamic_rotate %692 by %c15_i32_321 dim 1 : vector<1x16xf32>, i32 -> vector<1x16xf32>
    %831 = arith.select %29, %692, %830 : vector<1x16xi1>, vector<1x16xf32>
    %832 = arith.addf %829, %831 : vector<1x16xf32>
    %c15_i32_322 = arith.constant 15 : i32
    %833 = tpu.dynamic_rotate %816 by %c15_i32_322 dim 0 : vector<16x16xf32>, i32 -> vector<16x16xf32>
    %834 = vector.shape_cast %25 : vector<16x1xi1> to vector<16x1xi1>
    %835 = vector.broadcast %834 : vector<16x1xi1> to vector<16x16xi1>
    %836 = vector.shape_cast %832 : vector<1x16xf32> to vector<1x16xf32>
    %837 = vector.broadcast %836 : vector<1x16xf32> to vector<16x16xf32>
    %838 = arith.select %835, %837, %833 : vector<16x16xi1>, vector<16x16xf32>
    %c1_i32_323 = arith.constant 1 : i32
    %839 = tpu.dynamic_rotate %816 by %c1_i32_323 dim 0 : vector<16x16xf32>, i32 -> vector<16x16xf32>
    %840 = vector.shape_cast %23 : vector<16x1xi1> to vector<16x1xi1>
    %841 = vector.broadcast %840 : vector<16x1xi1> to vector<16x16xi1>
    %842 = vector.shape_cast %824 : vector<1x16xf32> to vector<1x16xf32>
    %843 = vector.broadcast %842 : vector<1x16xf32> to vector<16x16xf32>
    %844 = arith.select %841, %843, %839 : vector<16x16xi1>, vector<16x16xf32>
    %845 = arith.subf %838, %844 : vector<16x16xf32>
    %cst_324 = arith.constant 5.000000e-01 : f32
    %846 = vector.broadcast %cst_324 : f32 to vector<16x16xf32>
    %847 = arith.mulf %846, %845 : vector<16x16xf32>
    %cst_325 = arith.constant 0.000000e+00 : f32
    %848 = vector.broadcast %cst_325 : f32 to vector<16x16xf32>
    %849 = arith.cmpf one, %734, %848 : vector<16x16xf32>
    %850 = arith.andi %849, %5 : vector<16x16xi1>
    %cst_326 = arith.constant 0.000000e+00 : f32
    %851 = vector.broadcast %cst_326 : f32 to vector<16x16xf32>
    %852 = arith.cmpf one, %777, %851 : vector<16x16xf32>
    %853 = arith.andi %852, %5 : vector<16x16xi1>
    %854 = arith.subf %734, %804 : vector<16x16xf32>
    %855 = arith.subf %777, %847 : vector<16x16xf32>
    %856 = arith.mulf %854, %854 : vector<16x16xf32>
    %cst_327 = arith.constant 0.000000e+00 : f32
    %857 = vector.broadcast %cst_327 : f32 to vector<16x16xf32>
    %858 = arith.select %850, %856, %857 : vector<16x16xi1>, vector<16x16xf32>
    %859 = arith.mulf %855, %855 : vector<16x16xf32>
    %cst_328 = arith.constant 0.000000e+00 : f32
    %860 = vector.broadcast %cst_328 : f32 to vector<16x16xf32>
    %861 = arith.select %853, %859, %860 : vector<16x16xi1>, vector<16x16xf32>
    %862 = arith.addf %858, %861 : vector<16x16xf32>
    %863 = vector.shape_cast %862 : vector<16x16xf32> to vector<1x16x16xf32>
    %cst_329 = arith.constant dense<0.000000e+00> : vector<1xf32>
    %864 = vector.multi_reduction <add>, %863, %cst_329 [1, 2] : vector<1x16x16xf32> to vector<1xf32>
    %865 = vector.shape_cast %864 : vector<1xf32> to vector<1x1x1xf32>
    %866 = vector.extract %865[0, 0, 0] : f32 from vector<1x1x1xf32>
    %867 = arith.addf %651, %866 : f32
    %868 = arith.extui %850 : vector<16x16xi1> to vector<16x16xi32>
    %869 = arith.sitofp %868 : vector<16x16xi32> to vector<16x16xf32>
    %870 = vector.shape_cast %869 : vector<16x16xf32> to vector<1x16x16xf32>
    %cst_330 = arith.constant dense<0.000000e+00> : vector<1xf32>
    %871 = vector.multi_reduction <add>, %870, %cst_330 [1, 2] : vector<1x16x16xf32> to vector<1xf32>
    %872 = vector.shape_cast %871 : vector<1xf32> to vector<1x1x1xf32>
    %873 = vector.extract %872[0, 0, 0] : f32 from vector<1x1x1xf32>
    %874 = arith.extui %853 : vector<16x16xi1> to vector<16x16xi32>
    %875 = arith.sitofp %874 : vector<16x16xi32> to vector<16x16xf32>
    %876 = vector.shape_cast %875 : vector<16x16xf32> to vector<1x16x16xf32>
    %cst_331 = arith.constant dense<0.000000e+00> : vector<1xf32>
    %877 = vector.multi_reduction <add>, %876, %cst_331 [1, 2] : vector<1x16x16xf32> to vector<1xf32>
    %878 = vector.shape_cast %877 : vector<1xf32> to vector<1x1x1xf32>
    %879 = vector.extract %878[0, 0, 0] : f32 from vector<1x1x1xf32>
    %880 = arith.addf %873, %879 : f32
    %881 = arith.fptosi %880 : f32 to i32
    %882 = arith.addi %666, %881 : i32
    %c3_i32_332 = arith.constant 3 : i32
    %c0_333 = arith.constant 0 : index
    %883 = arith.index_cast %c3_i32_332 : i32 to index
    %c0_334 = arith.constant 0 : index
    %c0_335 = arith.constant 0 : index
    %884 = vector.load %arg2[%c0_333, %883, %c0_334, %c0_335] : memref<1x4x16x16xf32, #tpu.memory_space<vmem>>, vector<1x1x16x16xf32>
    %885 = vector.shape_cast %884 : vector<1x1x16x16xf32> to vector<16x16xf32>
    %c0_336 = arith.constant 0 : index
    %886 = arith.index_cast %c3_i32_332 : i32 to index
    %c0_337 = arith.constant 0 : index
    %c0_338 = arith.constant 0 : index
    %887 = vector.load %arg3[%c0_336, %886, %c0_337, %c0_338] : memref<1x4x8x16xf32, #tpu.memory_space<vmem>>, vector<1x1x1x16xf32>
    %888 = vector.shape_cast %887 : vector<1x1x1x16xf32> to vector<1x16xf32>
    %c0_339 = arith.constant 0 : index
    %889 = arith.index_cast %c3_i32_332 : i32 to index
    %c7_340 = arith.constant 7 : index
    %c0_341 = arith.constant 0 : index
    %890 = vector.load %arg3[%c0_339, %889, %c7_340, %c0_341] : memref<1x4x8x16xf32, #tpu.memory_space<vmem>>, vector<1x1x1x16xf32>
    %891 = vector.shape_cast %890 : vector<1x1x1x16xf32> to vector<1x16xf32>
    %892 = arith.select %0, %888, %891 : vector<1x16xf32>
    %c0_342 = arith.constant 0 : index
    %893 = arith.index_cast %c3_i32_332 : i32 to index
    %c7_343 = arith.constant 7 : index
    %c0_344 = arith.constant 0 : index
    %894 = vector.load %arg4[%c0_342, %893, %c7_343, %c0_344] : memref<1x4x8x16xf32, #tpu.memory_space<vmem>>, vector<1x1x1x16xf32>
    %895 = vector.shape_cast %894 : vector<1x1x1x16xf32> to vector<1x16xf32>
    %c0_345 = arith.constant 0 : index
    %896 = arith.index_cast %c3_i32_332 : i32 to index
    %c0_346 = arith.constant 0 : index
    %c0_347 = arith.constant 0 : index
    %897 = vector.load %arg4[%c0_345, %896, %c0_346, %c0_347] : memref<1x4x8x16xf32, #tpu.memory_space<vmem>>, vector<1x1x1x16xf32>
    %898 = vector.shape_cast %897 : vector<1x1x1x16xf32> to vector<1x16xf32>
    %899 = arith.select %1, %895, %898 : vector<1x16xf32>
    %900 = arith.subf %885, %110 : vector<16x16xf32>
    %901 = math.exp %900 : vector<16x16xf32>
    %902 = arith.mulf %901, %224 : vector<16x16xf32>
    %903 = arith.subf %892, %111 : vector<1x16xf32>
    %904 = math.exp %903 : vector<1x16xf32>
    %905 = arith.mulf %904, %229 : vector<1x16xf32>
    %906 = arith.subf %899, %112 : vector<1x16xf32>
    %907 = math.exp %906 : vector<1x16xf32>
    %908 = arith.mulf %907, %234 : vector<1x16xf32>
    %909 = vector.broadcast %c3_i32_332 : i32 to vector<16x16xi32>
    %910 = arith.cmpi eq, %3, %909 : vector<16x16xi32>
    %911 = arith.andi %910, %5 : vector<16x16xi1>
    %912 = arith.extui %911 : vector<16x16xi1> to vector<16x16xi32>
    %913 = arith.sitofp %912 : vector<16x16xi32> to vector<16x16xf32>
    %914 = vector.broadcast %c3_i32_332 : i32 to vector<1x16xi32>
    %915 = arith.cmpi eq, %10, %914 : vector<1x16xi32>
    %916 = arith.andi %915, %17 : vector<1x16xi1>
    %917 = arith.extui %916 : vector<1x16xi1> to vector<1x16xi32>
    %918 = arith.sitofp %917 : vector<1x16xi32> to vector<1x16xf32>
    %919 = vector.broadcast %c3_i32_332 : i32 to vector<1x16xi32>
    %920 = arith.cmpi eq, %15, %919 : vector<1x16xi32>
    %921 = arith.andi %920, %19 : vector<1x16xi1>
    %922 = arith.extui %921 : vector<1x16xi1> to vector<1x16xi32>
    %923 = arith.sitofp %922 : vector<1x16xi32> to vector<1x16xf32>
    %c1_i32_348 = arith.constant 1 : i32
    %924 = tpu.dynamic_rotate %913 by %c1_i32_348 dim 0 : vector<16x16xf32>, i32 -> vector<16x16xf32>
    %925 = vector.shape_cast %23 : vector<16x1xi1> to vector<16x1xi1>
    %926 = vector.broadcast %925 : vector<16x1xi1> to vector<16x16xi1>
    %927 = vector.shape_cast %918 : vector<1x16xf32> to vector<1x16xf32>
    %928 = vector.broadcast %927 : vector<1x16xf32> to vector<16x16xf32>
    %929 = arith.select %926, %928, %924 : vector<16x16xi1>, vector<16x16xf32>
    %cst_349 = arith.constant 2.000000e+00 : f32
    %930 = vector.broadcast %cst_349 : f32 to vector<16x16xf32>
    %931 = arith.mulf %930, %913 : vector<16x16xf32>
    %932 = arith.addf %929, %931 : vector<16x16xf32>
    %c15_i32_350 = arith.constant 15 : i32
    %933 = tpu.dynamic_rotate %913 by %c15_i32_350 dim 0 : vector<16x16xf32>, i32 -> vector<16x16xf32>
    %934 = vector.shape_cast %25 : vector<16x1xi1> to vector<16x1xi1>
    %935 = vector.broadcast %934 : vector<16x1xi1> to vector<16x16xi1>
    %936 = vector.shape_cast %923 : vector<1x16xf32> to vector<1x16xf32>
    %937 = vector.broadcast %936 : vector<1x16xf32> to vector<16x16xf32>
    %938 = arith.select %935, %937, %933 : vector<16x16xi1>, vector<16x16xf32>
    %939 = arith.addf %932, %938 : vector<16x16xf32>
    %c15_i32_351 = arith.constant 15 : i32
    %940 = tpu.dynamic_rotate %939 by %c15_i32_351 dim 1 : vector<16x16xf32>, i32 -> vector<16x16xf32>
    %941 = vector.shape_cast %29 : vector<1x16xi1> to vector<1x16xi1>
    %942 = vector.broadcast %941 : vector<1x16xi1> to vector<16x16xi1>
    %943 = arith.select %942, %939, %940 : vector<16x16xi1>, vector<16x16xf32>
    %c1_i32_352 = arith.constant 1 : i32
    %944 = tpu.dynamic_rotate %939 by %c1_i32_352 dim 1 : vector<16x16xf32>, i32 -> vector<16x16xf32>
    %945 = vector.shape_cast %27 : vector<1x16xi1> to vector<1x16xi1>
    %946 = vector.broadcast %945 : vector<1x16xi1> to vector<16x16xi1>
    %947 = arith.select %946, %939, %944 : vector<16x16xi1>, vector<16x16xf32>
    %948 = arith.subf %943, %947 : vector<16x16xf32>
    %cst_353 = arith.constant 5.000000e-01 : f32
    %949 = vector.broadcast %cst_353 : f32 to vector<16x16xf32>
    %950 = arith.mulf %949, %948 : vector<16x16xf32>
    %c1_i32_354 = arith.constant 1 : i32
    %951 = tpu.dynamic_rotate %913 by %c1_i32_354 dim 1 : vector<16x16xf32>, i32 -> vector<16x16xf32>
    %952 = vector.shape_cast %27 : vector<1x16xi1> to vector<1x16xi1>
    %953 = vector.broadcast %952 : vector<1x16xi1> to vector<16x16xi1>
    %954 = arith.select %953, %913, %951 : vector<16x16xi1>, vector<16x16xf32>
    %cst_355 = arith.constant 2.000000e+00 : f32
    %955 = vector.broadcast %cst_355 : f32 to vector<16x16xf32>
    %956 = arith.mulf %955, %913 : vector<16x16xf32>
    %957 = arith.addf %954, %956 : vector<16x16xf32>
    %c15_i32_356 = arith.constant 15 : i32
    %958 = tpu.dynamic_rotate %913 by %c15_i32_356 dim 1 : vector<16x16xf32>, i32 -> vector<16x16xf32>
    %959 = vector.shape_cast %29 : vector<1x16xi1> to vector<1x16xi1>
    %960 = vector.broadcast %959 : vector<1x16xi1> to vector<16x16xi1>
    %961 = arith.select %960, %913, %958 : vector<16x16xi1>, vector<16x16xf32>
    %962 = arith.addf %957, %961 : vector<16x16xf32>
    %c1_i32_357 = arith.constant 1 : i32
    %963 = tpu.dynamic_rotate %918 by %c1_i32_357 dim 1 : vector<1x16xf32>, i32 -> vector<1x16xf32>
    %964 = arith.select %27, %918, %963 : vector<1x16xi1>, vector<1x16xf32>
    %cst_358 = arith.constant 2.000000e+00 : f32
    %965 = vector.broadcast %cst_358 : f32 to vector<1x16xf32>
    %966 = arith.mulf %965, %918 : vector<1x16xf32>
    %967 = arith.addf %964, %966 : vector<1x16xf32>
    %c15_i32_359 = arith.constant 15 : i32
    %968 = tpu.dynamic_rotate %918 by %c15_i32_359 dim 1 : vector<1x16xf32>, i32 -> vector<1x16xf32>
    %969 = arith.select %29, %918, %968 : vector<1x16xi1>, vector<1x16xf32>
    %970 = arith.addf %967, %969 : vector<1x16xf32>
    %c1_i32_360 = arith.constant 1 : i32
    %971 = tpu.dynamic_rotate %923 by %c1_i32_360 dim 1 : vector<1x16xf32>, i32 -> vector<1x16xf32>
    %972 = arith.select %27, %923, %971 : vector<1x16xi1>, vector<1x16xf32>
    %cst_361 = arith.constant 2.000000e+00 : f32
    %973 = vector.broadcast %cst_361 : f32 to vector<1x16xf32>
    %974 = arith.mulf %973, %923 : vector<1x16xf32>
    %975 = arith.addf %972, %974 : vector<1x16xf32>
    %c15_i32_362 = arith.constant 15 : i32
    %976 = tpu.dynamic_rotate %923 by %c15_i32_362 dim 1 : vector<1x16xf32>, i32 -> vector<1x16xf32>
    %977 = arith.select %29, %923, %976 : vector<1x16xi1>, vector<1x16xf32>
    %978 = arith.addf %975, %977 : vector<1x16xf32>
    %c15_i32_363 = arith.constant 15 : i32
    %979 = tpu.dynamic_rotate %962 by %c15_i32_363 dim 0 : vector<16x16xf32>, i32 -> vector<16x16xf32>
    %980 = vector.shape_cast %25 : vector<16x1xi1> to vector<16x1xi1>
    %981 = vector.broadcast %980 : vector<16x1xi1> to vector<16x16xi1>
    %982 = vector.shape_cast %978 : vector<1x16xf32> to vector<1x16xf32>
    %983 = vector.broadcast %982 : vector<1x16xf32> to vector<16x16xf32>
    %984 = arith.select %981, %983, %979 : vector<16x16xi1>, vector<16x16xf32>
    %c1_i32_364 = arith.constant 1 : i32
    %985 = tpu.dynamic_rotate %962 by %c1_i32_364 dim 0 : vector<16x16xf32>, i32 -> vector<16x16xf32>
    %986 = vector.shape_cast %23 : vector<16x1xi1> to vector<16x1xi1>
    %987 = vector.broadcast %986 : vector<16x1xi1> to vector<16x16xi1>
    %988 = vector.shape_cast %970 : vector<1x16xf32> to vector<1x16xf32>
    %989 = vector.broadcast %988 : vector<1x16xf32> to vector<16x16xf32>
    %990 = arith.select %987, %989, %985 : vector<16x16xi1>, vector<16x16xf32>
    %991 = arith.subf %984, %990 : vector<16x16xf32>
    %cst_365 = arith.constant 5.000000e-01 : f32
    %992 = vector.broadcast %cst_365 : f32 to vector<16x16xf32>
    %993 = arith.mulf %992, %991 : vector<16x16xf32>
    %c1_i32_366 = arith.constant 1 : i32
    %994 = tpu.dynamic_rotate %902 by %c1_i32_366 dim 0 : vector<16x16xf32>, i32 -> vector<16x16xf32>
    %995 = vector.shape_cast %23 : vector<16x1xi1> to vector<16x1xi1>
    %996 = vector.broadcast %995 : vector<16x1xi1> to vector<16x16xi1>
    %997 = vector.shape_cast %905 : vector<1x16xf32> to vector<1x16xf32>
    %998 = vector.broadcast %997 : vector<1x16xf32> to vector<16x16xf32>
    %999 = arith.select %996, %998, %994 : vector<16x16xi1>, vector<16x16xf32>
    %cst_367 = arith.constant 2.000000e+00 : f32
    %1000 = vector.broadcast %cst_367 : f32 to vector<16x16xf32>
    %1001 = arith.mulf %1000, %902 : vector<16x16xf32>
    %1002 = arith.addf %999, %1001 : vector<16x16xf32>
    %c15_i32_368 = arith.constant 15 : i32
    %1003 = tpu.dynamic_rotate %902 by %c15_i32_368 dim 0 : vector<16x16xf32>, i32 -> vector<16x16xf32>
    %1004 = vector.shape_cast %25 : vector<16x1xi1> to vector<16x1xi1>
    %1005 = vector.broadcast %1004 : vector<16x1xi1> to vector<16x16xi1>
    %1006 = vector.shape_cast %908 : vector<1x16xf32> to vector<1x16xf32>
    %1007 = vector.broadcast %1006 : vector<1x16xf32> to vector<16x16xf32>
    %1008 = arith.select %1005, %1007, %1003 : vector<16x16xi1>, vector<16x16xf32>
    %1009 = arith.addf %1002, %1008 : vector<16x16xf32>
    %c15_i32_369 = arith.constant 15 : i32
    %1010 = tpu.dynamic_rotate %1009 by %c15_i32_369 dim 1 : vector<16x16xf32>, i32 -> vector<16x16xf32>
    %1011 = vector.shape_cast %29 : vector<1x16xi1> to vector<1x16xi1>
    %1012 = vector.broadcast %1011 : vector<1x16xi1> to vector<16x16xi1>
    %1013 = arith.select %1012, %1009, %1010 : vector<16x16xi1>, vector<16x16xf32>
    %c1_i32_370 = arith.constant 1 : i32
    %1014 = tpu.dynamic_rotate %1009 by %c1_i32_370 dim 1 : vector<16x16xf32>, i32 -> vector<16x16xf32>
    %1015 = vector.shape_cast %27 : vector<1x16xi1> to vector<1x16xi1>
    %1016 = vector.broadcast %1015 : vector<1x16xi1> to vector<16x16xi1>
    %1017 = arith.select %1016, %1009, %1014 : vector<16x16xi1>, vector<16x16xf32>
    %1018 = arith.subf %1013, %1017 : vector<16x16xf32>
    %cst_371 = arith.constant 5.000000e-01 : f32
    %1019 = vector.broadcast %cst_371 : f32 to vector<16x16xf32>
    %1020 = arith.mulf %1019, %1018 : vector<16x16xf32>
    %c1_i32_372 = arith.constant 1 : i32
    %1021 = tpu.dynamic_rotate %902 by %c1_i32_372 dim 1 : vector<16x16xf32>, i32 -> vector<16x16xf32>
    %1022 = vector.shape_cast %27 : vector<1x16xi1> to vector<1x16xi1>
    %1023 = vector.broadcast %1022 : vector<1x16xi1> to vector<16x16xi1>
    %1024 = arith.select %1023, %902, %1021 : vector<16x16xi1>, vector<16x16xf32>
    %cst_373 = arith.constant 2.000000e+00 : f32
    %1025 = vector.broadcast %cst_373 : f32 to vector<16x16xf32>
    %1026 = arith.mulf %1025, %902 : vector<16x16xf32>
    %1027 = arith.addf %1024, %1026 : vector<16x16xf32>
    %c15_i32_374 = arith.constant 15 : i32
    %1028 = tpu.dynamic_rotate %902 by %c15_i32_374 dim 1 : vector<16x16xf32>, i32 -> vector<16x16xf32>
    %1029 = vector.shape_cast %29 : vector<1x16xi1> to vector<1x16xi1>
    %1030 = vector.broadcast %1029 : vector<1x16xi1> to vector<16x16xi1>
    %1031 = arith.select %1030, %902, %1028 : vector<16x16xi1>, vector<16x16xf32>
    %1032 = arith.addf %1027, %1031 : vector<16x16xf32>
    %c1_i32_375 = arith.constant 1 : i32
    %1033 = tpu.dynamic_rotate %905 by %c1_i32_375 dim 1 : vector<1x16xf32>, i32 -> vector<1x16xf32>
    %1034 = arith.select %27, %905, %1033 : vector<1x16xi1>, vector<1x16xf32>
    %cst_376 = arith.constant 2.000000e+00 : f32
    %1035 = vector.broadcast %cst_376 : f32 to vector<1x16xf32>
    %1036 = arith.mulf %1035, %905 : vector<1x16xf32>
    %1037 = arith.addf %1034, %1036 : vector<1x16xf32>
    %c15_i32_377 = arith.constant 15 : i32
    %1038 = tpu.dynamic_rotate %905 by %c15_i32_377 dim 1 : vector<1x16xf32>, i32 -> vector<1x16xf32>
    %1039 = arith.select %29, %905, %1038 : vector<1x16xi1>, vector<1x16xf32>
    %1040 = arith.addf %1037, %1039 : vector<1x16xf32>
    %c1_i32_378 = arith.constant 1 : i32
    %1041 = tpu.dynamic_rotate %908 by %c1_i32_378 dim 1 : vector<1x16xf32>, i32 -> vector<1x16xf32>
    %1042 = arith.select %27, %908, %1041 : vector<1x16xi1>, vector<1x16xf32>
    %cst_379 = arith.constant 2.000000e+00 : f32
    %1043 = vector.broadcast %cst_379 : f32 to vector<1x16xf32>
    %1044 = arith.mulf %1043, %908 : vector<1x16xf32>
    %1045 = arith.addf %1042, %1044 : vector<1x16xf32>
    %c15_i32_380 = arith.constant 15 : i32
    %1046 = tpu.dynamic_rotate %908 by %c15_i32_380 dim 1 : vector<1x16xf32>, i32 -> vector<1x16xf32>
    %1047 = arith.select %29, %908, %1046 : vector<1x16xi1>, vector<1x16xf32>
    %1048 = arith.addf %1045, %1047 : vector<1x16xf32>
    %c15_i32_381 = arith.constant 15 : i32
    %1049 = tpu.dynamic_rotate %1032 by %c15_i32_381 dim 0 : vector<16x16xf32>, i32 -> vector<16x16xf32>
    %1050 = vector.shape_cast %25 : vector<16x1xi1> to vector<16x1xi1>
    %1051 = vector.broadcast %1050 : vector<16x1xi1> to vector<16x16xi1>
    %1052 = vector.shape_cast %1048 : vector<1x16xf32> to vector<1x16xf32>
    %1053 = vector.broadcast %1052 : vector<1x16xf32> to vector<16x16xf32>
    %1054 = arith.select %1051, %1053, %1049 : vector<16x16xi1>, vector<16x16xf32>
    %c1_i32_382 = arith.constant 1 : i32
    %1055 = tpu.dynamic_rotate %1032 by %c1_i32_382 dim 0 : vector<16x16xf32>, i32 -> vector<16x16xf32>
    %1056 = vector.shape_cast %23 : vector<16x1xi1> to vector<16x1xi1>
    %1057 = vector.broadcast %1056 : vector<16x1xi1> to vector<16x16xi1>
    %1058 = vector.shape_cast %1040 : vector<1x16xf32> to vector<1x16xf32>
    %1059 = vector.broadcast %1058 : vector<1x16xf32> to vector<16x16xf32>
    %1060 = arith.select %1057, %1059, %1055 : vector<16x16xi1>, vector<16x16xf32>
    %1061 = arith.subf %1054, %1060 : vector<16x16xf32>
    %cst_383 = arith.constant 5.000000e-01 : f32
    %1062 = vector.broadcast %cst_383 : f32 to vector<16x16xf32>
    %1063 = arith.mulf %1062, %1061 : vector<16x16xf32>
    %cst_384 = arith.constant 0.000000e+00 : f32
    %1064 = vector.broadcast %cst_384 : f32 to vector<16x16xf32>
    %1065 = arith.cmpf one, %950, %1064 : vector<16x16xf32>
    %1066 = arith.andi %1065, %5 : vector<16x16xi1>
    %cst_385 = arith.constant 0.000000e+00 : f32
    %1067 = vector.broadcast %cst_385 : f32 to vector<16x16xf32>
    %1068 = arith.cmpf one, %993, %1067 : vector<16x16xf32>
    %1069 = arith.andi %1068, %5 : vector<16x16xi1>
    %1070 = arith.subf %950, %1020 : vector<16x16xf32>
    %1071 = arith.subf %993, %1063 : vector<16x16xf32>
    %1072 = arith.mulf %1070, %1070 : vector<16x16xf32>
    %cst_386 = arith.constant 0.000000e+00 : f32
    %1073 = vector.broadcast %cst_386 : f32 to vector<16x16xf32>
    %1074 = arith.select %1066, %1072, %1073 : vector<16x16xi1>, vector<16x16xf32>
    %1075 = arith.mulf %1071, %1071 : vector<16x16xf32>
    %cst_387 = arith.constant 0.000000e+00 : f32
    %1076 = vector.broadcast %cst_387 : f32 to vector<16x16xf32>
    %1077 = arith.select %1069, %1075, %1076 : vector<16x16xi1>, vector<16x16xf32>
    %1078 = arith.addf %1074, %1077 : vector<16x16xf32>
    %1079 = vector.shape_cast %1078 : vector<16x16xf32> to vector<1x16x16xf32>
    %cst_388 = arith.constant dense<0.000000e+00> : vector<1xf32>
    %1080 = vector.multi_reduction <add>, %1079, %cst_388 [1, 2] : vector<1x16x16xf32> to vector<1xf32>
    %1081 = vector.shape_cast %1080 : vector<1xf32> to vector<1x1x1xf32>
    %1082 = vector.extract %1081[0, 0, 0] : f32 from vector<1x1x1xf32>
    %1083 = arith.addf %867, %1082 : f32
    %1084 = arith.extui %1066 : vector<16x16xi1> to vector<16x16xi32>
    %1085 = arith.sitofp %1084 : vector<16x16xi32> to vector<16x16xf32>
    %1086 = vector.shape_cast %1085 : vector<16x16xf32> to vector<1x16x16xf32>
    %cst_389 = arith.constant dense<0.000000e+00> : vector<1xf32>
    %1087 = vector.multi_reduction <add>, %1086, %cst_389 [1, 2] : vector<1x16x16xf32> to vector<1xf32>
    %1088 = vector.shape_cast %1087 : vector<1xf32> to vector<1x1x1xf32>
    %1089 = vector.extract %1088[0, 0, 0] : f32 from vector<1x1x1xf32>
    %1090 = arith.extui %1069 : vector<16x16xi1> to vector<16x16xi32>
    %1091 = arith.sitofp %1090 : vector<16x16xi32> to vector<16x16xf32>
    %1092 = vector.shape_cast %1091 : vector<16x16xf32> to vector<1x16x16xf32>
    %cst_390 = arith.constant dense<0.000000e+00> : vector<1xf32>
    %1093 = vector.multi_reduction <add>, %1092, %cst_390 [1, 2] : vector<1x16x16xf32> to vector<1xf32>
    %1094 = vector.shape_cast %1093 : vector<1xf32> to vector<1x1x1xf32>
    %1095 = vector.extract %1094[0, 0, 0] : f32 from vector<1x1x1xf32>
    %1096 = arith.addf %1089, %1095 : f32
    %1097 = arith.fptosi %1096 : f32 to i32
    %1098 = arith.addi %882, %1097 : i32
    %c4_i32_391 = arith.constant 4 : i32
    %1099 = vector.broadcast %1083 : f32 to vector<1x1x1x1xf32>
    %c0_392 = arith.constant 0 : index
    %c0_393 = arith.constant 0 : index
    %c0_394 = arith.constant 0 : index
    %c0_395 = arith.constant 0 : index
    %1100 = vector.load %arg8[%c0_392, %c0_393, %c0_394, %c0_395] : memref<1x1x1x1xf32, #tpu.memory_space<vmem>>, vector<1x1x1x1xf32>
    tpu.vector_store %arg8[%c0_392, %c0_393, %c0_394, %c0_395], %1099 {strides = array<i32>} : memref<1x1x1x1xf32, #tpu.memory_space<vmem>>, vector<1x1x1x1xf32>,
    %1101 = vector.broadcast %1098 : i32 to vector<1x1x1x1xi32>
    %c0_396 = arith.constant 0 : index
    %c0_397 = arith.constant 0 : index
    %c0_398 = arith.constant 0 : index
    %c0_399 = arith.constant 0 : index
    %1102 = vector.load %arg9[%c0_396, %c0_397, %c0_398, %c0_399] : memref<1x1x1x1xi32, #tpu.memory_space<vmem>>, vector<1x1x1x1xi32>
    tpu.vector_store %arg9[%c0_396, %c0_397, %c0_398, %c0_399], %1101 {strides = array<i32>} : memref<1x1x1x1xi32, #tpu.memory_space<vmem>>, vector<1x1x1x1xi32>,
    return
  }
  func.func @transform_0(%arg0: i32, %arg1: i32) -> (i32, i32, i32, i32) {
    %c0_i32 = arith.constant 0 : i32
    %c0_i32_0 = arith.constant 0 : i32
    %c0_i32_1 = arith.constant 0 : i32
    return %arg0, %c0_i32, %arg1, %c0_i32_0 : i32, i32, i32, i32
  }
  func.func @transform_1(%arg0: i32, %arg1: i32) -> (i32, i32, i32, i32) {
    %c2_i32 = arith.constant 2 : i32
    %0 = arith.muli %arg1, %c2_i32 : i32
    %c1_i32 = arith.constant 1 : i32
    %1 = arith.subi %0, %c1_i32 : i32
    %c0_i32 = arith.constant 0 : i32
    %2 = arith.maxsi %1, %c0_i32 : i32
    %c0_i32_0 = arith.constant 0 : i32
    %c0_i32_1 = arith.constant 0 : i32
    %c0_i32_2 = arith.constant 0 : i32
    return %arg0, %c0_i32_0, %2, %c0_i32_1 : i32, i32, i32, i32
  }
  func.func @transform_2(%arg0: i32, %arg1: i32) -> (i32, i32, i32, i32) {
    %c1_i32 = arith.constant 1 : i32
    %0 = arith.addi %arg1, %c1_i32 : i32
    %c2_i32 = arith.constant 2 : i32
    %1 = arith.muli %0, %c2_i32 : i32
    %c1_i32_0 = arith.constant 1 : i32
    %2 = arith.minsi %1, %c1_i32_0 : i32
    %c0_i32 = arith.constant 0 : i32
    %c0_i32_1 = arith.constant 0 : i32
    %c0_i32_2 = arith.constant 0 : i32
    return %arg0, %c0_i32, %2, %c0_i32_1 : i32, i32, i32, i32
  }
  func.func @transform_3(%arg0: i32, %arg1: i32) -> (i32, i32, i32) {
    %c0_i32 = arith.constant 0 : i32
    %c0_i32_0 = arith.constant 0 : i32
    return %arg0, %arg1, %c0_i32 : i32, i32, i32
  }
  func.func @transform_4(%arg0: i32, %arg1: i32) -> (i32, i32, i32) {
    %c2_i32 = arith.constant 2 : i32
    %0 = arith.muli %arg1, %c2_i32 : i32
    %c1_i32 = arith.constant 1 : i32
    %1 = arith.subi %0, %c1_i32 : i32
    %c0_i32 = arith.constant 0 : i32
    %2 = arith.maxsi %1, %c0_i32 : i32
    %c0_i32_0 = arith.constant 0 : i32
    %c0_i32_1 = arith.constant 0 : i32
    return %arg0, %2, %c0_i32_0 : i32, i32, i32
  }
  func.func @transform_5(%arg0: i32, %arg1: i32) -> (i32, i32, i32) {
    %c1_i32 = arith.constant 1 : i32
    %0 = arith.addi %arg1, %c1_i32 : i32
    %c2_i32 = arith.constant 2 : i32
    %1 = arith.muli %0, %c2_i32 : i32
    %c1_i32_0 = arith.constant 1 : i32
    %2 = arith.minsi %1, %c1_i32_0 : i32
    %c0_i32 = arith.constant 0 : i32
    %c0_i32_1 = arith.constant 0 : i32
    return %arg0, %2, %c0_i32 : i32, i32, i32
  }
  func.func @transform_6(%arg0: i32, %arg1: i32) -> (i32, i32, i32, i32) {
    %c0_i32 = arith.constant 0 : i32
    %c0_i32_0 = arith.constant 0 : i32
    %c0_i32_1 = arith.constant 0 : i32
    return %arg0, %arg1, %c0_i32, %c0_i32_0 : i32, i32, i32, i32
  }
  func.func @transform_7(%arg0: i32, %arg1: i32) -> (i32, i32, i32, i32) {
    %c0_i32 = arith.constant 0 : i32
    %c0_i32_0 = arith.constant 0 : i32
    %c0_i32_1 = arith.constant 0 : i32
    return %arg0, %arg1, %c0_i32, %c0_i32_0 : i32, i32, i32, i32
  }
}

</mosaic_0001>

<llo_original>
// kernel: tpu_custom_call.1
$region0: #{tpu_custom_call.1}
  #allocation0 [shape = 'u32[]', space=smem, size = 0x4, offset = 0x4, fixed_abs, tag = 'smem constant byte address 0x4 - core index']
  #allocation1 [shape = 'u32[144,128]{1,0:T(1,128)}', space=vmem, size = 0x12000, scoped, tag = 'internal scratch']
  %s0 = inlined_call_operand.hbm [shape: f32[2,4,16,16], index: 0, kind: input, shape index: {}]
  %s1 = inlined_call_operand.hbm [shape: f32[2,4,16,16], index: 1, kind: input, shape index: {}]
  %s2 = inlined_call_operand.hbm [shape: f32[2,4,16,16], index: 2, kind: input, shape index: {}]
  %s3 = inlined_call_operand.hbm [shape: s32[2,16,16], index: 3, kind: input, shape index: {}]
  %s4 = inlined_call_operand.hbm [shape: s32[2,16,16], index: 4, kind: input, shape index: {}]
  %s5 = inlined_call_operand.hbm [shape: s32[2,16,16], index: 5, kind: input, shape index: {}]
  %s6 = inlined_call_operand.vmem [shape: f32[2,1,1,1], index: 6, kind: output, shape index: {0}]
  %s7 = inlined_call_operand.vmem [shape: s32[2,1,1,1], index: 7, kind: output, shape index: {1}]
  %8 = xla_tuple %s6, %s7
  %s9 = sld [smem:[#allocation0]]
  $region89: #{tpu_custom_call.1} parent=0
    _
  %s11 = ssub.s32 1, %s9
  %s12 = scalar_select 0, %s11, %s9
  $region1: #{tpu_custom_call.1} parent=0
    #allocation2 [shape = 'u8[65536]{0}', space=vmem, size = 0x10000, scoped, tag = 'input window, operand 0']
    #allocation3 [shape = 's32[2]{0}', space=sflag, size = 0x8, scoped, tag = 'scoped memory for tpu_custom_call.1']
    #allocation4 [shape = 'u8[32768]{0}', space=vmem, size = 0x8000, scoped, tag = 'input window, operand 1']
    #allocation5 [shape = 's32[2]{0}', space=sflag, size = 0x8, scoped, tag = 'scoped memory for tpu_custom_call.1']
    #allocation6 [shape = 'u8[32768]{0}', space=vmem, size = 0x8000, scoped, tag = 'input window, operand 2']
    #allocation7 [shape = 'u8[16384]{0}', space=vmem, size = 0x4000, scoped, tag = 'input window, operand 3']
    #allocation8 [shape = 's32[2]{0}', space=sflag, size = 0x8, scoped, tag = 'scoped memory for tpu_custom_call.1']
    #allocation9 [shape = 'u8[8192]{0}', space=vmem, size = 0x2000, scoped, tag = 'input window, operand 4']
    #allocation10 [shape = 'u8[8192]{0}', space=vmem, size = 0x2000, scoped, tag = 'input window, operand 5']
    #allocation11 [shape = 's32[2]{0}', space=sflag, size = 0x8, scoped, tag = 'scoped memory for tpu_custom_call.1']
    %13 = vsyncpa [#allocation3], 0
    %s14 = scalar_lea.sflag [#allocation3], 1
    %15 = vsyncpa %s14, 0
    %16 = vsyncpa [#allocation5], 0
    %s17 = scalar_lea.sflag [#allocation5], 1
    %18 = vsyncpa %s17, 0
    %19 = vsyncpa [#allocation8], 0
    %s20 = scalar_lea.sflag [#allocation8], 1
    %21 = vsyncpa %s20, 0
    %22 = vsyncpa [#allocation11], 0
    %s23 = scalar_lea.sflag [#allocation11], 1
    %24 = vsyncpa %s23, 0
    loop: start=0, step=1, limit=4
    $region2: #{tpu_custom_call.1} parent=1 // loop_pre_header
      _
    $region3: #{tpu_custom_call.1} parent=1 // loop_header
      %s26 = sphi 0, %s30
      %p27 = scmp.ge.s32.totalorder %s26, 4
      %s33 = sphi 0, %s45
      %s34 = sphi 0, %s41
      %s35 = sphi 0, %s33
      %s36 = sphi 0, %s34
      %s37 = sphi 0, %s35
      %s38 = sphi 0, %s36
      %s50 = sphi 0, %s52
      %s53 = sphi 0, %s50
      %s54 = sphi 0, %s53
      %s70 = sphi 0, %s54
      %s86 = sphi 0, %s88
      %s89 = sphi 0, %s86
      %s90 = sphi 0, %s89
      %s106 = sphi 0, %s90
      %s122 = sphi 0, %s124
      %s125 = sphi 0, %s122
      %s126 = sphi 0, %s125
      %s142 = sphi 0, %s126
      %s150 = sphi 0, %s152
      %s153 = sphi 0, %s150
      %s154 = sphi 0, %s153
      %s170 = sphi 0, %s154
      %s186 = sphi 0, %s188
      %s189 = sphi 0, %s186
      %s190 = sphi 0, %s189
      %s206 = sphi 0, %s190
      %s222 = sphi 0, %s224
      %s225 = sphi 0, %s222
      %s226 = sphi 0, %s225
      %s242 = sphi 0, %s226
      %s250 = sphi 0, %s252
      %s253 = sphi 0, %s250
      %s254 = sphi 0, %s253
      %s270 = sphi 0, %s254
      %s278 = sphi 0, %s280
      %s281 = sphi 0, %s278
      %s282 = sphi 0, %s281
      %s298 = sphi 0, %s282
    $region4: #{tpu_custom_call.1} parent=1 // loop_header_branch
      %29 = sbr.rel (%p27) target = $region8
    $region5: #{tpu_custom_call.1} parent=1 // loop_body
      %s31 = ssub.s32 %s26, 1
      %s32 = ssub.s32 %s26, 2
      %s39 = sadd.s32 1, %s34
      %p40 = scmp.ge.s32.totalorder %s39, 1
      %s41 = scalar_select %p40, 0, %s39
      %s42 = sadd.s32 1, %s33
      %s43 = scalar_select %p40, %s42, %s33
      %p44 = scmp.ge.s32.totalorder %s43, 2
      %s45 = scalar_select %p44, 0, %s43
      %s46 = ssub.s32 %s33, %s45
      %s47 = ssub.s32 %s34, %s41
      %s48 = sor.u32 %s46, %s47
      %p49 = scmp.eq.s32.totalorder %s48, 0
      %s51 = sadd.s32 %s50, 1
      %s52 = scalar_select %p49, %s50, %s51
      %p55 = pneg %p49
      %p56 = scmp.eq.s32.totalorder %s26, 1
      %p57 = por %p55, %p56
      %p58 = scmp.ne.s32.totalorder %s50, %s53
      %p59 = scmp.eq.s32.totalorder %s26, 0
      %p60 = por %p58, %p59
      %p61 = scmp.ne.s32.totalorder %s50, %s53
      %p62 = scmp.eq.s32.totalorder %s31, 1
      %p63 = por %p61, %p62
      %p64 = scmp.ne.s32.totalorder %s53, %s54
      %p65 = scmp.eq.s32.totalorder %s31, 0
      %p66 = por %p64, %p65
      %p67 = scmp.ne.s32.totalorder %s53, %s54
      %p68 = scmp.eq.s32.totalorder %s32, 1
      %p69 = por %p67, %p68
      %p71 = scmp.ne.s32.totalorder %s54, %s70
      %p72 = scmp.eq.s32.totalorder %s32, 0
      %p73 = por %p71, %p72
      %s74 = smul.u32 %s34, 2
      %s75 = ssub.s32 %s74, 1
      %p76 = scmp.gt.s32.totalorder %s75, 0
      %s77 = scalar_select %p76, %s75, 0
      %s78 = smul.u32 %s41, 2
      %s79 = ssub.s32 %s78, 1
      %p80 = scmp.gt.s32.totalorder %s79, 0
      %s81 = scalar_select %p80, %s79, 0
      %s82 = ssub.s32 %s33, %s45
      %s83 = ssub.s32 %s77, %s81
      %s84 = sor.u32 %s82, %s83
      %p85 = scmp.eq.s32.totalorder %s84, 0
      %s87 = sadd.s32 %s86, 1
      %s88 = scalar_select %p85, %s86, %s87
      %p91 = pneg %p85
      %p92 = scmp.eq.s32.totalorder %s26, 1
      %p93 = por %p91, %p92
      %p94 = scmp.ne.s32.totalorder %s86, %s89
      %p95 = scmp.eq.s32.totalorder %s26, 0
      %p96 = por %p94, %p95
      %p97 = scmp.ne.s32.totalorder %s86, %s89
      %p98 = scmp.eq.s32.totalorder %s31, 1
      %p99 = por %p97, %p98
      %p100 = scmp.ne.s32.totalorder %s89, %s90
      %p101 = scmp.eq.s32.totalorder %s31, 0
      %p102 = por %p100, %p101
      %p103 = scmp.ne.s32.totalorder %s89, %s90
      %p104 = scmp.eq.s32.totalorder %s32, 1
      %p105 = por %p103, %p104
      %p107 = scmp.ne.s32.totalorder %s90, %s106
      %p108 = scmp.eq.s32.totalorder %s32, 0
      %p109 = por %p107, %p108
      %s110 = sadd.s32 %s34, 1
      %s111 = smul.u32 %s110, 2
      %p112 = scmp.lt.s32.totalorder %s111, 1
      %s113 = scalar_select %p112, %s111, 1
      %s114 = sadd.s32 %s41, 1
      %s115 = smul.u32 %s114, 2
      %p116 = scmp.lt.s32.totalorder %s115, 1
      %s117 = scalar_select %p116, %s115, 1
      %s118 = ssub.s32 %s33, %s45
      %s119 = ssub.s32 %s113, %s117
      %s120 = sor.u32 %s118, %s119
      %p121 = scmp.eq.s32.totalorder %s120, 0
      %s123 = sadd.s32 %s122, 1
      %s124 = scalar_select %p121, %s122, %s123
      %p127 = pneg %p121
      %p128 = scmp.eq.s32.totalorder %s26, 1
      %p129 = por %p127, %p128
      %p130 = scmp.ne.s32.totalorder %s122, %s125
      %p131 = scmp.eq.s32.totalorder %s26, 0
      %p132 = por %p130, %p131
      %p133 = scmp.ne.s32.totalorder %s122, %s125
      %p134 = scmp.eq.s32.totalorder %s31, 1
      %p135 = por %p133, %p134
      %p136 = scmp.ne.s32.totalorder %s125, %s126
      %p137 = scmp.eq.s32.totalorder %s31, 0
      %p138 = por %p136, %p137
      %p139 = scmp.ne.s32.totalorder %s125, %s126
      %p140 = scmp.eq.s32.totalorder %s32, 1
      %p141 = por %p139, %p140
      %p143 = scmp.ne.s32.totalorder %s126, %s142
      %p144 = scmp.eq.s32.totalorder %s32, 0
      %p145 = por %p143, %p144
      %s146 = ssub.s32 %s33, %s45
      %s147 = ssub.s32 %s34, %s41
      %s148 = sor.u32 %s146, %s147
      %p149 = scmp.eq.s32.totalorder %s148, 0
      %s151 = sadd.s32 %s150, 1
      %s152 = scalar_select %p149, %s150, %s151
      %p155 = pneg %p149
      %p156 = scmp.eq.s32.totalorder %s26, 1
      %p157 = por %p155, %p156
      %p158 = scmp.ne.s32.totalorder %s150, %s153
      %p159 = scmp.eq.s32.totalorder %s26, 0
      %p160 = por %p158, %p159
      %p161 = scmp.ne.s32.totalorder %s150, %s153
      %p162 = scmp.eq.s32.totalorder %s31, 1
      %p163 = por %p161, %p162
      %p164 = scmp.ne.s32.totalorder %s153, %s154
      %p165 = scmp.eq.s32.totalorder %s31, 0
      %p166 = por %p164, %p165
      %p167 = scmp.ne.s32.totalorder %s153, %s154
      %p168 = scmp.eq.s32.totalorder %s32, 1
      %p169 = por %p167, %p168
      %p171 = scmp.ne.s32.totalorder %s154, %s170
      %p172 = scmp.eq.s32.totalorder %s32, 0
      %p173 = por %p171, %p172
      %s174 = smul.u32 %s34, 2
      %s175 = ssub.s32 %s174, 1
      %p176 = scmp.gt.s32.totalorder %s175, 0
      %s177 = scalar_select %p176, %s175, 0
      %s178 = smul.u32 %s41, 2
      %s179 = ssub.s32 %s178, 1
      %p180 = scmp.gt.s32.totalorder %s179, 0
      %s181 = scalar_select %p180, %s179, 0
      %s182 = ssub.s32 %s33, %s45
      %s183 = ssub.s32 %s177, %s181
      %s184 = sor.u32 %s182, %s183
      %p185 = scmp.eq.s32.totalorder %s184, 0
      %s187 = sadd.s32 %s186, 1
      %s188 = scalar_select %p185, %s186, %s187
      %p191 = pneg %p185
      %p192 = scmp.eq.s32.totalorder %s26, 1
      %p193 = por %p191, %p192
      %p194 = scmp.ne.s32.totalorder %s186, %s189
      %p195 = scmp.eq.s32.totalorder %s26, 0
      %p196 = por %p194, %p195
      %p197 = scmp.ne.s32.totalorder %s186, %s189
      %p198 = scmp.eq.s32.totalorder %s31, 1
      %p199 = por %p197, %p198
      %p200 = scmp.ne.s32.totalorder %s189, %s190
      %p201 = scmp.eq.s32.totalorder %s31, 0
      %p202 = por %p200, %p201
      %p203 = scmp.ne.s32.totalorder %s189, %s190
      %p204 = scmp.eq.s32.totalorder %s32, 1
      %p205 = por %p203, %p204
      %p207 = scmp.ne.s32.totalorder %s190, %s206
      %p208 = scmp.eq.s32.totalorder %s32, 0
      %p209 = por %p207, %p208
      %s210 = sadd.s32 %s34, 1
      %s211 = smul.u32 %s210, 2
      %p212 = scmp.lt.s32.totalorder %s211, 1
      %s213 = scalar_select %p212, %s211, 1
      %s214 = sadd.s32 %s41, 1
      %s215 = smul.u32 %s214, 2
      %p216 = scmp.lt.s32.totalorder %s215, 1
      %s217 = scalar_select %p216, %s215, 1
      %s218 = ssub.s32 %s33, %s45
      %s219 = ssub.s32 %s213, %s217
      %s220 = sor.u32 %s218, %s219
      %p221 = scmp.eq.s32.totalorder %s220, 0
      %s223 = sadd.s32 %s222, 1
      %s224 = scalar_select %p221, %s222, %s223
      %p227 = pneg %p221
      %p228 = scmp.eq.s32.totalorder %s26, 1
      %p229 = por %p227, %p228
      %p230 = scmp.ne.s32.totalorder %s222, %s225
      %p231 = scmp.eq.s32.totalorder %s26, 0
      %p232 = por %p230, %p231
      %p233 = scmp.ne.s32.totalorder %s222, %s225
      %p234 = scmp.eq.s32.totalorder %s31, 1
      %p235 = por %p233, %p234
      %p236 = scmp.ne.s32.totalorder %s225, %s226
      %p237 = scmp.eq.s32.totalorder %s31, 0
      %p238 = por %p236, %p237
      %p239 = scmp.ne.s32.totalorder %s225, %s226
      %p240 = scmp.eq.s32.totalorder %s32, 1
      %p241 = por %p239, %p240
      %p243 = scmp.ne.s32.totalorder %s226, %s242
      %p244 = scmp.eq.s32.totalorder %s32, 0
      %p245 = por %p243, %p244
      %s246 = ssub.s32 %s33, %s45
      %s247 = ssub.s32 %s34, %s41
      %s248 = sor.u32 %s246, %s247
      %p249 = scmp.eq.s32.totalorder %s248, 0
      %s251 = sadd.s32 %s250, 1
      %s252 = scalar_select %p249, %s250, %s251
      %p255 = pneg %p249
      %p256 = scmp.eq.s32.totalorder %s26, 1
      %p257 = por %p255, %p256
      %p258 = scmp.ne.s32.totalorder %s250, %s253
      %p259 = scmp.eq.s32.totalorder %s26, 0
      %p260 = por %p258, %p259
      %p261 = scmp.ne.s32.totalorder %s250, %s253
      %p262 = scmp.eq.s32.totalorder %s31, 1
      %p263 = por %p261, %p262
      %p264 = scmp.ne.s32.totalorder %s253, %s254
      %p265 = scmp.eq.s32.totalorder %s31, 0
      %p266 = por %p264, %p265
      %p267 = scmp.ne.s32.totalorder %s253, %s254
      %p268 = scmp.eq.s32.totalorder %s32, 1
      %p269 = por %p267, %p268
      %p271 = scmp.ne.s32.totalorder %s254, %s270
      %p272 = scmp.eq.s32.totalorder %s32, 0
      %p273 = por %p271, %p272
      %s274 = ssub.s32 %s33, %s45
      %s275 = ssub.s32 %s34, %s41
      %s276 = sor.u32 %s274, %s275
      %p277 = scmp.eq.s32.totalorder %s276, 0
      %s279 = sadd.s32 %s278, 1
      %s280 = scalar_select %p277, %s278, %s279
      %p283 = pneg %p277
      %p284 = scmp.eq.s32.totalorder %s26, 1
      %p285 = por %p283, %p284
      %p286 = scmp.ne.s32.totalorder %s278, %s281
      %p287 = scmp.eq.s32.totalorder %s26, 0
      %p288 = por %p286, %p287
      %p289 = scmp.ne.s32.totalorder %s278, %s281
      %p290 = scmp.eq.s32.totalorder %s31, 1
      %p291 = por %p289, %p290
      %p292 = scmp.ne.s32.totalorder %s281, %s282
      %p293 = scmp.eq.s32.totalorder %s31, 0
      %p294 = por %p292, %p293
      %p295 = scmp.ne.s32.totalorder %s281, %s282
      %p296 = scmp.eq.s32.totalorder %s32, 1
      %p297 = por %p295, %p296
      %p299 = scmp.ne.s32.totalorder %s282, %s298
      %p300 = scmp.eq.s32.totalorder %s32, 0
      %p301 = por %p299, %p300
      %p302 = scmp.le.s32.totalorder 1, %s26
      %p303 = scmp.lt.s32.totalorder %s26, 3
      %p304 = pnand %p302, %p303
      %p305 = pneg %p304
      // Predicated region
      $region9: #{tpu_custom_call.1} parent=5 // pred_check
        _
      $region10: #{tpu_custom_call.1} parent=5 // pred_check_branch
        %307 = sbr.rel (%p304) target = $region12
      $region11: #{tpu_custom_call.1} parent=5 // pred_region
        %s308 = ssub.s32 %s26, 1
      $region12: #{tpu_custom_call.1} parent=5 // pred_fallthru
        _
      %p309 = scmp.lt.s32.totalorder %s26, 2
      // Predicated region
      $region13: #{tpu_custom_call.1} parent=5 // pred_check
        %p310 = pneg %p309
      $region14: #{tpu_custom_call.1} parent=5 // pred_check_branch
        %312 = sbr.rel (%p310) target = $region16
      $region15: #{tpu_custom_call.1} parent=5 // pred_region
        // Predicated region
        $region17: #{tpu_custom_call.1} parent=15 // pred_check
          %p313 = pneg %p60
        $region18: #{tpu_custom_call.1} parent=15 // pred_check_branch
          %315 = sbr.rel (%p313) target = $region20
        $region19: #{tpu_custom_call.1} parent=15 // pred_region
          %s316 = sand.u32 %s50, 1
          %s317 = scalar_lea.sflag [#allocation3], %s316
          %s318 = sand.u32 %s50, 1
          %s319 = smul.addr %s318, 64
          %s320 = scalar_lea.vmem [#allocation2], %s319
          %s321 = smul.u32 2, %s34
          %s323 = ssub.s32 1024, 1024
          %324 = vsyncadd %s317, %s323
          %s325 = smul.addr %s33, 8
          %s326 = sadd.s32 %s321, %s325
          %s327 = smul.addr %s326, 128
          %s328 = scalar_lea.hbm %s0, %s327
          %s329 = sshll.u32 %s320, 4
          %s330 = int_to_ptr.vmem [resolvable:$true] %s329
          %335 = dma.hbm_to_vmem [thread:$0]  %s328, 1024, %s330, %s317, 128, 128, 8
        $region20: #{tpu_custom_call.1} parent=15 // pred_fallthru
          _
        // Predicated region
        $region21: #{tpu_custom_call.1} parent=15 // pred_check
          %p336 = pneg %p96
        $region22: #{tpu_custom_call.1} parent=15 // pred_check_branch
          %338 = sbr.rel (%p336) target = $region24
        $region23: #{tpu_custom_call.1} parent=15 // pred_region
          %s339 = sand.u32 %s26, 1
          %s340 = scalar_lea.sflag [#allocation5], %s339
          %s341 = sand.u32 %s86, 1
          %s342 = smul.addr %s341, 32
          %s343 = scalar_lea.vmem [#allocation4], %s342
          %s344 = smul.u32 %s34, 2
          %s345 = ssub.s32 %s344, 1
          %p346 = scmp.gt.s32.totalorder %s345, 0
          %s347 = scalar_select %p346, %s345, 0
          %s349 = ssub.s32 512, 512
          %350 = vsyncadd %s340, %s349
          %s351 = smul.addr %s33, 8
          %s352 = sadd.s32 %s347, %s351
          %s353 = smul.addr %s352, 128
          %s354 = scalar_lea.hbm %s1, %s353
          %s355 = sshll.u32 %s343, 4
          %s356 = int_to_ptr.vmem [resolvable:$true] %s355
          %361 = dma.hbm_to_vmem [thread:$0]  %s354, 512, %s356, %s340, 256, 128, 8
        $region24: #{tpu_custom_call.1} parent=15 // pred_fallthru
          _
        // Predicated region
        $region25: #{tpu_custom_call.1} parent=15 // pred_check
          %p362 = pneg %p132
        $region26: #{tpu_custom_call.1} parent=15 // pred_check_branch
          %364 = sbr.rel (%p362) target = $region28
        $region27: #{tpu_custom_call.1} parent=15 // pred_region
          %s365 = sand.u32 %s26, 1
          %s366 = scalar_lea.sflag [#allocation5], %s365
          %s367 = sand.u32 %s122, 1
          %s368 = smul.addr %s367, 32
          %s369 = scalar_lea.vmem [#allocation6], %s368
          %s370 = sadd.s32 %s34, 1
          %s371 = smul.u32 %s370, 2
          %p372 = scmp.lt.s32.totalorder %s371, 1
          %s373 = scalar_select %p372, %s371, 1
          %s375 = ssub.s32 512, 512
          %376 = vsyncadd %s366, %s375
          %s377 = smul.addr %s33, 8
          %s378 = sadd.s32 %s373, %s377
          %s379 = smul.addr %s378, 128
          %s380 = scalar_lea.hbm %s2, %s379
          %s381 = sshll.u32 %s369, 4
          %s382 = int_to_ptr.vmem [resolvable:$true] %s381
          %387 = dma.hbm_to_vmem [thread:$0]  %s380, 512, %s382, %s366, 256, 128, 8
        $region28: #{tpu_custom_call.1} parent=15 // pred_fallthru
          _
        // Predicated region
        $region29: #{tpu_custom_call.1} parent=15 // pred_check
          %p388 = pneg %p160
        $region30: #{tpu_custom_call.1} parent=15 // pred_check_branch
          %390 = sbr.rel (%p388) target = $region32
        $region31: #{tpu_custom_call.1} parent=15 // pred_region
          %s391 = sand.u32 %s26, 1
          %s392 = scalar_lea.sflag [#allocation8], %s391
          %s393 = sand.u32 %s150, 1
          %s394 = smul.addr %s393, 16
          %s395 = scalar_lea.vmem [#allocation7], %s394
          %s396 = smul.u32 2, %s34
          %s398 = ssub.s32 256, 256
          %399 = vsyncadd %s392, %s398
          %s400 = smul.addr %s33, 2
          %s401 = sadd.s32 %s396, %s400
          %s402 = smul.addr %s401, 128
          %s403 = scalar_lea.hbm %s3, %s402
          %s404 = sshll.u32 %s395, 4
          %s405 = int_to_ptr.vmem [resolvable:$true] %s404
          %410 = dma.hbm_to_vmem [thread:$0]  %s403, 256, %s405, %s392, 128, 128, 8
        $region32: #{tpu_custom_call.1} parent=15 // pred_fallthru
          _
        // Predicated region
        $region33: #{tpu_custom_call.1} parent=15 // pred_check
          %p411 = pneg %p196
        $region34: #{tpu_custom_call.1} parent=15 // pred_check_branch
          %413 = sbr.rel (%p411) target = $region36
        $region35: #{tpu_custom_call.1} parent=15 // pred_region
          %s414 = sand.u32 %s26, 1
          %s415 = scalar_lea.sflag [#allocation8], %s414
          %s416 = sand.u32 %s186, 1
          %s417 = smul.addr %s416, 8
          %s418 = scalar_lea.vmem [#allocation9], %s417
          %s419 = smul.u32 %s34, 2
          %s420 = ssub.s32 %s419, 1
          %p421 = scmp.gt.s32.totalorder %s420, 0
          %s422 = scalar_select %p421, %s420, 0
          %s424 = ssub.s32 128, 128
          %425 = vsyncadd %s415, %s424
          %s426 = smul.addr %s33, 2
          %s427 = sadd.s32 %s422, %s426
          %s428 = smul.addr %s427, 128
          %s429 = scalar_lea.hbm %s4, %s428
          %s431 = sshll.u32 %s418, 4
          %s432 = int_to_ptr.vmem [resolvable:$true] %s431
          %434 = dma.hbm_to_vmem [thread:$0]  %s429, 128, %s432, %s415
        $region36: #{tpu_custom_call.1} parent=15 // pred_fallthru
          _
        // Predicated region
        $region37: #{tpu_custom_call.1} parent=15 // pred_check
          %p435 = pneg %p232
        $region38: #{tpu_custom_call.1} parent=15 // pred_check_branch
          %437 = sbr.rel (%p435) target = $region40
        $region39: #{tpu_custom_call.1} parent=15 // pred_region
          %s438 = sand.u32 %s222, 1
          %s439 = scalar_lea.sflag [#allocation11], %s438
          %s440 = sand.u32 %s222, 1
          %s441 = smul.addr %s440, 8
          %s442 = scalar_lea.vmem [#allocation10], %s441
          %s443 = sadd.s32 %s34, 1
          %s444 = smul.u32 %s443, 2
          %p445 = scmp.lt.s32.totalorder %s444, 1
          %s446 = scalar_select %p445, %s444, 1
          %s448 = ssub.s32 128, 128
          %449 = vsyncadd %s439, %s448
          %s450 = smul.addr %s33, 2
          %s451 = sadd.s32 %s446, %s450
          %s452 = smul.addr %s451, 128
          %s453 = scalar_lea.hbm %s5, %s452
          %s455 = sshll.u32 %s442, 4
          %s456 = int_to_ptr.vmem [resolvable:$true] %s455
          %458 = dma.hbm_to_vmem [thread:$0]  %s453, 128, %s456, %s439
        $region40: #{tpu_custom_call.1} parent=15 // pred_fallthru
          _
      $region16: #{tpu_custom_call.1} parent=5 // pred_fallthru
        _
      %p459 = scmp.le.s32.totalorder 1, %s26
      %p460 = scmp.lt.s32.totalorder %s26, 3
      %p461 = pnand %p459, %p460
      %p462 = pneg %p461
      // Predicated region
      $region41: #{tpu_custom_call.1} parent=5 // pred_check
        _
      $region42: #{tpu_custom_call.1} parent=5 // pred_check_branch
        %464 = sbr.rel (%p461) target = $region44
      $region43: #{tpu_custom_call.1} parent=5 // pred_region
        %s465 = ssub.s32 %s26, 1
        %s466 = sand.u32 %s53, 1
        %s467 = scalar_lea.sflag [#allocation3], %s466
        %s468 = sand.u32 %s53, 1
        %s469 = smul.addr %s468, 64
        %s470 = scalar_lea.vmem [#allocation2], %s469
        // Predicated region
        $region45: #{tpu_custom_call.1} parent=43 // pred_check
          %p471 = pneg %p66
        $region46: #{tpu_custom_call.1} parent=43 // pred_check_branch
          %473 = sbr.rel (%p471) target = $region48
        $region47: #{tpu_custom_call.1} parent=43 // pred_region
          %474 = dma.done %s467, 1024
        $region48: #{tpu_custom_call.1} parent=43 // pred_fallthru
          _
        %s475 = sand.u32 %s31, 1
        %s476 = scalar_lea.sflag [#allocation5], %s475
        %s477 = sand.u32 %s89, 1
        %s478 = smul.addr %s477, 32
        %s479 = scalar_lea.vmem [#allocation4], %s478
        // Predicated region
        $region49: #{tpu_custom_call.1} parent=43 // pred_check
          %p480 = pneg %p102
        $region50: #{tpu_custom_call.1} parent=43 // pred_check_branch
          %482 = sbr.rel (%p480) target = $region52
        $region51: #{tpu_custom_call.1} parent=43 // pred_region
          %483 = dma.done %s476, 512
        $region52: #{tpu_custom_call.1} parent=43 // pred_fallthru
          _
        %s484 = sand.u32 %s31, 1
        %s485 = scalar_lea.sflag [#allocation5], %s484
        %s486 = sand.u32 %s125, 1
        %s487 = smul.addr %s486, 32
        %s488 = scalar_lea.vmem [#allocation6], %s487
        // Predicated region
        $region53: #{tpu_custom_call.1} parent=43 // pred_check
          %p489 = pneg %p138
        $region54: #{tpu_custom_call.1} parent=43 // pred_check_branch
          %491 = sbr.rel (%p489) target = $region56
        $region55: #{tpu_custom_call.1} parent=43 // pred_region
          %492 = dma.done %s485, 512
        $region56: #{tpu_custom_call.1} parent=43 // pred_fallthru
          _
        %s493 = sand.u32 %s31, 1
        %s494 = scalar_lea.sflag [#allocation8], %s493
        %s495 = sand.u32 %s153, 1
        %s496 = smul.addr %s495, 16
        %s497 = scalar_lea.vmem [#allocation7], %s496
        // Predicated region
        $region57: #{tpu_custom_call.1} parent=43 // pred_check
          %p498 = pneg %p166
        $region58: #{tpu_custom_call.1} parent=43 // pred_check_branch
          %500 = sbr.rel (%p498) target = $region60
        $region59: #{tpu_custom_call.1} parent=43 // pred_region
          %501 = dma.done %s494, 256
        $region60: #{tpu_custom_call.1} parent=43 // pred_fallthru
          _
        %s502 = sand.u32 %s31, 1
        %s503 = scalar_lea.sflag [#allocation8], %s502
        %s504 = sand.u32 %s189, 1
        %s505 = smul.addr %s504, 8
        %s506 = scalar_lea.vmem [#allocation9], %s505
        // Predicated region
        $region61: #{tpu_custom_call.1} parent=43 // pred_check
          %p507 = pneg %p202
        $region62: #{tpu_custom_call.1} parent=43 // pred_check_branch
          %509 = sbr.rel (%p507) target = $region64
        $region63: #{tpu_custom_call.1} parent=43 // pred_region
          %510 = dma.done %s503, 128
        $region64: #{tpu_custom_call.1} parent=43 // pred_fallthru
          _
        %s511 = sand.u32 %s225, 1
        %s512 = scalar_lea.sflag [#allocation11], %s511
        %s513 = sand.u32 %s225, 1
        %s514 = smul.addr %s513, 8
        %s515 = scalar_lea.vmem [#allocation10], %s514
        // Predicated region
        $region65: #{tpu_custom_call.1} parent=43 // pred_check
          %p516 = pneg %p238
        $region66: #{tpu_custom_call.1} parent=43 // pred_check_branch
          %518 = sbr.rel (%p516) target = $region68
        $region67: #{tpu_custom_call.1} parent=43 // pred_region
          %519 = dma.done %s512, 128
        $region68: #{tpu_custom_call.1} parent=43 // pred_fallthru
          _
        %s520 = sand.u32 %s53, 1
        %s521 = scalar_lea.sflag [#allocation3], %s520
        %s522 = sand.u32 %s53, 1
        %s523 = smul.addr %s522, 64
        %s524 = scalar_lea.vmem [#allocation2], %s523
        %p525 = pneg %p66
        %p526 = pneg %p63
        %s527 = sand.u32 %s31, 1
        %s528 = scalar_lea.sflag [#allocation5], %s527
        %s529 = sand.u32 %s89, 1
        %s530 = smul.addr %s529, 32
        %s531 = scalar_lea.vmem [#allocation4], %s530
        %p532 = pneg %p102
        %p533 = pneg %p99
        %s534 = sand.u32 %s31, 1
        %s535 = scalar_lea.sflag [#allocation5], %s534
        %s536 = sand.u32 %s125, 1
        %s537 = smul.addr %s536, 32
        %s538 = scalar_lea.vmem [#allocation6], %s537
        %p539 = pneg %p138
        %p540 = pneg %p135
        %s541 = sand.u32 %s31, 1
        %s542 = scalar_lea.sflag [#allocation8], %s541
        %s543 = sand.u32 %s153, 1
        %s544 = smul.addr %s543, 16
        %s545 = scalar_lea.vmem [#allocation7], %s544
        %p546 = pneg %p166
        %p547 = pneg %p163
        %s548 = sand.u32 %s31, 1
        %s549 = scalar_lea.sflag [#allocation8], %s548
        %s550 = sand.u32 %s189, 1
        %s551 = smul.addr %s550, 8
        %s552 = scalar_lea.vmem [#allocation9], %s551
        %p553 = pneg %p202
        %p554 = pneg %p199
        %s555 = sand.u32 %s225, 1
        %s556 = scalar_lea.sflag [#allocation11], %s555
        %s557 = sand.u32 %s225, 1
        %s558 = smul.addr %s557, 8
        %s559 = scalar_lea.vmem [#allocation10], %s558
        %p560 = pneg %p238
        %p561 = pneg %p235
        %p562 = pneg %p266
        %p563 = pneg %p263
        %p564 = scmp.lt.s32.totalorder %s35, 1
        %s565 = scalar_select %p564, %s35, 1
        %p566 = scmp.lt.s32.totalorder %s36, 0
        %s567 = scalar_select %p566, %s36, 0
        %s568 = sadd.s32 %s567, %s565
        %s569 = scalar_lea.vmem %s6, %s568
        %p570 = pneg %p294
        %p571 = pneg %p291
        %p572 = scmp.lt.s32.totalorder %s35, 1
        %s573 = scalar_select %p572, %s35, 1
        %p574 = scmp.lt.s32.totalorder %s36, 0
        %s575 = scalar_select %p574, %s36, 0
        %s576 = sadd.s32 %s575, %s573
        %s577 = scalar_lea.vmem %s7, %s576
        %s578 = smul.u32 2, %s36
        %s579 = smul.u32 %s36, 2
        %s580 = ssub.s32 %s579, 1
        %p581 = scmp.gt.s32.totalorder %s580, 0
        %s582 = scalar_select %p581, %s580, 0
        %s583 = sadd.s32 %s36, 1
        %s584 = smul.u32 %s583, 2
        %p585 = scmp.lt.s32.totalorder %s584, 1
        %s586 = scalar_select %p585, %s584, 1
        %s587 = smul.u32 2, %s36
        %s588 = smul.u32 %s36, 2
        %s589 = ssub.s32 %s588, 1
        %p590 = scmp.gt.s32.totalorder %s589, 0
        %s591 = scalar_select %p590, %s589, 0
        %s592 = sadd.s32 %s36, 1
        %s593 = smul.u32 %s592, 2
        %p594 = scmp.lt.s32.totalorder %s593, 1
        %s595 = scalar_select %p594, %s593, 1
        %p596 = scmp.lt.s32.totalorder %s35, 1
        %s597 = scalar_select %p596, %s35, 1
        %p598 = scmp.lt.s32.totalorder %s36, 0
        %s599 = scalar_select %p598, %s36, 0
        %s600 = sadd.s32 %s599, %s597
        %s601 = scalar_lea.vmem %s6, %s600
        %p602 = scmp.lt.s32.totalorder %s35, 1
        %s603 = scalar_select %p602, %s35, 1
        %p604 = scmp.lt.s32.totalorder %s36, 0
        %s605 = scalar_select %p604, %s36, 0
        %s606 = sadd.s32 %s605, %s603
        %s607 = scalar_lea.vmem %s7, %s606
        %p608 = scmp.eq.s32.totalorder %s36, 0
        %v609 = vld [vmem:[%s497] sm:$0xff]
        %v610 = vld [vmem:[%s497 + $0x8] sm:$0xff]
        %vm611 = vcmp.ne.s32.totalorder %v609, 4294967295
        %vm612 = vcmp.ne.s32.totalorder %v610, 4294967295
        %v613 = vld [vmem:[%s506] sm:$0x1]
        %v614 = vld [vmem:[%s506 + $0x7] sm:$0x1]
        %s615 = scalar_select %p608, 1, 0
        %v616 = vstv %s615
        %vm617 = vcmp.eq.s32.totalorder %v616, 1
        %v618 = vsel %vm617, %v613, %v614
        %v619 = vld [vmem:[%s515 + $0x7] sm:$0x1]
        %v620 = vld [vmem:[%s515] sm:$0x1]
        %v621 = vsel %vm617, %v619, %v620
        %vm622 = vcmp.ne.s32.totalorder %v618, 4294967295
        %vm623 = vcmp.ne.s32.totalorder %v621, 4294967295
        %v624 = vlaneseq
        %v625 = vshrl.u32 %v624, 7
        %v626 = vadd.s32 %v625, 8
        %v627 = vlaneseq
        %v628 = vand.u32 %v627, 127
        %vm629 = vcmp.eq.s32.totalorder %v625, 0
        %vm630 = vcmp.eq.s32.totalorder %v626, 0
        %vm631 = vcmp.eq.s32.totalorder %v625, 15
        %vm632 = vcmp.eq.s32.totalorder %v626, 15
        %vm633 = vcmp.eq.s32.totalorder %v628, 0
        %vm634 = vcmp.eq.s32.totalorder %v628, 15
        %v635 = vld [vmem:[%s479] sm:$0x1]
        %v636 = vld [vmem:[%s479 + $0x7] sm:$0x1]
        %v637 = vsel %vm617, %v635, %v636
        %v638 = vld [vmem:[%s488 + $0x7] sm:$0x1]
        %v639 = vld [vmem:[%s488] sm:$0x1]
        %v640 = vsel %vm617, %v638, %v639
        %v641 = vld [vmem:[%s470] sm:$0xff]
        %v642 = vld [vmem:[%s470 + $0x8] sm:$0xff]
        %s643 = scalar_lea.vmem %s479, 8 [#allocation4]
        %v644 = vld [vmem:[%s643] sm:$0x1]
        %v645 = vld [vmem:[%s643 + $0x7] sm:$0x1]
        %v646 = vsel %vm617, %v644, %v645
        %s647 = scalar_lea.vmem %s488, 8 [#allocation6]
        %v648 = vld [vmem:[%s647 + $0x7] sm:$0x1]
        %v649 = vld [vmem:[%s647] sm:$0x1]
        %v650 = vsel %vm617, %v648, %v649
        %s651 = scalar_lea.vmem %s470, 16 [#allocation2]
        %v652 = vld [vmem:[%s651] sm:$0xff]
        %v653 = vld [vmem:[%s651 + $0x8] sm:$0xff]
        %v654 = vmax.f32 %v641, %v652
        %v655 = vmax.f32 %v642, %v653
        %v656 = vmax.f32 %v637, %v646
        %v657 = vmax.f32 %v640, %v650
        %s658 = scalar_lea.vmem %s479, 16 [#allocation4]
        %v659 = vld [vmem:[%s658] sm:$0x1]
        %v660 = vld [vmem:[%s658 + $0x7] sm:$0x1]
        %v661 = vsel %vm617, %v659, %v660
        %s662 = scalar_lea.vmem %s488, 16 [#allocation6]
        %v663 = vld [vmem:[%s662 + $0x7] sm:$0x1]
        %v664 = vld [vmem:[%s662] sm:$0x1]
        %v665 = vsel %vm617, %v663, %v664
        %s666 = scalar_lea.vmem %s470, 32 [#allocation2]
        %v667 = vld [vmem:[%s666] sm:$0xff]
        %v668 = vld [vmem:[%s666 + $0x8] sm:$0xff]
        %v669 = vmax.f32 %v654, %v667
        %v670 = vmax.f32 %v655, %v668
        %v671 = vmax.f32 %v656, %v661
        %v672 = vmax.f32 %v657, %v665
        %s673 = scalar_lea.vmem %s479, 24 [#allocation4]
        %v674 = vld [vmem:[%s673] sm:$0x1]
        %v675 = vld [vmem:[%s673 + $0x7] sm:$0x1]
        %v676 = vsel %vm617, %v674, %v675
        %s677 = scalar_lea.vmem %s488, 24 [#allocation6]
        %v678 = vld [vmem:[%s677 + $0x7] sm:$0x1]
        %v679 = vld [vmem:[%s677] sm:$0x1]
        %v680 = vsel %vm617, %v678, %v679
        %s681 = scalar_lea.vmem %s470, 48 [#allocation2]
        %v682 = vld [vmem:[%s681] sm:$0xff]
        %v683 = vld [vmem:[%s681 + $0x8] sm:$0xff]
        %v684 = vmax.f32 %v669, %v682
        %v685 = vmax.f32 %v670, %v683
        %v686 = vmax.f32 %v671, %v676
        %v687 = vmax.f32 %v672, %v680
        %v688 = vsub.f32 %v641, %v684
        %v689 = vsub.f32 %v642, %v685
        %v690 = vmul.f32 %v688, 1.442695
        %v691 = vpow.pop %v690
        %v692 = vmul.f32 %v689, 1.442695
        %v693 = vpow.pop %v692
        %v694 = vadd.f32 %v691, 0.0
        %v695 = vadd.f32 %v693, 0.0
        %v696 = vsub.f32 %v637, %v686
        %v697 = vmul.f32 %v696, 1.442695
        %v698 = vpow.pop %v697
        %v699 = vadd.f32 %v698, 0.0
        %v700 = vsub.f32 %v640, %v687
        %v701 = vmul.f32 %v700, 1.442695
        %v702 = vpow.pop %v701
        %v703 = vadd.f32 %v702, 0.0
        %v704 = vsub.f32 %v652, %v684
        %v705 = vsub.f32 %v653, %v685
        %v706 = vmul.f32 %v704, 1.442695
        %v707 = vpow.pop %v706
        %v708 = vmul.f32 %v705, 1.442695
        %v709 = vpow.pop %v708
        %v710 = vadd.f32 %v694, %v707
        %v711 = vadd.f32 %v695, %v709
        %v712 = vsub.f32 %v646, %v686
        %v713 = vmul.f32 %v712, 1.442695
        %v714 = vpow.pop %v713
        %v715 = vadd.f32 %v699, %v714
        %v716 = vsub.f32 %v650, %v687
        %v717 = vmul.f32 %v716, 1.442695
        %v718 = vpow.pop %v717
        %v719 = vadd.f32 %v703, %v718
        %v720 = vsub.f32 %v667, %v684
        %v721 = vsub.f32 %v668, %v685
        %v722 = vmul.f32 %v720, 1.442695
        %v723 = vpow.pop %v722
        %v724 = vmul.f32 %v721, 1.442695
        %v725 = vpow.pop %v724
        %v726 = vadd.f32 %v710, %v723
        %v727 = vadd.f32 %v711, %v725
        %v728 = vsub.f32 %v661, %v686
        %v729 = vmul.f32 %v728, 1.442695
        %v730 = vpow.pop %v729
        %v731 = vadd.f32 %v715, %v730
        %v732 = vsub.f32 %v665, %v687
        %v733 = vmul.f32 %v732, 1.442695
        %v734 = vpow.pop %v733
        %v735 = vadd.f32 %v719, %v734
        %v736 = vsub.f32 %v682, %v684
        %v737 = vsub.f32 %v683, %v685
        %v738 = vmul.f32 %v736, 1.442695
        %v739 = vpow.pop %v738
        %v740 = vmul.f32 %v737, 1.442695
        %v741 = vpow.pop %v740
        %v742 = vadd.f32 %v726, %v739
        %v743 = vadd.f32 %v727, %v741
        %v744 = vsub.f32 %v676, %v686
        %v745 = vmul.f32 %v744, 1.442695
        %v746 = vpow.pop %v745
        %v747 = vadd.f32 %v731, %v746
        %v748 = vsub.f32 %v680, %v687
        %v749 = vmul.f32 %v748, 1.442695
        %v750 = vpow.pop %v749
        %v751 = vadd.f32 %v735, %v750
        %v752 = vrcp.pop %v742
        %v753 = vrcp.pop %v743
        %v754 = vmul.f32 %v742, %v752
        %v755 = vmul.f32 %v743, %v753
        %v756 = vsub.f32 2.0, %v754
        %v757 = vsub.f32 2.0, %v755
        %v758 = vmul.f32 %v752, %v756
        %v759 = vmul.f32 %v753, %v757
        %v760 = vrcp.pop %v747
        %v761 = vmul.f32 %v747, %v760
        %v762 = vsub.f32 2.0, %v761
        %v763 = vmul.f32 %v760, %v762
        %v764 = vrcp.pop %v751
        %v765 = vmul.f32 %v751, %v764
        %v766 = vsub.f32 2.0, %v765
        %v767 = vmul.f32 %v764, %v766
        %v768 = vmul.f32 %v691, %v758
        %v769 = vmul.f32 %v693, %v759
        %v770 = vmul.f32 %v698, %v763
        %v771 = vmul.f32 %v702, %v767
        %vm772 = vcmp.eq.s32.totalorder %v609, 0
        %vm773 = vcmp.eq.s32.totalorder %v610, 0
        %vm774 = vmand %vm772, %vm611
        %vm775 = vmand %vm773, %vm612
        %v776 = vsel %vm774, 1, 0
        %v777 = vsel %vm775, 1, 0
        %v778 = vcvt.s32.f32 %v776
        %v779 = vcvt.s32.f32 %v777
        %vm780 = vcmp.eq.s32.totalorder %v618, 0
        %vm781 = vmand %vm780, %vm622
        %v782 = vsel %vm781, 1, 0
        %v783 = vcvt.s32.f32 %v782
        %vm784 = vcmp.eq.s32.totalorder %v621, 0
        %vm785 = vmand %vm784, %vm623
        %v786 = vsel %vm785, 1, 0
        %v787 = vcvt.s32.f32 %v786
        %v788 = vrot.slane %v778, 7
        %v789 = vrot.slane %v779, 7
        %vm790 = vcmp.lt.s32.totalorder %v625, 1
        %v791 = vsel %vm790, %v788, %v789
        %v792 = vsel %vm790, %v789, %v788
        %v793 = vsel %vm629, 1, 0
        %v794 = vsel %vm630, 1, 0
        %vm795 = vcmp.eq.s32.totalorder %v793, 1
        %vm796 = vcmp.eq.s32.totalorder %v794, 1
        %v797 = vlaneseq
        %v798 = vshrl.u32 %v797, 7
        %v799 = vsub.s32 0, %v798
        %v800 = vrot.slane %v783, %v799
        %v801 = vsel %vm795, %v800, %v792
        %v802 = vsel %vm796, %v800, %v791
        %v803 = vmul.f32 %v778, 2.0
        %v804 = vmul.f32 %v779, 2.0
        %v805 = vadd.f32 %v801, %v803
        %v806 = vadd.f32 %v802, %v804
        %v807 = vrot.slane %v778, 1
        %v808 = vrot.slane %v779, 1
        %vm809 = vcmp.lt.s32.totalorder %v625, 7
        %v810 = vsel %vm809, %v807, %v808
        %v811 = vsel %vm809, %v808, %v807
        %v812 = vsel %vm631, 1, 0
        %v813 = vsel %vm632, 1, 0
        %vm814 = vcmp.eq.s32.totalorder %v812, 1
        %vm815 = vcmp.eq.s32.totalorder %v813, 1
        %v816 = vlaneseq
        %v817 = vshrl.u32 %v816, 7
        %v818 = vsub.s32 0, %v817
        %v819 = vrot.slane %v787, %v818
        %v820 = vsel %vm814, %v819, %v810
        %v821 = vsel %vm815, %v819, %v811
        %v822 = vadd.f32 %v805, %v820
        %v823 = vadd.f32 %v806, %v821
        %vm824 = vcmask 1047680
        %825 = vrot.lane.b32.xlu0 %v822, 16
        %v826 = vpop.permute.xlu0 %825
        %v827 = vsel %vm824, %v826, %v822
        %828 = vrot.lane.b32.xlu0 %v823, 16
        %v829 = vpop.permute.xlu0 %828
        %v830 = vsel %vm824, %v829, %v823
        %831 = vrot.lane.b32.xlu0 %v827, 16
        %v832 = vpop.permute.xlu0 %831
        %833 = vrot.lane.b32.xlu0 %v830, 16
        %v834 = vpop.permute.xlu0 %833
        %v835 = vsel %vm824, %v832, %v822
        %v836 = vsel %vm824, %v834, %v823
        %v837 = vsel %vm634, 1, 0
        %vm838 = vcmp.eq.s32.totalorder %v837, 1
        %841 = vrot.lane.b32.xlu0 %v835, 127
        %v842 = vpop.permute.xlu0 %841
        %843 = vrot.lane.b32.xlu0 %v836, 127
        %v844 = vpop.permute.xlu0 %843
        %v847 = vsel %vm838, %v822, %v842
        %v848 = vsel %vm838, %v823, %v844
        %v849 = vsel %vm633, 1, 0
        %vm850 = vcmp.eq.s32.totalorder %v849, 1
        %851 = vrot.lane.b32.xlu0 %v835, 113
        %v852 = vpop.permute.xlu0 %851
        %853 = vrot.lane.b32.xlu0 %v836, 113
        %v854 = vpop.permute.xlu0 %853
        %v857 = vsel %vm850, %v822, %v852
        %v858 = vsel %vm850, %v823, %v854
        %v859 = vsub.f32 %v847, %v857
        %v860 = vsub.f32 %v848, %v858
        %v861 = vmul.f32 %v859, 0.5
        %v862 = vmul.f32 %v860, 0.5
        %863 = vrot.lane.b32.xlu0 %v778, 16
        %v864 = vpop.permute.xlu0 %863
        %v865 = vsel %vm824, %v864, %v778
        %866 = vrot.lane.b32.xlu0 %v779, 16
        %v867 = vpop.permute.xlu0 %866
        %v868 = vsel %vm824, %v867, %v779
        %869 = vrot.lane.b32.xlu0 %v865, 16
        %v870 = vpop.permute.xlu0 %869
        %871 = vrot.lane.b32.xlu0 %v868, 16
        %v872 = vpop.permute.xlu0 %871
        %v873 = vsel %vm824, %v870, %v778
        %v874 = vsel %vm824, %v872, %v779
        %877 = vrot.lane.b32.xlu0 %v873, 113
        %v878 = vpop.permute.xlu0 %877
        %879 = vrot.lane.b32.xlu0 %v874, 113
        %v880 = vpop.permute.xlu0 %879
        %v883 = vsel %vm850, %v778, %v878
        %v884 = vsel %vm850, %v779, %v880
        %v885 = vadd.f32 %v883, %v803
        %v886 = vadd.f32 %v884, %v804
        %887 = vrot.lane.b32.xlu0 %v873, 127
        %v888 = vpop.permute.xlu0 %887
        %889 = vrot.lane.b32.xlu0 %v874, 127
        %v890 = vpop.permute.xlu0 %889
        %v893 = vsel %vm838, %v778, %v888
        %v894 = vsel %vm838, %v779, %v890
        %v895 = vadd.f32 %v885, %v893
        %v896 = vadd.f32 %v886, %v894
        %897 = vrot.lane.b32.xlu0 %v783, 16
        %v898 = vpop.permute.xlu0 %897
        %v899 = vsel %vm824, %v898, %v783
        %900 = vrot.lane.b32.xlu0 %v899, 16
        %v901 = vpop.permute.xlu0 %900
        %v902 = vsel %vm824, %v901, %v783
        %904 = vrot.lane.b32.xlu0 %v902, 113
        %v905 = vpop.permute.xlu0 %904
        %v907 = vsel %vm633, %v783, %v905
        %v908 = vmul.f32 %v783, 2.0
        %v909 = vadd.f32 %v907, %v908
        %910 = vrot.lane.b32.xlu0 %v902, 127
        %v911 = vpop.permute.xlu0 %910
        %v913 = vsel %vm634, %v783, %v911
        %v914 = vadd.f32 %v909, %v913
        %915 = vrot.lane.b32.xlu0 %v787, 16
        %v916 = vpop.permute.xlu0 %915
        %v917 = vsel %vm824, %v916, %v787
        %918 = vrot.lane.b32.xlu0 %v917, 16
        %v919 = vpop.permute.xlu0 %918
        %v920 = vsel %vm824, %v919, %v787
        %922 = vrot.lane.b32.xlu0 %v920, 113
        %v923 = vpop.permute.xlu0 %922
        %v925 = vsel %vm633, %v787, %v923
        %v926 = vmul.f32 %v787, 2.0
        %v927 = vadd.f32 %v925, %v926
        %928 = vrot.lane.b32.xlu0 %v920, 127
        %v929 = vpop.permute.xlu0 %928
        %v931 = vsel %vm634, %v787, %v929
        %v932 = vadd.f32 %v927, %v931
        %v933 = vrot.slane %v895, 1
        %v934 = vrot.slane %v896, 1
        %v935 = vsel %vm809, %v933, %v934
        %v936 = vsel %vm809, %v934, %v933
        %v937 = vlaneseq
        %v938 = vshrl.u32 %v937, 7
        %v939 = vsub.s32 0, %v938
        %v940 = vrot.slane %v932, %v939
        %v941 = vsel %vm814, %v940, %v935
        %v942 = vsel %vm815, %v940, %v936
        %v943 = vrot.slane %v895, 7
        %v944 = vrot.slane %v896, 7
        %v945 = vsel %vm790, %v943, %v944
        %v946 = vsel %vm790, %v944, %v943
        %v947 = vlaneseq
        %v948 = vshrl.u32 %v947, 7
        %v949 = vsub.s32 0, %v948
        %v950 = vrot.slane %v914, %v949
        %v951 = vsel %vm795, %v950, %v946
        %v952 = vsel %vm796, %v950, %v945
        %v953 = vsub.f32 %v941, %v951
        %v954 = vsub.f32 %v942, %v952
        %v955 = vmul.f32 %v953, 0.5
        %v956 = vmul.f32 %v954, 0.5
        %v957 = vrot.slane %v768, 7
        %v958 = vrot.slane %v769, 7
        %v959 = vsel %vm790, %v957, %v958
        %v960 = vsel %vm790, %v958, %v957
        %v961 = vlaneseq
        %v962 = vshrl.u32 %v961, 7
        %v963 = vsub.s32 0, %v962
        %v964 = vrot.slane %v770, %v963
        %v965 = vsel %vm795, %v964, %v960
        %v966 = vsel %vm796, %v964, %v959
        %v967 = vmul.f32 %v768, 2.0
        %v968 = vmul.f32 %v769, 2.0
        %v969 = vadd.f32 %v965, %v967
        %v970 = vadd.f32 %v966, %v968
        %v971 = vrot.slane %v768, 1
        %v972 = vrot.slane %v769, 1
        %v973 = vsel %vm809, %v971, %v972
        %v974 = vsel %vm809, %v972, %v971
        %v975 = vlaneseq
        %v976 = vshrl.u32 %v975, 7
        %v977 = vsub.s32 0, %v976
        %v978 = vrot.slane %v771, %v977
        %v979 = vsel %vm814, %v978, %v973
        %v980 = vsel %vm815, %v978, %v974
        %v981 = vadd.f32 %v969, %v979
        %v982 = vadd.f32 %v970, %v980
        %983 = vrot.lane.b32.xlu0 %v981, 16
        %v984 = vpop.permute.xlu0 %983
        %v985 = vsel %vm824, %v984, %v981
        %986 = vrot.lane.b32.xlu0 %v982, 16
        %v987 = vpop.permute.xlu0 %986
        %v988 = vsel %vm824, %v987, %v982
        %989 = vrot.lane.b32.xlu0 %v985, 16
        %v990 = vpop.permute.xlu0 %989
        %991 = vrot.lane.b32.xlu0 %v988, 16
        %v992 = vpop.permute.xlu0 %991
        %v993 = vsel %vm824, %v990, %v981
        %v994 = vsel %vm824, %v992, %v982
        %997 = vrot.lane.b32.xlu0 %v993, 127
        %v998 = vpop.permute.xlu0 %997
        %999 = vrot.lane.b32.xlu0 %v994, 127
        %v1000 = vpop.permute.xlu0 %999
        %v1003 = vsel %vm838, %v981, %v998
        %v1004 = vsel %vm838, %v982, %v1000
        %1005 = vrot.lane.b32.xlu0 %v993, 113
        %v1006 = vpop.permute.xlu0 %1005
        %1007 = vrot.lane.b32.xlu0 %v994, 113
        %v1008 = vpop.permute.xlu0 %1007
        %v1011 = vsel %vm850, %v981, %v1006
        %v1012 = vsel %vm850, %v982, %v1008
        %v1013 = vsub.f32 %v1003, %v1011
        %v1014 = vsub.f32 %v1004, %v1012
        %v1015 = vmul.f32 %v1013, 0.5
        %v1016 = vmul.f32 %v1014, 0.5
        %1017 = vrot.lane.b32.xlu0 %v768, 16
        %v1018 = vpop.permute.xlu0 %1017
        %v1019 = vsel %vm824, %v1018, %v768
        %1020 = vrot.lane.b32.xlu0 %v769, 16
        %v1021 = vpop.permute.xlu0 %1020
        %v1022 = vsel %vm824, %v1021, %v769
        %1023 = vrot.lane.b32.xlu0 %v1019, 16
        %v1024 = vpop.permute.xlu0 %1023
        %1025 = vrot.lane.b32.xlu0 %v1022, 16
        %v1026 = vpop.permute.xlu0 %1025
        %v1027 = vsel %vm824, %v1024, %v768
        %v1028 = vsel %vm824, %v1026, %v769
        %1031 = vrot.lane.b32.xlu0 %v1027, 113
        %v1032 = vpop.permute.xlu0 %1031
        %1033 = vrot.lane.b32.xlu0 %v1028, 113
        %v1034 = vpop.permute.xlu0 %1033
        %v1037 = vsel %vm850, %v768, %v1032
        %v1038 = vsel %vm850, %v769, %v1034
        %v1039 = vadd.f32 %v1037, %v967
        %v1040 = vadd.f32 %v1038, %v968
        %1041 = vrot.lane.b32.xlu0 %v1027, 127
        %v1042 = vpop.permute.xlu0 %1041
        %1043 = vrot.lane.b32.xlu0 %v1028, 127
        %v1044 = vpop.permute.xlu0 %1043
        %v1047 = vsel %vm838, %v768, %v1042
        %v1048 = vsel %vm838, %v769, %v1044
        %v1049 = vadd.f32 %v1039, %v1047
        %v1050 = vadd.f32 %v1040, %v1048
        %1051 = vrot.lane.b32.xlu0 %v770, 16
        %v1052 = vpop.permute.xlu0 %1051
        %v1053 = vsel %vm824, %v1052, %v770
        %1054 = vrot.lane.b32.xlu0 %v1053, 16
        %v1055 = vpop.permute.xlu0 %1054
        %v1056 = vsel %vm824, %v1055, %v770
        %1058 = vrot.lane.b32.xlu0 %v1056, 113
        %v1059 = vpop.permute.xlu0 %1058
        %v1061 = vsel %vm633, %v770, %v1059
        %v1062 = vmul.f32 %v770, 2.0
        %v1063 = vadd.f32 %v1061, %v1062
        %1064 = vrot.lane.b32.xlu0 %v1056, 127
        %v1065 = vpop.permute.xlu0 %1064
        %v1067 = vsel %vm634, %v770, %v1065
        %v1068 = vadd.f32 %v1063, %v1067
        %1069 = vrot.lane.b32.xlu0 %v771, 16
        %v1070 = vpop.permute.xlu0 %1069
        %v1071 = vsel %vm824, %v1070, %v771
        %1072 = vrot.lane.b32.xlu0 %v1071, 16
        %v1073 = vpop.permute.xlu0 %1072
        %v1074 = vsel %vm824, %v1073, %v771
        %1076 = vrot.lane.b32.xlu0 %v1074, 113
        %v1077 = vpop.permute.xlu0 %1076
        %v1079 = vsel %vm633, %v771, %v1077
        %v1080 = vmul.f32 %v771, 2.0
        %v1081 = vadd.f32 %v1079, %v1080
        %1082 = vrot.lane.b32.xlu0 %v1074, 127
        %v1083 = vpop.permute.xlu0 %1082
        %v1085 = vsel %vm634, %v771, %v1083
        %v1086 = vadd.f32 %v1081, %v1085
        %v1087 = vrot.slane %v1049, 1
        %v1088 = vrot.slane %v1050, 1
        %v1089 = vsel %vm809, %v1087, %v1088
        %v1090 = vsel %vm809, %v1088, %v1087
        %v1091 = vlaneseq
        %v1092 = vshrl.u32 %v1091, 7
        %v1093 = vsub.s32 0, %v1092
        %v1094 = vrot.slane %v1086, %v1093
        %v1095 = vsel %vm814, %v1094, %v1089
        %v1096 = vsel %vm815, %v1094, %v1090
        %v1097 = vrot.slane %v1049, 7
        %v1098 = vrot.slane %v1050, 7
        %v1099 = vsel %vm790, %v1097, %v1098
        %v1100 = vsel %vm790, %v1098, %v1097
        %v1101 = vlaneseq
        %v1102 = vshrl.u32 %v1101, 7
        %v1103 = vsub.s32 0, %v1102
        %v1104 = vrot.slane %v1068, %v1103
        %v1105 = vsel %vm795, %v1104, %v1100
        %v1106 = vsel %vm796, %v1104, %v1099
        %v1107 = vsub.f32 %v1095, %v1105
        %v1108 = vsub.f32 %v1096, %v1106
        %v1109 = vmul.f32 %v1107, 0.5
        %v1110 = vmul.f32 %v1108, 0.5
        %vm1111 = vcmp.ne.f32.partialorder %v861, 0.0
        %vm1112 = vcmp.ne.f32.partialorder %v862, 0.0
        %vm1113 = vmand %vm1111, %vm611
        %vm1114 = vmand %vm1112, %vm612
        %vm1115 = vcmp.ne.f32.partialorder %v955, 0.0
        %vm1116 = vcmp.ne.f32.partialorder %v956, 0.0
        %vm1117 = vmand %vm1115, %vm611
        %vm1118 = vmand %vm1116, %vm612
        %v1119 = vsub.f32 %v861, %v1015
        %v1120 = vsub.f32 %v862, %v1016
        %v1121 = vsub.f32 %v955, %v1109
        %v1122 = vsub.f32 %v956, %v1110
        %v1123 = vmul.f32 %v1119, %v1119
        %v1124 = vmul.f32 %v1120, %v1120
        %v1125 = vsel %vm1113, %v1123, 0.0
        %v1126 = vsel %vm1114, %v1124, 0.0
        %v1127 = vmul.f32 %v1121, %v1121
        %v1128 = vmul.f32 %v1122, %v1122
        %v1129 = vsel %vm1117, %v1127, 0.0
        %v1130 = vsel %vm1118, %v1128, 0.0
        %v1131 = vadd.f32 %v1125, %v1129
        %v1132 = vadd.f32 %v1126, %v1130
        %vm1133 = vcmask 130048
        %v1134 = vsel %vm1133, %v1131, 0.0
        %v1135 = vsel %vm1133, %v1132, 0.0
        %v1136 = vadd.f32 %v1134, %v1135
        %1137 = vadd.xlane.f32.xlu0 %v1136
        %v1138 = vpop.xlane.xlu0 %1137
        %v1139 = vrot.slane %v1138, 4
        %v1140 = vadd.f32 %v1138, %v1139
        %v1141 = vrot.slane %v1140, 2
        %v1142 = vadd.f32 %v1140, %v1141
        %v1143 = vrot.slane %v1142, 1
        %v1144 = vadd.f32 %v1142, %v1143
        %s1145 = vtos %v1144
        %s1146 = sadd.f32 %s1145, 0.0
        %v1147 = vsel %vm1113, 1, 0
        %v1148 = vsel %vm1114, 1, 0
        %v1149 = vcvt.s32.f32 %v1147
        %v1150 = vcvt.s32.f32 %v1148
        %v1151 = vsel %vm1133, %v1149, 0.0
        %v1152 = vsel %vm1133, %v1150, 0.0
        %v1153 = vadd.f32 %v1151, %v1152
        %1154 = vadd.xlane.f32.xlu0 %v1153
        %v1155 = vpop.xlane.xlu0 %1154
        %v1156 = vrot.slane %v1155, 4
        %v1157 = vadd.f32 %v1155, %v1156
        %v1158 = vrot.slane %v1157, 2
        %v1159 = vadd.f32 %v1157, %v1158
        %v1160 = vrot.slane %v1159, 1
        %v1161 = vadd.f32 %v1159, %v1160
        %s1162 = vtos %v1161
        %v1163 = vsel %vm1117, 1, 0
        %v1164 = vsel %vm1118, 1, 0
        %v1165 = vcvt.s32.f32 %v1163
        %v1166 = vcvt.s32.f32 %v1164
        %v1167 = vsel %vm1133, %v1165, 0.0
        %v1168 = vsel %vm1133, %v1166, 0.0
        %v1169 = vadd.f32 %v1167, %v1168
        %1170 = vadd.xlane.f32.xlu0 %v1169
        %v1171 = vpop.xlane.xlu0 %1170
        %v1172 = vrot.slane %v1171, 4
        %v1173 = vadd.f32 %v1171, %v1172
        %v1174 = vrot.slane %v1173, 2
        %v1175 = vadd.f32 %v1173, %v1174
        %v1176 = vrot.slane %v1175, 1
        %v1177 = vadd.f32 %v1175, %v1176
        %s1178 = vtos %v1177
        %s1179 = sadd.f32 %s1162, %s1178
        %s1180 = scvt.f32.s32.to.zero.pseudo %s1179
        %v1181 = vmul.f32 %v707, %v758
        %v1182 = vmul.f32 %v709, %v759
        %v1183 = vmul.f32 %v714, %v763
        %v1184 = vmul.f32 %v718, %v767
        %vm1185 = vcmp.eq.s32.totalorder %v609, 1
        %vm1186 = vcmp.eq.s32.totalorder %v610, 1
        %vm1187 = vmand %vm1185, %vm611
        %vm1188 = vmand %vm1186, %vm612
        %v1189 = vsel %vm1187, 1, 0
        %v1190 = vsel %vm1188, 1, 0
        %v1191 = vcvt.s32.f32 %v1189
        %v1192 = vcvt.s32.f32 %v1190
        %vm1193 = vcmp.eq.s32.totalorder %v618, 1
        %vm1194 = vmand %vm1193, %vm622
        %v1195 = vsel %vm1194, 1, 0
        %v1196 = vcvt.s32.f32 %v1195
        %vm1197 = vcmp.eq.s32.totalorder %v621, 1
        %vm1198 = vmand %vm1197, %vm623
        %v1199 = vsel %vm1198, 1, 0
        %v1200 = vcvt.s32.f32 %v1199
        %v1201 = vrot.slane %v1191, 7
        %v1202 = vrot.slane %v1192, 7
        %v1203 = vsel %vm790, %v1201, %v1202
        %v1204 = vsel %vm790, %v1202, %v1201
        %v1205 = vlaneseq
        %v1206 = vshrl.u32 %v1205, 7
        %v1207 = vsub.s32 0, %v1206
        %v1208 = vrot.slane %v1196, %v1207
        %v1209 = vsel %vm795, %v1208, %v1204
        %v1210 = vsel %vm796, %v1208, %v1203
        %v1211 = vmul.f32 %v1191, 2.0
        %v1212 = vmul.f32 %v1192, 2.0
        %v1213 = vadd.f32 %v1209, %v1211
        %v1214 = vadd.f32 %v1210, %v1212
        %v1215 = vrot.slane %v1191, 1
        %v1216 = vrot.slane %v1192, 1
        %v1217 = vsel %vm809, %v1215, %v1216
        %v1218 = vsel %vm809, %v1216, %v1215
        %v1219 = vlaneseq
        %v1220 = vshrl.u32 %v1219, 7
        %v1221 = vsub.s32 0, %v1220
        %v1222 = vrot.slane %v1200, %v1221
        %v1223 = vsel %vm814, %v1222, %v1217
        %v1224 = vsel %vm815, %v1222, %v1218
        %v1225 = vadd.f32 %v1213, %v1223
        %v1226 = vadd.f32 %v1214, %v1224
        %1227 = vrot.lane.b32.xlu0 %v1225, 16
        %v1228 = vpop.permute.xlu0 %1227
        %v1229 = vsel %vm824, %v1228, %v1225
        %1230 = vrot.lane.b32.xlu0 %v1226, 16
        %v1231 = vpop.permute.xlu0 %1230
        %v1232 = vsel %vm824, %v1231, %v1226
        %1233 = vrot.lane.b32.xlu0 %v1229, 16
        %v1234 = vpop.permute.xlu0 %1233
        %1235 = vrot.lane.b32.xlu0 %v1232, 16
        %v1236 = vpop.permute.xlu0 %1235
        %v1237 = vsel %vm824, %v1234, %v1225
        %v1238 = vsel %vm824, %v1236, %v1226
        %1241 = vrot.lane.b32.xlu0 %v1237, 127
        %v1242 = vpop.permute.xlu0 %1241
        %1243 = vrot.lane.b32.xlu0 %v1238, 127
        %v1244 = vpop.permute.xlu0 %1243
        %v1247 = vsel %vm838, %v1225, %v1242
        %v1248 = vsel %vm838, %v1226, %v1244
        %1249 = vrot.lane.b32.xlu0 %v1237, 113
        %v1250 = vpop.permute.xlu0 %1249
        %1251 = vrot.lane.b32.xlu0 %v1238, 113
        %v1252 = vpop.permute.xlu0 %1251
        %v1255 = vsel %vm850, %v1225, %v1250
        %v1256 = vsel %vm850, %v1226, %v1252
        %v1257 = vsub.f32 %v1247, %v1255
        %v1258 = vsub.f32 %v1248, %v1256
        %v1259 = vmul.f32 %v1257, 0.5
        %v1260 = vmul.f32 %v1258, 0.5
        %1261 = vrot.lane.b32.xlu0 %v1191, 16
        %v1262 = vpop.permute.xlu0 %1261
        %v1263 = vsel %vm824, %v1262, %v1191
        %1264 = vrot.lane.b32.xlu0 %v1192, 16
        %v1265 = vpop.permute.xlu0 %1264
        %v1266 = vsel %vm824, %v1265, %v1192
        %1267 = vrot.lane.b32.xlu0 %v1263, 16
        %v1268 = vpop.permute.xlu0 %1267
        %1269 = vrot.lane.b32.xlu0 %v1266, 16
        %v1270 = vpop.permute.xlu0 %1269
        %v1271 = vsel %vm824, %v1268, %v1191
        %v1272 = vsel %vm824, %v1270, %v1192
        %1275 = vrot.lane.b32.xlu0 %v1271, 113
        %v1276 = vpop.permute.xlu0 %1275
        %1277 = vrot.lane.b32.xlu0 %v1272, 113
        %v1278 = vpop.permute.xlu0 %1277
        %v1281 = vsel %vm850, %v1191, %v1276
        %v1282 = vsel %vm850, %v1192, %v1278
        %v1283 = vadd.f32 %v1281, %v1211
        %v1284 = vadd.f32 %v1282, %v1212
        %1285 = vrot.lane.b32.xlu0 %v1271, 127
        %v1286 = vpop.permute.xlu0 %1285
        %1287 = vrot.lane.b32.xlu0 %v1272, 127
        %v1288 = vpop.permute.xlu0 %1287
        %v1291 = vsel %vm838, %v1191, %v1286
        %v1292 = vsel %vm838, %v1192, %v1288
        %v1293 = vadd.f32 %v1283, %v1291
        %v1294 = vadd.f32 %v1284, %v1292
        %1295 = vrot.lane.b32.xlu0 %v1196, 16
        %v1296 = vpop.permute.xlu0 %1295
        %v1297 = vsel %vm824, %v1296, %v1196
        %1298 = vrot.lane.b32.xlu0 %v1297, 16
        %v1299 = vpop.permute.xlu0 %1298
        %v1300 = vsel %vm824, %v1299, %v1196
        %1302 = vrot.lane.b32.xlu0 %v1300, 113
        %v1303 = vpop.permute.xlu0 %1302
        %v1305 = vsel %vm633, %v1196, %v1303
        %v1306 = vmul.f32 %v1196, 2.0
        %v1307 = vadd.f32 %v1305, %v1306
        %1308 = vrot.lane.b32.xlu0 %v1300, 127
        %v1309 = vpop.permute.xlu0 %1308
        %v1311 = vsel %vm634, %v1196, %v1309
        %v1312 = vadd.f32 %v1307, %v1311
        %1313 = vrot.lane.b32.xlu0 %v1200, 16
        %v1314 = vpop.permute.xlu0 %1313
        %v1315 = vsel %vm824, %v1314, %v1200
        %1316 = vrot.lane.b32.xlu0 %v1315, 16
        %v1317 = vpop.permute.xlu0 %1316
        %v1318 = vsel %vm824, %v1317, %v1200
        %1320 = vrot.lane.b32.xlu0 %v1318, 113
        %v1321 = vpop.permute.xlu0 %1320
        %v1323 = vsel %vm633, %v1200, %v1321
        %v1324 = vmul.f32 %v1200, 2.0
        %v1325 = vadd.f32 %v1323, %v1324
        %1326 = vrot.lane.b32.xlu0 %v1318, 127
        %v1327 = vpop.permute.xlu0 %1326
        %v1329 = vsel %vm634, %v1200, %v1327
        %v1330 = vadd.f32 %v1325, %v1329
        %v1331 = vrot.slane %v1293, 1
        %v1332 = vrot.slane %v1294, 1
        %v1333 = vsel %vm809, %v1331, %v1332
        %v1334 = vsel %vm809, %v1332, %v1331
        %v1335 = vlaneseq
        %v1336 = vshrl.u32 %v1335, 7
        %v1337 = vsub.s32 0, %v1336
        %v1338 = vrot.slane %v1330, %v1337
        %v1339 = vsel %vm814, %v1338, %v1333
        %v1340 = vsel %vm815, %v1338, %v1334
        %v1341 = vrot.slane %v1293, 7
        %v1342 = vrot.slane %v1294, 7
        %v1343 = vsel %vm790, %v1341, %v1342
        %v1344 = vsel %vm790, %v1342, %v1341
        %v1345 = vlaneseq
        %v1346 = vshrl.u32 %v1345, 7
        %v1347 = vsub.s32 0, %v1346
        %v1348 = vrot.slane %v1312, %v1347
        %v1349 = vsel %vm795, %v1348, %v1344
        %v1350 = vsel %vm796, %v1348, %v1343
        %v1351 = vsub.f32 %v1339, %v1349
        %v1352 = vsub.f32 %v1340, %v1350
        %v1353 = vmul.f32 %v1351, 0.5
        %v1354 = vmul.f32 %v1352, 0.5
        %v1355 = vrot.slane %v1181, 7
        %v1356 = vrot.slane %v1182, 7
        %v1357 = vsel %vm790, %v1355, %v1356
        %v1358 = vsel %vm790, %v1356, %v1355
        %v1359 = vlaneseq
        %v1360 = vshrl.u32 %v1359, 7
        %v1361 = vsub.s32 0, %v1360
        %v1362 = vrot.slane %v1183, %v1361
        %v1363 = vsel %vm795, %v1362, %v1358
        %v1364 = vsel %vm796, %v1362, %v1357
        %v1365 = vmul.f32 %v1181, 2.0
        %v1366 = vmul.f32 %v1182, 2.0
        %v1367 = vadd.f32 %v1363, %v1365
        %v1368 = vadd.f32 %v1364, %v1366
        %v1369 = vrot.slane %v1181, 1
        %v1370 = vrot.slane %v1182, 1
        %v1371 = vsel %vm809, %v1369, %v1370
        %v1372 = vsel %vm809, %v1370, %v1369
        %v1373 = vlaneseq
        %v1374 = vshrl.u32 %v1373, 7
        %v1375 = vsub.s32 0, %v1374
        %v1376 = vrot.slane %v1184, %v1375
        %v1377 = vsel %vm814, %v1376, %v1371
        %v1378 = vsel %vm815, %v1376, %v1372
        %v1379 = vadd.f32 %v1367, %v1377
        %v1380 = vadd.f32 %v1368, %v1378
        %1381 = vrot.lane.b32.xlu0 %v1379, 16
        %v1382 = vpop.permute.xlu0 %1381
        %v1383 = vsel %vm824, %v1382, %v1379
        %1384 = vrot.lane.b32.xlu0 %v1380, 16
        %v1385 = vpop.permute.xlu0 %1384
        %v1386 = vsel %vm824, %v1385, %v1380
        %1387 = vrot.lane.b32.xlu0 %v1383, 16
        %v1388 = vpop.permute.xlu0 %1387
        %1389 = vrot.lane.b32.xlu0 %v1386, 16
        %v1390 = vpop.permute.xlu0 %1389
        %v1391 = vsel %vm824, %v1388, %v1379
        %v1392 = vsel %vm824, %v1390, %v1380
        %1395 = vrot.lane.b32.xlu0 %v1391, 127
        %v1396 = vpop.permute.xlu0 %1395
        %1397 = vrot.lane.b32.xlu0 %v1392, 127
        %v1398 = vpop.permute.xlu0 %1397
        %v1401 = vsel %vm838, %v1379, %v1396
        %v1402 = vsel %vm838, %v1380, %v1398
        %1403 = vrot.lane.b32.xlu0 %v1391, 113
        %v1404 = vpop.permute.xlu0 %1403
        %1405 = vrot.lane.b32.xlu0 %v1392, 113
        %v1406 = vpop.permute.xlu0 %1405
        %v1409 = vsel %vm850, %v1379, %v1404
        %v1410 = vsel %vm850, %v1380, %v1406
        %v1411 = vsub.f32 %v1401, %v1409
        %v1412 = vsub.f32 %v1402, %v1410
        %v1413 = vmul.f32 %v1411, 0.5
        %v1414 = vmul.f32 %v1412, 0.5
        %1415 = vrot.lane.b32.xlu0 %v1181, 16
        %v1416 = vpop.permute.xlu0 %1415
        %v1417 = vsel %vm824, %v1416, %v1181
        %1418 = vrot.lane.b32.xlu0 %v1182, 16
        %v1419 = vpop.permute.xlu0 %1418
        %v1420 = vsel %vm824, %v1419, %v1182
        %1421 = vrot.lane.b32.xlu0 %v1417, 16
        %v1422 = vpop.permute.xlu0 %1421
        %1423 = vrot.lane.b32.xlu0 %v1420, 16
        %v1424 = vpop.permute.xlu0 %1423
        %v1425 = vsel %vm824, %v1422, %v1181
        %v1426 = vsel %vm824, %v1424, %v1182
        %1429 = vrot.lane.b32.xlu0 %v1425, 113
        %v1430 = vpop.permute.xlu0 %1429
        %1431 = vrot.lane.b32.xlu0 %v1426, 113
        %v1432 = vpop.permute.xlu0 %1431
        %v1435 = vsel %vm850, %v1181, %v1430
        %v1436 = vsel %vm850, %v1182, %v1432
        %v1437 = vadd.f32 %v1435, %v1365
        %v1438 = vadd.f32 %v1436, %v1366
        %1439 = vrot.lane.b32.xlu0 %v1425, 127
        %v1440 = vpop.permute.xlu0 %1439
        %1441 = vrot.lane.b32.xlu0 %v1426, 127
        %v1442 = vpop.permute.xlu0 %1441
        %v1445 = vsel %vm838, %v1181, %v1440
        %v1446 = vsel %vm838, %v1182, %v1442
        %v1447 = vadd.f32 %v1437, %v1445
        %v1448 = vadd.f32 %v1438, %v1446
        %1449 = vrot.lane.b32.xlu0 %v1183, 16
        %v1450 = vpop.permute.xlu0 %1449
        %v1451 = vsel %vm824, %v1450, %v1183
        %1452 = vrot.lane.b32.xlu0 %v1451, 16
        %v1453 = vpop.permute.xlu0 %1452
        %v1454 = vsel %vm824, %v1453, %v1183
        %1456 = vrot.lane.b32.xlu0 %v1454, 113
        %v1457 = vpop.permute.xlu0 %1456
        %v1459 = vsel %vm633, %v1183, %v1457
        %v1460 = vmul.f32 %v1183, 2.0
        %v1461 = vadd.f32 %v1459, %v1460
        %1462 = vrot.lane.b32.xlu0 %v1454, 127
        %v1463 = vpop.permute.xlu0 %1462
        %v1465 = vsel %vm634, %v1183, %v1463
        %v1466 = vadd.f32 %v1461, %v1465
        %1467 = vrot.lane.b32.xlu0 %v1184, 16
        %v1468 = vpop.permute.xlu0 %1467
        %v1469 = vsel %vm824, %v1468, %v1184
        %1470 = vrot.lane.b32.xlu0 %v1469, 16
        %v1471 = vpop.permute.xlu0 %1470
        %v1472 = vsel %vm824, %v1471, %v1184
        %1474 = vrot.lane.b32.xlu0 %v1472, 113
        %v1475 = vpop.permute.xlu0 %1474
        %v1477 = vsel %vm633, %v1184, %v1475
        %v1478 = vmul.f32 %v1184, 2.0
        %v1479 = vadd.f32 %v1477, %v1478
        %1480 = vrot.lane.b32.xlu0 %v1472, 127
        %v1481 = vpop.permute.xlu0 %1480
        %v1483 = vsel %vm634, %v1184, %v1481
        %v1484 = vadd.f32 %v1479, %v1483
        %v1485 = vrot.slane %v1447, 1
        %v1486 = vrot.slane %v1448, 1
        %v1487 = vsel %vm809, %v1485, %v1486
        %v1488 = vsel %vm809, %v1486, %v1485
        %v1489 = vlaneseq
        %v1490 = vshrl.u32 %v1489, 7
        %v1491 = vsub.s32 0, %v1490
        %v1492 = vrot.slane %v1484, %v1491
        %v1493 = vsel %vm814, %v1492, %v1487
        %v1494 = vsel %vm815, %v1492, %v1488
        %v1495 = vrot.slane %v1447, 7
        %v1496 = vrot.slane %v1448, 7
        %v1497 = vsel %vm790, %v1495, %v1496
        %v1498 = vsel %vm790, %v1496, %v1495
        %v1499 = vlaneseq
        %v1500 = vshrl.u32 %v1499, 7
        %v1501 = vsub.s32 0, %v1500
        %v1502 = vrot.slane %v1466, %v1501
        %v1503 = vsel %vm795, %v1502, %v1498
        %v1504 = vsel %vm796, %v1502, %v1497
        %v1505 = vsub.f32 %v1493, %v1503
        %v1506 = vsub.f32 %v1494, %v1504
        %v1507 = vmul.f32 %v1505, 0.5
        %v1508 = vmul.f32 %v1506, 0.5
        %vm1509 = vcmp.ne.f32.partialorder %v1259, 0.0
        %vm1510 = vcmp.ne.f32.partialorder %v1260, 0.0
        %vm1511 = vmand %vm1509, %vm611
        %vm1512 = vmand %vm1510, %vm612
        %vm1513 = vcmp.ne.f32.partialorder %v1353, 0.0
        %vm1514 = vcmp.ne.f32.partialorder %v1354, 0.0
        %vm1515 = vmand %vm1513, %vm611
        %vm1516 = vmand %vm1514, %vm612
        %v1517 = vsub.f32 %v1259, %v1413
        %v1518 = vsub.f32 %v1260, %v1414
        %v1519 = vsub.f32 %v1353, %v1507
        %v1520 = vsub.f32 %v1354, %v1508
        %v1521 = vmul.f32 %v1517, %v1517
        %v1522 = vmul.f32 %v1518, %v1518
        %v1523 = vsel %vm1511, %v1521, 0.0
        %v1524 = vsel %vm1512, %v1522, 0.0
        %v1525 = vmul.f32 %v1519, %v1519
        %v1526 = vmul.f32 %v1520, %v1520
        %v1527 = vsel %vm1515, %v1525, 0.0
        %v1528 = vsel %vm1516, %v1526, 0.0
        %v1529 = vadd.f32 %v1523, %v1527
        %v1530 = vadd.f32 %v1524, %v1528
        %v1531 = vsel %vm1133, %v1529, 0.0
        %v1532 = vsel %vm1133, %v1530, 0.0
        %v1533 = vadd.f32 %v1531, %v1532
        %1534 = vadd.xlane.f32.xlu0 %v1533
        %v1535 = vpop.xlane.xlu0 %1534
        %v1536 = vrot.slane %v1535, 4
        %v1537 = vadd.f32 %v1535, %v1536
        %v1538 = vrot.slane %v1537, 2
        %v1539 = vadd.f32 %v1537, %v1538
        %v1540 = vrot.slane %v1539, 1
        %v1541 = vadd.f32 %v1539, %v1540
        %s1542 = vtos %v1541
        %s1543 = sadd.f32 %s1146, %s1542
        %v1544 = vsel %vm1511, 1, 0
        %v1545 = vsel %vm1512, 1, 0
        %v1546 = vcvt.s32.f32 %v1544
        %v1547 = vcvt.s32.f32 %v1545
        %v1548 = vsel %vm1133, %v1546, 0.0
        %v1549 = vsel %vm1133, %v1547, 0.0
        %v1550 = vadd.f32 %v1548, %v1549
        %1551 = vadd.xlane.f32.xlu0 %v1550
        %v1552 = vpop.xlane.xlu0 %1551
        %v1553 = vrot.slane %v1552, 4
        %v1554 = vadd.f32 %v1552, %v1553
        %v1555 = vrot.slane %v1554, 2
        %v1556 = vadd.f32 %v1554, %v1555
        %v1557 = vrot.slane %v1556, 1
        %v1558 = vadd.f32 %v1556, %v1557
        %s1559 = vtos %v1558
        %v1560 = vsel %vm1515, 1, 0
        %v1561 = vsel %vm1516, 1, 0
        %v1562 = vcvt.s32.f32 %v1560
        %v1563 = vcvt.s32.f32 %v1561
        %v1564 = vsel %vm1133, %v1562, 0.0
        %v1565 = vsel %vm1133, %v1563, 0.0
        %v1566 = vadd.f32 %v1564, %v1565
        %1567 = vadd.xlane.f32.xlu0 %v1566
        %v1568 = vpop.xlane.xlu0 %1567
        %v1569 = vrot.slane %v1568, 4
        %v1570 = vadd.f32 %v1568, %v1569
        %v1571 = vrot.slane %v1570, 2
        %v1572 = vadd.f32 %v1570, %v1571
        %v1573 = vrot.slane %v1572, 1
        %v1574 = vadd.f32 %v1572, %v1573
        %s1575 = vtos %v1574
        %s1576 = sadd.f32 %s1559, %s1575
        %s1577 = scvt.f32.s32.to.zero.pseudo %s1576
        %s1578 = sadd.s32 %s1180, %s1577
        %v1579 = vmul.f32 %v723, %v758
        %v1580 = vmul.f32 %v725, %v759
        %v1581 = vmul.f32 %v730, %v763
        %v1582 = vmul.f32 %v734, %v767
        %vm1583 = vcmp.eq.s32.totalorder %v609, 2
        %vm1584 = vcmp.eq.s32.totalorder %v610, 2
        %vm1585 = vmand %vm1583, %vm611
        %vm1586 = vmand %vm1584, %vm612
        %v1587 = vsel %vm1585, 1, 0
        %v1588 = vsel %vm1586, 1, 0
        %v1589 = vcvt.s32.f32 %v1587
        %v1590 = vcvt.s32.f32 %v1588
        %vm1591 = vcmp.eq.s32.totalorder %v618, 2
        %vm1592 = vmand %vm1591, %vm622
        %v1593 = vsel %vm1592, 1, 0
        %v1594 = vcvt.s32.f32 %v1593
        %vm1595 = vcmp.eq.s32.totalorder %v621, 2
        %vm1596 = vmand %vm1595, %vm623
        %v1597 = vsel %vm1596, 1, 0
        %v1598 = vcvt.s32.f32 %v1597
        %v1599 = vrot.slane %v1589, 7
        %v1600 = vrot.slane %v1590, 7
        %v1601 = vsel %vm790, %v1599, %v1600
        %v1602 = vsel %vm790, %v1600, %v1599
        %v1603 = vlaneseq
        %v1604 = vshrl.u32 %v1603, 7
        %v1605 = vsub.s32 0, %v1604
        %v1606 = vrot.slane %v1594, %v1605
        %v1607 = vsel %vm795, %v1606, %v1602
        %v1608 = vsel %vm796, %v1606, %v1601
        %v1609 = vmul.f32 %v1589, 2.0
        %v1610 = vmul.f32 %v1590, 2.0
        %v1611 = vadd.f32 %v1607, %v1609
        %v1612 = vadd.f32 %v1608, %v1610
        %v1613 = vrot.slane %v1589, 1
        %v1614 = vrot.slane %v1590, 1
        %v1615 = vsel %vm809, %v1613, %v1614
        %v1616 = vsel %vm809, %v1614, %v1613
        %v1617 = vlaneseq
        %v1618 = vshrl.u32 %v1617, 7
        %v1619 = vsub.s32 0, %v1618
        %v1620 = vrot.slane %v1598, %v1619
        %v1621 = vsel %vm814, %v1620, %v1615
        %v1622 = vsel %vm815, %v1620, %v1616
        %v1623 = vadd.f32 %v1611, %v1621
        %v1624 = vadd.f32 %v1612, %v1622
        %1625 = vrot.lane.b32.xlu0 %v1623, 16
        %v1626 = vpop.permute.xlu0 %1625
        %v1627 = vsel %vm824, %v1626, %v1623
        %1628 = vrot.lane.b32.xlu0 %v1624, 16
        %v1629 = vpop.permute.xlu0 %1628
        %v1630 = vsel %vm824, %v1629, %v1624
        %1631 = vrot.lane.b32.xlu0 %v1627, 16
        %v1632 = vpop.permute.xlu0 %1631
        %1633 = vrot.lane.b32.xlu0 %v1630, 16
        %v1634 = vpop.permute.xlu0 %1633
        %v1635 = vsel %vm824, %v1632, %v1623
        %v1636 = vsel %vm824, %v1634, %v1624
        %1639 = vrot.lane.b32.xlu0 %v1635, 127
        %v1640 = vpop.permute.xlu0 %1639
        %1641 = vrot.lane.b32.xlu0 %v1636, 127
        %v1642 = vpop.permute.xlu0 %1641
        %v1645 = vsel %vm838, %v1623, %v1640
        %v1646 = vsel %vm838, %v1624, %v1642
        %1647 = vrot.lane.b32.xlu0 %v1635, 113
        %v1648 = vpop.permute.xlu0 %1647
        %1649 = vrot.lane.b32.xlu0 %v1636, 113
        %v1650 = vpop.permute.xlu0 %1649
        %v1653 = vsel %vm850, %v1623, %v1648
        %v1654 = vsel %vm850, %v1624, %v1650
        %v1655 = vsub.f32 %v1645, %v1653
        %v1656 = vsub.f32 %v1646, %v1654
        %v1657 = vmul.f32 %v1655, 0.5
        %v1658 = vmul.f32 %v1656, 0.5
        %1659 = vrot.lane.b32.xlu0 %v1589, 16
        %v1660 = vpop.permute.xlu0 %1659
        %v1661 = vsel %vm824, %v1660, %v1589
        %1662 = vrot.lane.b32.xlu0 %v1590, 16
        %v1663 = vpop.permute.xlu0 %1662
        %v1664 = vsel %vm824, %v1663, %v1590
        %1665 = vrot.lane.b32.xlu0 %v1661, 16
        %v1666 = vpop.permute.xlu0 %1665
        %1667 = vrot.lane.b32.xlu0 %v1664, 16
        %v1668 = vpop.permute.xlu0 %1667
        %v1669 = vsel %vm824, %v1666, %v1589
        %v1670 = vsel %vm824, %v1668, %v1590
        %1673 = vrot.lane.b32.xlu0 %v1669, 113
        %v1674 = vpop.permute.xlu0 %1673
        %1675 = vrot.lane.b32.xlu0 %v1670, 113
        %v1676 = vpop.permute.xlu0 %1675
        %v1679 = vsel %vm850, %v1589, %v1674
        %v1680 = vsel %vm850, %v1590, %v1676
        %v1681 = vadd.f32 %v1679, %v1609
        %v1682 = vadd.f32 %v1680, %v1610
        %1683 = vrot.lane.b32.xlu0 %v1669, 127
        %v1684 = vpop.permute.xlu0 %1683
        %1685 = vrot.lane.b32.xlu0 %v1670, 127
        %v1686 = vpop.permute.xlu0 %1685
        %v1689 = vsel %vm838, %v1589, %v1684
        %v1690 = vsel %vm838, %v1590, %v1686
        %v1691 = vadd.f32 %v1681, %v1689
        %v1692 = vadd.f32 %v1682, %v1690
        %1693 = vrot.lane.b32.xlu0 %v1594, 16
        %v1694 = vpop.permute.xlu0 %1693
        %v1695 = vsel %vm824, %v1694, %v1594
        %1696 = vrot.lane.b32.xlu0 %v1695, 16
        %v1697 = vpop.permute.xlu0 %1696
        %v1698 = vsel %vm824, %v1697, %v1594
        %1700 = vrot.lane.b32.xlu0 %v1698, 113
        %v1701 = vpop.permute.xlu0 %1700
        %v1703 = vsel %vm633, %v1594, %v1701
        %v1704 = vmul.f32 %v1594, 2.0
        %v1705 = vadd.f32 %v1703, %v1704
        %1706 = vrot.lane.b32.xlu0 %v1698, 127
        %v1707 = vpop.permute.xlu0 %1706
        %v1709 = vsel %vm634, %v1594, %v1707
        %v1710 = vadd.f32 %v1705, %v1709
        %1711 = vrot.lane.b32.xlu0 %v1598, 16
        %v1712 = vpop.permute.xlu0 %1711
        %v1713 = vsel %vm824, %v1712, %v1598
        %1714 = vrot.lane.b32.xlu0 %v1713, 16
        %v1715 = vpop.permute.xlu0 %1714
        %v1716 = vsel %vm824, %v1715, %v1598
        %1718 = vrot.lane.b32.xlu0 %v1716, 113
        %v1719 = vpop.permute.xlu0 %1718
        %v1721 = vsel %vm633, %v1598, %v1719
        %v1722 = vmul.f32 %v1598, 2.0
        %v1723 = vadd.f32 %v1721, %v1722
        %1724 = vrot.lane.b32.xlu0 %v1716, 127
        %v1725 = vpop.permute.xlu0 %1724
        %v1727 = vsel %vm634, %v1598, %v1725
        %v1728 = vadd.f32 %v1723, %v1727
        %v1729 = vrot.slane %v1691, 1
        %v1730 = vrot.slane %v1692, 1
        %v1731 = vsel %vm809, %v1729, %v1730
        %v1732 = vsel %vm809, %v1730, %v1729
        %v1733 = vlaneseq
        %v1734 = vshrl.u32 %v1733, 7
        %v1735 = vsub.s32 0, %v1734
        %v1736 = vrot.slane %v1728, %v1735
        %v1737 = vsel %vm814, %v1736, %v1731
        %v1738 = vsel %vm815, %v1736, %v1732
        %v1739 = vrot.slane %v1691, 7
        %v1740 = vrot.slane %v1692, 7
        %v1741 = vsel %vm790, %v1739, %v1740
        %v1742 = vsel %vm790, %v1740, %v1739
        %v1743 = vlaneseq
        %v1744 = vshrl.u32 %v1743, 7
        %v1745 = vsub.s32 0, %v1744
        %v1746 = vrot.slane %v1710, %v1745
        %v1747 = vsel %vm795, %v1746, %v1742
        %v1748 = vsel %vm796, %v1746, %v1741
        %v1749 = vsub.f32 %v1737, %v1747
        %v1750 = vsub.f32 %v1738, %v1748
        %v1751 = vmul.f32 %v1749, 0.5
        %v1752 = vmul.f32 %v1750, 0.5
        %v1753 = vrot.slane %v1579, 7
        %v1754 = vrot.slane %v1580, 7
        %v1755 = vsel %vm790, %v1753, %v1754
        %v1756 = vsel %vm790, %v1754, %v1753
        %v1757 = vlaneseq
        %v1758 = vshrl.u32 %v1757, 7
        %v1759 = vsub.s32 0, %v1758
        %v1760 = vrot.slane %v1581, %v1759
        %v1761 = vsel %vm795, %v1760, %v1756
        %v1762 = vsel %vm796, %v1760, %v1755
        %v1763 = vmul.f32 %v1579, 2.0
        %v1764 = vmul.f32 %v1580, 2.0
        %v1765 = vadd.f32 %v1761, %v1763
        %v1766 = vadd.f32 %v1762, %v1764
        %v1767 = vrot.slane %v1579, 1
        %v1768 = vrot.slane %v1580, 1
        %v1769 = vsel %vm809, %v1767, %v1768
        %v1770 = vsel %vm809, %v1768, %v1767
        %v1771 = vlaneseq
        %v1772 = vshrl.u32 %v1771, 7
        %v1773 = vsub.s32 0, %v1772
        %v1774 = vrot.slane %v1582, %v1773
        %v1775 = vsel %vm814, %v1774, %v1769
        %v1776 = vsel %vm815, %v1774, %v1770
        %v1777 = vadd.f32 %v1765, %v1775
        %v1778 = vadd.f32 %v1766, %v1776
        %1779 = vrot.lane.b32.xlu0 %v1777, 16
        %v1780 = vpop.permute.xlu0 %1779
        %v1781 = vsel %vm824, %v1780, %v1777
        %1782 = vrot.lane.b32.xlu0 %v1778, 16
        %v1783 = vpop.permute.xlu0 %1782
        %v1784 = vsel %vm824, %v1783, %v1778
        %1785 = vrot.lane.b32.xlu0 %v1781, 16
        %v1786 = vpop.permute.xlu0 %1785
        %1787 = vrot.lane.b32.xlu0 %v1784, 16
        %v1788 = vpop.permute.xlu0 %1787
        %v1789 = vsel %vm824, %v1786, %v1777
        %v1790 = vsel %vm824, %v1788, %v1778
        %1793 = vrot.lane.b32.xlu0 %v1789, 127
        %v1794 = vpop.permute.xlu0 %1793
        %1795 = vrot.lane.b32.xlu0 %v1790, 127
        %v1796 = vpop.permute.xlu0 %1795
        %v1799 = vsel %vm838, %v1777, %v1794
        %v1800 = vsel %vm838, %v1778, %v1796
        %1801 = vrot.lane.b32.xlu0 %v1789, 113
        %v1802 = vpop.permute.xlu0 %1801
        %1803 = vrot.lane.b32.xlu0 %v1790, 113
        %v1804 = vpop.permute.xlu0 %1803
        %v1807 = vsel %vm850, %v1777, %v1802
        %v1808 = vsel %vm850, %v1778, %v1804
        %v1809 = vsub.f32 %v1799, %v1807
        %v1810 = vsub.f32 %v1800, %v1808
        %v1811 = vmul.f32 %v1809, 0.5
        %v1812 = vmul.f32 %v1810, 0.5
        %1813 = vrot.lane.b32.xlu0 %v1579, 16
        %v1814 = vpop.permute.xlu0 %1813
        %v1815 = vsel %vm824, %v1814, %v1579
        %1816 = vrot.lane.b32.xlu0 %v1580, 16
        %v1817 = vpop.permute.xlu0 %1816
        %v1818 = vsel %vm824, %v1817, %v1580
        %1819 = vrot.lane.b32.xlu0 %v1815, 16
        %v1820 = vpop.permute.xlu0 %1819
        %1821 = vrot.lane.b32.xlu0 %v1818, 16
        %v1822 = vpop.permute.xlu0 %1821
        %v1823 = vsel %vm824, %v1820, %v1579
        %v1824 = vsel %vm824, %v1822, %v1580
        %1827 = vrot.lane.b32.xlu0 %v1823, 113
        %v1828 = vpop.permute.xlu0 %1827
        %1829 = vrot.lane.b32.xlu0 %v1824, 113
        %v1830 = vpop.permute.xlu0 %1829
        %v1833 = vsel %vm850, %v1579, %v1828
        %v1834 = vsel %vm850, %v1580, %v1830
        %v1835 = vadd.f32 %v1833, %v1763
        %v1836 = vadd.f32 %v1834, %v1764
        %1837 = vrot.lane.b32.xlu0 %v1823, 127
        %v1838 = vpop.permute.xlu0 %1837
        %1839 = vrot.lane.b32.xlu0 %v1824, 127
        %v1840 = vpop.permute.xlu0 %1839
        %v1843 = vsel %vm838, %v1579, %v1838
        %v1844 = vsel %vm838, %v1580, %v1840
        %v1845 = vadd.f32 %v1835, %v1843
        %v1846 = vadd.f32 %v1836, %v1844
        %1847 = vrot.lane.b32.xlu0 %v1581, 16
        %v1848 = vpop.permute.xlu0 %1847
        %v1849 = vsel %vm824, %v1848, %v1581
        %1850 = vrot.lane.b32.xlu0 %v1849, 16
        %v1851 = vpop.permute.xlu0 %1850
        %v1852 = vsel %vm824, %v1851, %v1581
        %1854 = vrot.lane.b32.xlu0 %v1852, 113
        %v1855 = vpop.permute.xlu0 %1854
        %v1857 = vsel %vm633, %v1581, %v1855
        %v1858 = vmul.f32 %v1581, 2.0
        %v1859 = vadd.f32 %v1857, %v1858
        %1860 = vrot.lane.b32.xlu0 %v1852, 127
        %v1861 = vpop.permute.xlu0 %1860
        %v1863 = vsel %vm634, %v1581, %v1861
        %v1864 = vadd.f32 %v1859, %v1863
        %1865 = vrot.lane.b32.xlu0 %v1582, 16
        %v1866 = vpop.permute.xlu0 %1865
        %v1867 = vsel %vm824, %v1866, %v1582
        %1868 = vrot.lane.b32.xlu0 %v1867, 16
        %v1869 = vpop.permute.xlu0 %1868
        %v1870 = vsel %vm824, %v1869, %v1582
        %1872 = vrot.lane.b32.xlu0 %v1870, 113
        %v1873 = vpop.permute.xlu0 %1872
        %v1875 = vsel %vm633, %v1582, %v1873
        %v1876 = vmul.f32 %v1582, 2.0
        %v1877 = vadd.f32 %v1875, %v1876
        %1878 = vrot.lane.b32.xlu0 %v1870, 127
        %v1879 = vpop.permute.xlu0 %1878
        %v1881 = vsel %vm634, %v1582, %v1879
        %v1882 = vadd.f32 %v1877, %v1881
        %v1883 = vrot.slane %v1845, 1
        %v1884 = vrot.slane %v1846, 1
        %v1885 = vsel %vm809, %v1883, %v1884
        %v1886 = vsel %vm809, %v1884, %v1883
        %v1887 = vlaneseq
        %v1888 = vshrl.u32 %v1887, 7
        %v1889 = vsub.s32 0, %v1888
        %v1890 = vrot.slane %v1882, %v1889
        %v1891 = vsel %vm814, %v1890, %v1885
        %v1892 = vsel %vm815, %v1890, %v1886
        %v1893 = vrot.slane %v1845, 7
        %v1894 = vrot.slane %v1846, 7
        %v1895 = vsel %vm790, %v1893, %v1894
        %v1896 = vsel %vm790, %v1894, %v1893
        %v1897 = vlaneseq
        %v1898 = vshrl.u32 %v1897, 7
        %v1899 = vsub.s32 0, %v1898
        %v1900 = vrot.slane %v1864, %v1899
        %v1901 = vsel %vm795, %v1900, %v1896
        %v1902 = vsel %vm796, %v1900, %v1895
        %v1903 = vsub.f32 %v1891, %v1901
        %v1904 = vsub.f32 %v1892, %v1902
        %v1905 = vmul.f32 %v1903, 0.5
        %v1906 = vmul.f32 %v1904, 0.5
        %vm1907 = vcmp.ne.f32.partialorder %v1657, 0.0
        %vm1908 = vcmp.ne.f32.partialorder %v1658, 0.0
        %vm1909 = vmand %vm1907, %vm611
        %vm1910 = vmand %vm1908, %vm612
        %vm1911 = vcmp.ne.f32.partialorder %v1751, 0.0
        %vm1912 = vcmp.ne.f32.partialorder %v1752, 0.0
        %vm1913 = vmand %vm1911, %vm611
        %vm1914 = vmand %vm1912, %vm612
        %v1915 = vsub.f32 %v1657, %v1811
        %v1916 = vsub.f32 %v1658, %v1812
        %v1917 = vsub.f32 %v1751, %v1905
        %v1918 = vsub.f32 %v1752, %v1906
        %v1919 = vmul.f32 %v1915, %v1915
        %v1920 = vmul.f32 %v1916, %v1916
        %v1921 = vsel %vm1909, %v1919, 0.0
        %v1922 = vsel %vm1910, %v1920, 0.0
        %v1923 = vmul.f32 %v1917, %v1917
        %v1924 = vmul.f32 %v1918, %v1918
        %v1925 = vsel %vm1913, %v1923, 0.0
        %v1926 = vsel %vm1914, %v1924, 0.0
        %v1927 = vadd.f32 %v1921, %v1925
        %v1928 = vadd.f32 %v1922, %v1926
        %v1929 = vsel %vm1133, %v1927, 0.0
        %v1930 = vsel %vm1133, %v1928, 0.0
        %v1931 = vadd.f32 %v1929, %v1930
        %1932 = vadd.xlane.f32.xlu0 %v1931
        %v1933 = vpop.xlane.xlu0 %1932
        %v1934 = vrot.slane %v1933, 4
        %v1935 = vadd.f32 %v1933, %v1934
        %v1936 = vrot.slane %v1935, 2
        %v1937 = vadd.f32 %v1935, %v1936
        %v1938 = vrot.slane %v1937, 1
        %v1939 = vadd.f32 %v1937, %v1938
        %s1940 = vtos %v1939
        %s1941 = sadd.f32 %s1543, %s1940
        %v1942 = vsel %vm1909, 1, 0
        %v1943 = vsel %vm1910, 1, 0
        %v1944 = vcvt.s32.f32 %v1942
        %v1945 = vcvt.s32.f32 %v1943
        %v1946 = vsel %vm1133, %v1944, 0.0
        %v1947 = vsel %vm1133, %v1945, 0.0
        %v1948 = vadd.f32 %v1946, %v1947
        %1949 = vadd.xlane.f32.xlu0 %v1948
        %v1950 = vpop.xlane.xlu0 %1949
        %v1951 = vrot.slane %v1950, 4
        %v1952 = vadd.f32 %v1950, %v1951
        %v1953 = vrot.slane %v1952, 2
        %v1954 = vadd.f32 %v1952, %v1953
        %v1955 = vrot.slane %v1954, 1
        %v1956 = vadd.f32 %v1954, %v1955
        %s1957 = vtos %v1956
        %v1958 = vsel %vm1913, 1, 0
        %v1959 = vsel %vm1914, 1, 0
        %v1960 = vcvt.s32.f32 %v1958
        %v1961 = vcvt.s32.f32 %v1959
        %v1962 = vsel %vm1133, %v1960, 0.0
        %v1963 = vsel %vm1133, %v1961, 0.0
        %v1964 = vadd.f32 %v1962, %v1963
        %1965 = vadd.xlane.f32.xlu0 %v1964
        %v1966 = vpop.xlane.xlu0 %1965
        %v1967 = vrot.slane %v1966, 4
        %v1968 = vadd.f32 %v1966, %v1967
        %v1969 = vrot.slane %v1968, 2
        %v1970 = vadd.f32 %v1968, %v1969
        %v1971 = vrot.slane %v1970, 1
        %v1972 = vadd.f32 %v1970, %v1971
        %s1973 = vtos %v1972
        %s1974 = sadd.f32 %s1957, %s1973
        %s1975 = scvt.f32.s32.to.zero.pseudo %s1974
        %s1976 = sadd.s32 %s1578, %s1975
        %v1977 = vmul.f32 %v739, %v758
        %v1978 = vmul.f32 %v741, %v759
        %v1979 = vmul.f32 %v746, %v763
        %v1980 = vmul.f32 %v750, %v767
        %vm1981 = vcmp.eq.s32.totalorder %v609, 3
        %vm1982 = vcmp.eq.s32.totalorder %v610, 3
        %vm1983 = vmand %vm1981, %vm611
        %vm1984 = vmand %vm1982, %vm612
        %v1985 = vsel %vm1983, 1, 0
        %v1986 = vsel %vm1984, 1, 0
        %v1987 = vcvt.s32.f32 %v1985
        %v1988 = vcvt.s32.f32 %v1986
        %vm1989 = vcmp.eq.s32.totalorder %v618, 3
        %vm1990 = vmand %vm1989, %vm622
        %v1991 = vsel %vm1990, 1, 0
        %v1992 = vcvt.s32.f32 %v1991
        %vm1993 = vcmp.eq.s32.totalorder %v621, 3
        %vm1994 = vmand %vm1993, %vm623
        %v1995 = vsel %vm1994, 1, 0
        %v1996 = vcvt.s32.f32 %v1995
        %v1997 = vrot.slane %v1987, 7
        %v1998 = vrot.slane %v1988, 7
        %v1999 = vsel %vm790, %v1997, %v1998
        %v2000 = vsel %vm790, %v1998, %v1997
        %v2001 = vlaneseq
        %v2002 = vshrl.u32 %v2001, 7
        %v2003 = vsub.s32 0, %v2002
        %v2004 = vrot.slane %v1992, %v2003
        %v2005 = vsel %vm795, %v2004, %v2000
        %v2006 = vsel %vm796, %v2004, %v1999
        %v2007 = vmul.f32 %v1987, 2.0
        %v2008 = vmul.f32 %v1988, 2.0
        %v2009 = vadd.f32 %v2005, %v2007
        %v2010 = vadd.f32 %v2006, %v2008
        %v2011 = vrot.slane %v1987, 1
        %v2012 = vrot.slane %v1988, 1
        %v2013 = vsel %vm809, %v2011, %v2012
        %v2014 = vsel %vm809, %v2012, %v2011
        %v2015 = vlaneseq
        %v2016 = vshrl.u32 %v2015, 7
        %v2017 = vsub.s32 0, %v2016
        %v2018 = vrot.slane %v1996, %v2017
        %v2019 = vsel %vm814, %v2018, %v2013
        %v2020 = vsel %vm815, %v2018, %v2014
        %v2021 = vadd.f32 %v2009, %v2019
        %v2022 = vadd.f32 %v2010, %v2020
        %2023 = vrot.lane.b32.xlu0 %v2021, 16
        %v2024 = vpop.permute.xlu0 %2023
        %v2025 = vsel %vm824, %v2024, %v2021
        %2026 = vrot.lane.b32.xlu0 %v2022, 16
        %v2027 = vpop.permute.xlu0 %2026
        %v2028 = vsel %vm824, %v2027, %v2022
        %2029 = vrot.lane.b32.xlu0 %v2025, 16
        %v2030 = vpop.permute.xlu0 %2029
        %2031 = vrot.lane.b32.xlu0 %v2028, 16
        %v2032 = vpop.permute.xlu0 %2031
        %v2033 = vsel %vm824, %v2030, %v2021
        %v2034 = vsel %vm824, %v2032, %v2022
        %2037 = vrot.lane.b32.xlu0 %v2033, 127
        %v2038 = vpop.permute.xlu0 %2037
        %2039 = vrot.lane.b32.xlu0 %v2034, 127
        %v2040 = vpop.permute.xlu0 %2039
        %v2043 = vsel %vm838, %v2021, %v2038
        %v2044 = vsel %vm838, %v2022, %v2040
        %2045 = vrot.lane.b32.xlu0 %v2033, 113
        %v2046 = vpop.permute.xlu0 %2045
        %2047 = vrot.lane.b32.xlu0 %v2034, 113
        %v2048 = vpop.permute.xlu0 %2047
        %v2051 = vsel %vm850, %v2021, %v2046
        %v2052 = vsel %vm850, %v2022, %v2048
        %v2053 = vsub.f32 %v2043, %v2051
        %v2054 = vsub.f32 %v2044, %v2052
        %v2055 = vmul.f32 %v2053, 0.5
        %v2056 = vmul.f32 %v2054, 0.5
        %2057 = vrot.lane.b32.xlu0 %v1987, 16
        %v2058 = vpop.permute.xlu0 %2057
        %v2059 = vsel %vm824, %v2058, %v1987
        %2060 = vrot.lane.b32.xlu0 %v1988, 16
        %v2061 = vpop.permute.xlu0 %2060
        %v2062 = vsel %vm824, %v2061, %v1988
        %2063 = vrot.lane.b32.xlu0 %v2059, 16
        %v2064 = vpop.permute.xlu0 %2063
        %2065 = vrot.lane.b32.xlu0 %v2062, 16
        %v2066 = vpop.permute.xlu0 %2065
        %v2067 = vsel %vm824, %v2064, %v1987
        %v2068 = vsel %vm824, %v2066, %v1988
        %2071 = vrot.lane.b32.xlu0 %v2067, 113
        %v2072 = vpop.permute.xlu0 %2071
        %2073 = vrot.lane.b32.xlu0 %v2068, 113
        %v2074 = vpop.permute.xlu0 %2073
        %v2077 = vsel %vm850, %v1987, %v2072
        %v2078 = vsel %vm850, %v1988, %v2074
        %v2079 = vadd.f32 %v2077, %v2007
        %v2080 = vadd.f32 %v2078, %v2008
        %2081 = vrot.lane.b32.xlu0 %v2067, 127
        %v2082 = vpop.permute.xlu0 %2081
        %2083 = vrot.lane.b32.xlu0 %v2068, 127
        %v2084 = vpop.permute.xlu0 %2083
        %v2087 = vsel %vm838, %v1987, %v2082
        %v2088 = vsel %vm838, %v1988, %v2084
        %v2089 = vadd.f32 %v2079, %v2087
        %v2090 = vadd.f32 %v2080, %v2088
        %2091 = vrot.lane.b32.xlu0 %v1992, 16
        %v2092 = vpop.permute.xlu0 %2091
        %v2093 = vsel %vm824, %v2092, %v1992
        %2094 = vrot.lane.b32.xlu0 %v2093, 16
        %v2095 = vpop.permute.xlu0 %2094
        %v2096 = vsel %vm824, %v2095, %v1992
        %2098 = vrot.lane.b32.xlu0 %v2096, 113
        %v2099 = vpop.permute.xlu0 %2098
        %v2101 = vsel %vm633, %v1992, %v2099
        %v2102 = vmul.f32 %v1992, 2.0
        %v2103 = vadd.f32 %v2101, %v2102
        %2104 = vrot.lane.b32.xlu0 %v2096, 127
        %v2105 = vpop.permute.xlu0 %2104
        %v2107 = vsel %vm634, %v1992, %v2105
        %v2108 = vadd.f32 %v2103, %v2107
        %2109 = vrot.lane.b32.xlu0 %v1996, 16
        %v2110 = vpop.permute.xlu0 %2109
        %v2111 = vsel %vm824, %v2110, %v1996
        %2112 = vrot.lane.b32.xlu0 %v2111, 16
        %v2113 = vpop.permute.xlu0 %2112
        %v2114 = vsel %vm824, %v2113, %v1996
        %2116 = vrot.lane.b32.xlu0 %v2114, 113
        %v2117 = vpop.permute.xlu0 %2116
        %v2119 = vsel %vm633, %v1996, %v2117
        %v2120 = vmul.f32 %v1996, 2.0
        %v2121 = vadd.f32 %v2119, %v2120
        %2122 = vrot.lane.b32.xlu0 %v2114, 127
        %v2123 = vpop.permute.xlu0 %2122
        %v2125 = vsel %vm634, %v1996, %v2123
        %v2126 = vadd.f32 %v2121, %v2125
        %v2127 = vrot.slane %v2089, 1
        %v2128 = vrot.slane %v2090, 1
        %v2129 = vsel %vm809, %v2127, %v2128
        %v2130 = vsel %vm809, %v2128, %v2127
        %v2131 = vlaneseq
        %v2132 = vshrl.u32 %v2131, 7
        %v2133 = vsub.s32 0, %v2132
        %v2134 = vrot.slane %v2126, %v2133
        %v2135 = vsel %vm814, %v2134, %v2129
        %v2136 = vsel %vm815, %v2134, %v2130
        %v2137 = vrot.slane %v2089, 7
        %v2138 = vrot.slane %v2090, 7
        %v2139 = vsel %vm790, %v2137, %v2138
        %v2140 = vsel %vm790, %v2138, %v2137
        %v2141 = vlaneseq
        %v2142 = vshrl.u32 %v2141, 7
        %v2143 = vsub.s32 0, %v2142
        %v2144 = vrot.slane %v2108, %v2143
        %v2145 = vsel %vm795, %v2144, %v2140
        %v2146 = vsel %vm796, %v2144, %v2139
        %v2147 = vsub.f32 %v2135, %v2145
        %v2148 = vsub.f32 %v2136, %v2146
        %v2149 = vmul.f32 %v2147, 0.5
        %v2150 = vmul.f32 %v2148, 0.5
        %v2151 = vrot.slane %v1977, 7
        %v2152 = vrot.slane %v1978, 7
        %v2153 = vsel %vm790, %v2151, %v2152
        %v2154 = vsel %vm790, %v2152, %v2151
        %v2155 = vlaneseq
        %v2156 = vshrl.u32 %v2155, 7
        %v2157 = vsub.s32 0, %v2156
        %v2158 = vrot.slane %v1979, %v2157
        %v2159 = vsel %vm795, %v2158, %v2154
        %v2160 = vsel %vm796, %v2158, %v2153
        %v2161 = vmul.f32 %v1977, 2.0
        %v2162 = vmul.f32 %v1978, 2.0
        %v2163 = vadd.f32 %v2159, %v2161
        %v2164 = vadd.f32 %v2160, %v2162
        %v2165 = vrot.slane %v1977, 1
        %v2166 = vrot.slane %v1978, 1
        %v2167 = vsel %vm809, %v2165, %v2166
        %v2168 = vsel %vm809, %v2166, %v2165
        %v2169 = vlaneseq
        %v2170 = vshrl.u32 %v2169, 7
        %v2171 = vsub.s32 0, %v2170
        %v2172 = vrot.slane %v1980, %v2171
        %v2173 = vsel %vm814, %v2172, %v2167
        %v2174 = vsel %vm815, %v2172, %v2168
        %v2175 = vadd.f32 %v2163, %v2173
        %v2176 = vadd.f32 %v2164, %v2174
        %2177 = vrot.lane.b32.xlu0 %v2175, 16
        %v2178 = vpop.permute.xlu0 %2177
        %v2179 = vsel %vm824, %v2178, %v2175
        %2180 = vrot.lane.b32.xlu0 %v2176, 16
        %v2181 = vpop.permute.xlu0 %2180
        %v2182 = vsel %vm824, %v2181, %v2176
        %2183 = vrot.lane.b32.xlu0 %v2179, 16
        %v2184 = vpop.permute.xlu0 %2183
        %2185 = vrot.lane.b32.xlu0 %v2182, 16
        %v2186 = vpop.permute.xlu0 %2185
        %v2187 = vsel %vm824, %v2184, %v2175
        %v2188 = vsel %vm824, %v2186, %v2176
        %2191 = vrot.lane.b32.xlu0 %v2187, 127
        %v2192 = vpop.permute.xlu0 %2191
        %2193 = vrot.lane.b32.xlu0 %v2188, 127
        %v2194 = vpop.permute.xlu0 %2193
        %v2197 = vsel %vm838, %v2175, %v2192
        %v2198 = vsel %vm838, %v2176, %v2194
        %2199 = vrot.lane.b32.xlu0 %v2187, 113
        %v2200 = vpop.permute.xlu0 %2199
        %2201 = vrot.lane.b32.xlu0 %v2188, 113
        %v2202 = vpop.permute.xlu0 %2201
        %v2205 = vsel %vm850, %v2175, %v2200
        %v2206 = vsel %vm850, %v2176, %v2202
        %v2207 = vsub.f32 %v2197, %v2205
        %v2208 = vsub.f32 %v2198, %v2206
        %v2209 = vmul.f32 %v2207, 0.5
        %v2210 = vmul.f32 %v2208, 0.5
        %2211 = vrot.lane.b32.xlu0 %v1977, 16
        %v2212 = vpop.permute.xlu0 %2211
        %v2213 = vsel %vm824, %v2212, %v1977
        %2214 = vrot.lane.b32.xlu0 %v1978, 16
        %v2215 = vpop.permute.xlu0 %2214
        %v2216 = vsel %vm824, %v2215, %v1978
        %2217 = vrot.lane.b32.xlu0 %v2213, 16
        %v2218 = vpop.permute.xlu0 %2217
        %2219 = vrot.lane.b32.xlu0 %v2216, 16
        %v2220 = vpop.permute.xlu0 %2219
        %v2221 = vsel %vm824, %v2218, %v1977
        %v2222 = vsel %vm824, %v2220, %v1978
        %2225 = vrot.lane.b32.xlu0 %v2221, 113
        %v2226 = vpop.permute.xlu0 %2225
        %2227 = vrot.lane.b32.xlu0 %v2222, 113
        %v2228 = vpop.permute.xlu0 %2227
        %v2231 = vsel %vm850, %v1977, %v2226
        %v2232 = vsel %vm850, %v1978, %v2228
        %v2233 = vadd.f32 %v2231, %v2161
        %v2234 = vadd.f32 %v2232, %v2162
        %2235 = vrot.lane.b32.xlu0 %v2221, 127
        %v2236 = vpop.permute.xlu0 %2235
        %2237 = vrot.lane.b32.xlu0 %v2222, 127
        %v2238 = vpop.permute.xlu0 %2237
        %v2241 = vsel %vm838, %v1977, %v2236
        %v2242 = vsel %vm838, %v1978, %v2238
        %v2243 = vadd.f32 %v2233, %v2241
        %v2244 = vadd.f32 %v2234, %v2242
        %2245 = vrot.lane.b32.xlu0 %v1979, 16
        %v2246 = vpop.permute.xlu0 %2245
        %v2247 = vsel %vm824, %v2246, %v1979
        %2248 = vrot.lane.b32.xlu0 %v2247, 16
        %v2249 = vpop.permute.xlu0 %2248
        %v2250 = vsel %vm824, %v2249, %v1979
        %2252 = vrot.lane.b32.xlu0 %v2250, 113
        %v2253 = vpop.permute.xlu0 %2252
        %v2255 = vsel %vm633, %v1979, %v2253
        %v2256 = vmul.f32 %v1979, 2.0
        %v2257 = vadd.f32 %v2255, %v2256
        %2258 = vrot.lane.b32.xlu0 %v2250, 127
        %v2259 = vpop.permute.xlu0 %2258
        %v2261 = vsel %vm634, %v1979, %v2259
        %v2262 = vadd.f32 %v2257, %v2261
        %2263 = vrot.lane.b32.xlu0 %v1980, 16
        %v2264 = vpop.permute.xlu0 %2263
        %v2265 = vsel %vm824, %v2264, %v1980
        %2266 = vrot.lane.b32.xlu0 %v2265, 16
        %v2267 = vpop.permute.xlu0 %2266
        %v2268 = vsel %vm824, %v2267, %v1980
        %2270 = vrot.lane.b32.xlu0 %v2268, 113
        %v2271 = vpop.permute.xlu0 %2270
        %v2273 = vsel %vm633, %v1980, %v2271
        %v2274 = vmul.f32 %v1980, 2.0
        %v2275 = vadd.f32 %v2273, %v2274
        %2276 = vrot.lane.b32.xlu0 %v2268, 127
        %v2277 = vpop.permute.xlu0 %2276
        %v2279 = vsel %vm634, %v1980, %v2277
        %v2280 = vadd.f32 %v2275, %v2279
        %v2281 = vrot.slane %v2243, 1
        %v2282 = vrot.slane %v2244, 1
        %v2283 = vsel %vm809, %v2281, %v2282
        %v2284 = vsel %vm809, %v2282, %v2281
        %v2285 = vlaneseq
        %v2286 = vshrl.u32 %v2285, 7
        %v2287 = vsub.s32 0, %v2286
        %v2288 = vrot.slane %v2280, %v2287
        %v2289 = vsel %vm814, %v2288, %v2283
        %v2290 = vsel %vm815, %v2288, %v2284
        %v2291 = vrot.slane %v2243, 7
        %v2292 = vrot.slane %v2244, 7
        %v2293 = vsel %vm790, %v2291, %v2292
        %v2294 = vsel %vm790, %v2292, %v2291
        %v2295 = vlaneseq
        %v2296 = vshrl.u32 %v2295, 7
        %v2297 = vsub.s32 0, %v2296
        %v2298 = vrot.slane %v2262, %v2297
        %v2299 = vsel %vm795, %v2298, %v2294
        %v2300 = vsel %vm796, %v2298, %v2293
        %v2301 = vsub.f32 %v2289, %v2299
        %v2302 = vsub.f32 %v2290, %v2300
        %v2303 = vmul.f32 %v2301, 0.5
        %v2304 = vmul.f32 %v2302, 0.5
        %vm2305 = vcmp.ne.f32.partialorder %v2055, 0.0
        %vm2306 = vcmp.ne.f32.partialorder %v2056, 0.0
        %vm2307 = vmand %vm2305, %vm611
        %vm2308 = vmand %vm2306, %vm612
        %vm2309 = vcmp.ne.f32.partialorder %v2149, 0.0
        %vm2310 = vcmp.ne.f32.partialorder %v2150, 0.0
        %vm2311 = vmand %vm2309, %vm611
        %vm2312 = vmand %vm2310, %vm612
        %v2313 = vsub.f32 %v2055, %v2209
        %v2314 = vsub.f32 %v2056, %v2210
        %v2315 = vsub.f32 %v2149, %v2303
        %v2316 = vsub.f32 %v2150, %v2304
        %v2317 = vmul.f32 %v2313, %v2313
        %v2318 = vmul.f32 %v2314, %v2314
        %v2319 = vsel %vm2307, %v2317, 0.0
        %v2320 = vsel %vm2308, %v2318, 0.0
        %v2321 = vmul.f32 %v2315, %v2315
        %v2322 = vmul.f32 %v2316, %v2316
        %v2323 = vsel %vm2311, %v2321, 0.0
        %v2324 = vsel %vm2312, %v2322, 0.0
        %v2325 = vadd.f32 %v2319, %v2323
        %v2326 = vadd.f32 %v2320, %v2324
        %v2327 = vsel %vm1133, %v2325, 0.0
        %v2328 = vsel %vm1133, %v2326, 0.0
        %v2329 = vadd.f32 %v2327, %v2328
        %2330 = vadd.xlane.f32.xlu0 %v2329
        %v2331 = vpop.xlane.xlu0 %2330
        %v2332 = vrot.slane %v2331, 4
        %v2333 = vadd.f32 %v2331, %v2332
        %v2334 = vrot.slane %v2333, 2
        %v2335 = vadd.f32 %v2333, %v2334
        %v2336 = vrot.slane %v2335, 1
        %v2337 = vadd.f32 %v2335, %v2336
        %s2338 = vtos %v2337
        %s2339 = sadd.f32 %s1941, %s2338
        %v2340 = vsel %vm2307, 1, 0
        %v2341 = vsel %vm2308, 1, 0
        %v2342 = vcvt.s32.f32 %v2340
        %v2343 = vcvt.s32.f32 %v2341
        %v2344 = vsel %vm1133, %v2342, 0.0
        %v2345 = vsel %vm1133, %v2343, 0.0
        %v2346 = vadd.f32 %v2344, %v2345
        %2347 = vadd.xlane.f32.xlu0 %v2346
        %v2348 = vpop.xlane.xlu0 %2347
        %v2349 = vrot.slane %v2348, 4
        %v2350 = vadd.f32 %v2348, %v2349
        %v2351 = vrot.slane %v2350, 2
        %v2352 = vadd.f32 %v2350, %v2351
        %v2353 = vrot.slane %v2352, 1
        %v2354 = vadd.f32 %v2352, %v2353
        %s2355 = vtos %v2354
        %v2356 = vsel %vm2311, 1, 0
        %v2357 = vsel %vm2312, 1, 0
        %v2358 = vcvt.s32.f32 %v2356
        %v2359 = vcvt.s32.f32 %v2357
        %v2360 = vsel %vm1133, %v2358, 0.0
        %v2361 = vsel %vm1133, %v2359, 0.0
        %v2362 = vadd.f32 %v2360, %v2361
        %2363 = vadd.xlane.f32.xlu0 %v2362
        %v2364 = vpop.xlane.xlu0 %2363
        %v2365 = vrot.slane %v2364, 4
        %v2366 = vadd.f32 %v2364, %v2365
        %v2367 = vrot.slane %v2366, 2
        %v2368 = vadd.f32 %v2366, %v2367
        %v2369 = vrot.slane %v2368, 1
        %v2370 = vadd.f32 %v2368, %v2369
        %s2371 = vtos %v2370
        %s2372 = sadd.f32 %s2355, %s2371
        %s2373 = scvt.f32.s32.to.zero.pseudo %s2372
        %s2374 = sadd.s32 %s1976, %s2373
        %v2375 = vstv %s2339
        %vm2376 = vcmask 0
        %2377 = vst.msk [vmem:[%s601] sm:$0x1] %vm2376, %v2375
        %v2378 = vstv %s2374
        %2379 = vst.msk [vmem:[%s607] sm:$0x1] %vm2376, %v2378
        %p2380 = scmp.lt.s32.totalorder %s35, 1
        %s2381 = scalar_select %p2380, %s35, 1
        %p2382 = scmp.lt.s32.totalorder %s36, 0
        %s2383 = scalar_select %p2382, %s36, 0
        %s2384 = sadd.s32 %s2383, %s2381
        %s2385 = scalar_lea.vmem %s6, %s2384
        %p2386 = scmp.lt.s32.totalorder %s35, 1
        %s2387 = scalar_select %p2386, %s35, 1
        %p2388 = scmp.lt.s32.totalorder %s36, 0
        %s2389 = scalar_select %p2388, %s36, 0
        %s2390 = sadd.s32 %s2389, %s2387
        %s2391 = scalar_lea.vmem %s7, %s2390
        // Predicated region
        $region69: #{tpu_custom_call.1} parent=43 // pred_check
          %p2392 = pneg %p263
        $region70: #{tpu_custom_call.1} parent=43 // pred_check_branch
          %2394 = sbr.rel (%p2392) target = $region72
        $region71: #{tpu_custom_call.1} parent=43 // pred_region
          _
        $region72: #{tpu_custom_call.1} parent=43 // pred_fallthru
          _
        // Predicated region
        $region73: #{tpu_custom_call.1} parent=43 // pred_check
          %p2395 = pneg %p291
        $region74: #{tpu_custom_call.1} parent=43 // pred_check_branch
          %2397 = sbr.rel (%p2395) target = $region76
        $region75: #{tpu_custom_call.1} parent=43 // pred_region
          _
        $region76: #{tpu_custom_call.1} parent=43 // pred_fallthru
          _
      $region44: #{tpu_custom_call.1} parent=5 // pred_fallthru
        _
      %p2398 = scmp.le.s32.totalorder 2, %s26
      // Predicated region
      $region77: #{tpu_custom_call.1} parent=5 // pred_check
        %p2399 = pneg %p2398
      $region78: #{tpu_custom_call.1} parent=5 // pred_check_branch
        %2401 = sbr.rel (%p2399) target = $region80
      $region79: #{tpu_custom_call.1} parent=5 // pred_region
        %s2402 = ssub.s32 %s26, 2
        // Predicated region
        $region81: #{tpu_custom_call.1} parent=79 // pred_check
          %p2403 = pneg %p269
        $region82: #{tpu_custom_call.1} parent=79 // pred_check_branch
          %2405 = sbr.rel (%p2403) target = $region84
        $region83: #{tpu_custom_call.1} parent=79 // pred_region
          %p2406 = scmp.lt.s32.totalorder %s37, 1
          %s2407 = scalar_select %p2406, %s37, 1
          %p2408 = scmp.lt.s32.totalorder %s38, 0
          %s2409 = scalar_select %p2408, %s38, 0
          %s2410 = sadd.s32 %s2409, %s2407
          %s2411 = scalar_lea.vmem %s6, %s2410
        $region84: #{tpu_custom_call.1} parent=79 // pred_fallthru
          _
        // Predicated region
        $region85: #{tpu_custom_call.1} parent=79 // pred_check
          %p2412 = pneg %p297
        $region86: #{tpu_custom_call.1} parent=79 // pred_check_branch
          %2414 = sbr.rel (%p2412) target = $region88
        $region87: #{tpu_custom_call.1} parent=79 // pred_region
          %p2415 = scmp.lt.s32.totalorder %s37, 1
          %s2416 = scalar_select %p2415, %s37, 1
          %p2417 = scmp.lt.s32.totalorder %s38, 0
          %s2418 = scalar_select %p2417, %s38, 0
          %s2419 = sadd.s32 %s2418, %s2416
          %s2420 = scalar_lea.vmem %s7, %s2419
        $region88: #{tpu_custom_call.1} parent=79 // pred_fallthru
          _
      $region80: #{tpu_custom_call.1} parent=5 // pred_fallthru
        _
    $region6: #{tpu_custom_call.1} parent=1 // loop_footer
      %s30 = sadd.s32 1, %s26
    $region7: #{tpu_custom_call.1} parent=1 // loop_footer_branch
      %25 = sbr.rel target = $region3
    $region8: #{tpu_custom_call.1} parent=1 // loop_exit
      _
    %2421 = vsyncpa [#allocation3], 1
    %s2422 = scalar_lea.sflag [#allocation3], 1
    %2423 = vsyncpa %s2422, 1
    %2424 = vsyncpa [#allocation5], 1
    %s2425 = scalar_lea.sflag [#allocation5], 1
    %2426 = vsyncpa %s2425, 1
    %2427 = vsyncpa [#allocation8], 1
    %s2428 = scalar_lea.sflag [#allocation8], 1
    %2429 = vsyncpa %s2428, 1
    %2430 = vsyncpa [#allocation11], 1
    %s2431 = scalar_lea.sflag [#allocation11], 1
    %2432 = vsyncpa %s2431, 1

</llo_original>
